<compile_context>
chip_gen: v6e
topology: v6e:2x2x1
jax: 0.10.0
libtpu: 0.0.40
codegen_flags: <defaults>
</compile_context>

<pallas_src>
import functools

import jax
import jax.numpy as jnp
from jax import lax
from jax.experimental import pallas as pl
from jax.experimental.pallas import tpu as pltpu


def _round_up(x: int, m: int) -> int:
    return ((x + m - 1) // m) * m


def _encode_kernel(frames_ref, w_ref, b_ref, cbt_ref, csq_ref, codes_ref,
                   *, distance_dtype=jnp.float32):
    """One frame-tile grid step (codebook loop unrolled inside).

    frames_ref: [TN, HOP]            frame tile (raw samples, unpadded hop)
    w_ref:      [HOP, D_P]           encoder "conv" weight (VMEM-resident)
    b_ref:      [1, D_P]             encoder bias           (VMEM-resident)
    cbt_ref:    [n_cb, D_P, K_P]     all codebooks, transposed (VMEM-resident)
    csq_ref:    [n_cb, 1, K_P]       0.5*||c||^2, padded rows = +BIG (resident)
    codes_ref:  [n_cb, TN]           int32 output block (lane-dense last dim)
    """
    # ---- encoder: patchify conv == frame matmul + bias + tanh (once/tile) --
    z = jnp.dot(frames_ref[...], w_ref[...],
                preferred_element_type=jnp.float32)          # [TN, D_P]
    residual = jnp.tanh(z + b_ref[...])                      # [TN, D_P]

    n_cb = codes_ref.shape[0]
    k_pad = cbt_ref.shape[-1]

    # static (fully unrolled) codebook loop: n_codebooks is small (<= 14)
    for k in range(n_cb):
        cbt_k = cbt_ref[k]                                   # [D_P, K_P]

        # nearest codeword:  argmin_k 0.5*||c||^2 - <r, c>  (r_sq dropped)
        cross = jnp.dot(residual.astype(distance_dtype),
                        cbt_k.astype(distance_dtype),
                        preferred_element_type=jnp.float32)  # [TN, K_P]
        dist = csq_ref[k] - cross                            # [TN, K_P]

        min_d = jnp.min(dist, axis=-1, keepdims=True)        # [TN, 1]
        iota = lax.broadcasted_iota(jnp.int32, dist.shape, 1)
        code_k = jnp.min(jnp.where(dist <= min_d, iota, k_pad),
                         axis=-1).astype(jnp.int32)          # [TN]

        # single lane-dense row store (static sublane index)
        codes_ref[k, :] = code_k

        # residual update (skip after the last codebook); one-hot lookup reuses
        # the same [D_P, K_P] layout by contracting on the K dims.
        if k + 1 < n_cb:
            onehot = (iota == code_k[:, None]).astype(jnp.float32)  # [TN, K_P]
            quantized = lax.dot_general(
                onehot, cbt_k,
                dimension_numbers=(((1,), (1,)), ((), ())),
                preferred_element_type=jnp.float32)                 # [TN, D_P]
            residual = residual - quantized


def vampnet_codec_encode(audio, enc_w, enc_b, codebooks, hop_length,
                         *, tile_n: int = 1024,
                         distance_dtype=jnp.float32):
    """
    audio:     [B, 1, S]  float32
    enc_w:     [hop, D]   encoder "conv" weight (kernel=stride=hop)
    enc_b:     [1, D]     encoder bias
    codebooks: [n_codebooks, K, D]
    returns codes [B, n_codebooks, T] int32, T = ceil(S / hop)
    """
    B, C, S = audio.shape
    assert C == 1, "expects mono audio [B, 1, samples]"

    # identical padding formula to the PyTorch forward
    right_pad = (S + hop_length - 1) // hop_length * hop_length - S
    if right_pad > 0:
        audio = jnp.pad(audio, ((0, 0), (0, 0), (0, right_pad)))
    s_pad = audio.shape[-1]
    T = s_pad // hop_length
    N = B * T

    n_codebooks, K, D = codebooks.shape

    # framing == strided conv im2col (kernel=stride=hop, no overlap).
    # NOTE: hop is NOT lane-padded; a block last dim equal to the full array
    # dim is legal, so small-hop configs don't pay an 8x zero-inflation.
    frames = audio.reshape(N, hop_length).astype(jnp.float32)

    # ---- lane padding for dense vregs & MXU-friendly tiles ------------------
    d_p = _round_up(D, 128)
    k_p = _round_up(K, 128)

    # tn >= 128 so the codes output block is lane-dense (unmasked stores).
    tn = _round_up(min(tile_n, max(N, 128)), 128)
    n_p = _round_up(N, tn)

    if n_p > N:
        frames = jnp.pad(frames, ((0, n_p - N), (0, 0)))

    w_p = jnp.pad(enc_w.astype(jnp.float32), ((0, 0), (0, d_p - D)))
    b_p = jnp.pad(enc_b.astype(jnp.float32), ((0, 0), (0, d_p - D)))

    cb_p = jnp.pad(codebooks.astype(jnp.float32),
                   ((0, 0), (0, k_p - K), (0, d_p - D)))      # [n_cb, K_P, D_P]
    cbt_p = jnp.transpose(cb_p, (0, 2, 1))                    # [n_cb, D_P, K_P]

    # hoisted 0.5*||c||^2; padded (fake) codewords get a huge distance so the
    # argmin never selects them.
    big = jnp.float32(1e30)
    half_csq = 0.5 * jnp.sum(cb_p * cb_p, axis=-1)            # [n_cb, K_P]
    half_csq = jnp.where(jnp.arange(k_p)[None, :] < K, half_csq, big)
    half_csq = half_csq[:, None, :]                           # [n_cb, 1, K_P]

    grid = (n_p // tn,)

    kernel = functools.partial(_encode_kernel, distance_dtype=distance_dtype)

    codes_p = pl.pallas_call(
        kernel,
        out_shape=jax.ShapeDtypeStruct((n_codebooks, n_p), jnp.int32),
        grid_spec=pltpu.PrefetchScalarGridSpec(
            num_scalar_prefetch=0,
            grid=grid,
            in_specs=[
                # frame tile: only array whose block index changes with i
                pl.BlockSpec((tn, hop_length), lambda i: (i, 0)),
                # constant-index blocks -> DMA'd from HBM exactly once
                pl.BlockSpec((hop_length, d_p), lambda i: (0, 0)),
                pl.BlockSpec((1, d_p), lambda i: (0, 0)),
                pl.BlockSpec((n_codebooks, d_p, k_p), lambda i: (0, 0, 0)),
                pl.BlockSpec((n_codebooks, 1, k_p), lambda i: (0, 0, 0)),
            ],
            # codes block written back once per frame tile (lane-dense last dim)
            out_specs=pl.BlockSpec((n_codebooks, tn), lambda i: (0, i)),
        ),
        compiler_params=pltpu.CompilerParams(
            dimension_semantics=("parallel",),
            vmem_limit_bytes=48 * 1024 * 1024,
        ),
    )(frames, w_p, b_p, cbt_p, half_csq)

    # strip row padding; [n_codebooks, B*T] -> [B, n_codebooks, T]
    codes = codes_p[:, :N].reshape(n_codebooks, B, T).transpose(1, 0, 2)
    return codes


def _reference_encode(audio, enc_w, enc_b, codebooks, hop_length):
    """Pure-JAX reference (same nearest-codeword math, unpadded)."""
    B, _, S = audio.shape
    right_pad = (S + hop_length - 1) // hop_length * hop_length - S
    if right_pad > 0:
        audio = jnp.pad(audio, ((0, 0), (0, 0), (0, right_pad)))
    T = audio.shape[-1] // hop_length
    frames = audio.reshape(B * T, hop_length).astype(jnp.float32)

    hi = lax.Precision.HIGHEST
    z = jnp.tanh(jnp.dot(frames, enc_w, precision=hi) + enc_b)
    residual = z
    codes = []
    for k in range(codebooks.shape[0]):
        cbk = codebooks[k]
        half_csq = 0.5 * jnp.sum(cbk * cbk, axis=-1)[None, :]
        dist = half_csq - jnp.dot(residual, cbk.T, precision=hi)
        idx = jnp.argmin(dist, axis=-1).astype(jnp.int32)
        codes.append(idx)
        residual = residual - cbk[idx]
    return jnp.stack(codes, 0).reshape(codebooks.shape[0], B, T).transpose(1, 0, 2)


if __name__ == "__main__":
    # small synthetic config (real VampNet codec: hop=768, n_codebooks=14)
    hop_length = 16
    latent_dim = 32
    n_codebooks = 4
    codebook_size = 64
    batch = 2
    samples = 250          # not a multiple of hop -> exercises right-padding

    key = jax.random.PRNGKey(0)
    k_audio, k_w, k_b, k_cb = jax.random.split(key, 4)

    audio = jax.random.normal(k_audio, (batch, 1, samples), dtype=jnp.float32)
    enc_w = 0.1 * jax.random.normal(k_w, (hop_length, latent_dim), jnp.float32)
    enc_b = 0.01 * jax.random.normal(k_b, (1, latent_dim), jnp.float32)
    codebooks = jax.random.normal(
        k_cb, (n_codebooks, codebook_size, latent_dim), jnp.float32)

    codes = vampnet_codec_encode(audio, enc_w, enc_b, codebooks, hop_length)
    codes = jax.block_until_ready(codes)

    expected_T = (samples + hop_length - 1) // hop_length
    assert codes.shape == (batch, n_codebooks, expected_T), codes.shape
    assert codes.dtype == jnp.int32

    ref = _reference_encode(audio, enc_w, enc_b, codebooks, hop_length)
    assert bool(jnp.all(codes == ref)), "Pallas codes mismatch vs JAX reference"

    print("KERNEL_OK")
</pallas_src>

<mosaic_0001>
module attributes {stable_mosaic.version = 11 : i64} {
  func.func @_encode_kernel(%arg0: i32, %arg1: memref<128x16xf32, #tpu.memory_space<vmem>>, %arg2: memref<16x128xf32, #tpu.memory_space<vmem>>, %arg3: memref<1x128xf32, #tpu.memory_space<vmem>>, %arg4: memref<4x128x128xf32, #tpu.memory_space<vmem>>, %arg5: memref<4x1x128xf32, #tpu.memory_space<vmem>>, %arg6: memref<4x128xi32, #tpu.memory_space<vmem>>) attributes {dimension_semantics = [#tpu.dimension_semantics<parallel>], iteration_bounds = array<i64: 1>, scalar_prefetch = 0 : i64, scratch_operands = 0 : i64, tpu.core_type = #tpu.core_type<tc>, window_params = [{transform_indices = @transform_0, window_bounds = array<i64: 128, 16>}, {pipeline_mode = #tpu.pipeline_mode<synchronous>, transform_indices = @transform_1, window_bounds = array<i64: 16, 128>}, {pipeline_mode = #tpu.pipeline_mode<synchronous>, transform_indices = @transform_2, window_bounds = array<i64: 1, 128>}, {pipeline_mode = #tpu.pipeline_mode<synchronous>, transform_indices = @transform_3, window_bounds = array<i64: 4, 128, 128>}, {pipeline_mode = #tpu.pipeline_mode<synchronous>, transform_indices = @transform_4, window_bounds = array<i64: 4, 1, 128>}, {transform_indices = @transform_5, window_bounds = array<i64: 4, 128>}]} {
    %c0 = arith.constant 0 : index
    %c0_0 = arith.constant 0 : index
    %0 = vector.load %arg1[%c0, %c0_0] : memref<128x16xf32, #tpu.memory_space<vmem>>, vector<128x16xf32>
    %c0_1 = arith.constant 0 : index
    %c0_2 = arith.constant 0 : index
    %1 = vector.load %arg2[%c0_1, %c0_2] : memref<16x128xf32, #tpu.memory_space<vmem>>, vector<16x128xf32>
    %cst = arith.constant dense<0.000000e+00> : vector<128x128xf32>
    %2 = tpu.matmul %0, %1, %cst {dimension_numbers = #tpu.dot_dimension_numbers<[1], [0], [0], [1], [0, 0, 1, 1], [], []>} : vector<128x16xf32>, vector<16x128xf32>, vector<128x128xf32> -> vector<128x128xf32>
    %c0_3 = arith.constant 0 : index
    %c0_4 = arith.constant 0 : index
    %3 = vector.load %arg3[%c0_3, %c0_4] : memref<1x128xf32, #tpu.memory_space<vmem>>, vector<1x128xf32>
    %4 = vector.broadcast %3 : vector<1x128xf32> to vector<128x128xf32>
    %5 = arith.addf %2, %4 : vector<128x128xf32>
    %6 = math.tanh %5 : vector<128x128xf32>
    %c0_5 = arith.constant 0 : index
    %c0_6 = arith.constant 0 : index
    %c0_7 = arith.constant 0 : index
    %7 = vector.load %arg4[%c0_5, %c0_6, %c0_7] : memref<4x128x128xf32, #tpu.memory_space<vmem>>, vector<1x128x128xf32>
    %8 = vector.shape_cast %7 : vector<1x128x128xf32> to vector<128x128xf32>
    %cst_8 = arith.constant dense<0.000000e+00> : vector<128x128xf32>
    %9 = tpu.matmul %6, %8, %cst_8 {dimension_numbers = #tpu.dot_dimension_numbers<[1], [0], [0], [1], [0, 0, 1, 1], [], []>} : vector<128x128xf32>, vector<128x128xf32>, vector<128x128xf32> -> vector<128x128xf32>
    %c0_9 = arith.constant 0 : index
    %c0_10 = arith.constant 0 : index
    %c0_11 = arith.constant 0 : index
    %10 = vector.load %arg5[%c0_9, %c0_10, %c0_11] : memref<4x1x128xf32, #tpu.memory_space<vmem>>, vector<1x1x128xf32>
    %11 = vector.shape_cast %10 : vector<1x1x128xf32> to vector<1x128xf32>
    %12 = vector.broadcast %11 : vector<1x128xf32> to vector<128x128xf32>
    %13 = arith.subf %12, %9 : vector<128x128xf32>
    %cst_12 = arith.constant dense<0x7F800000> : vector<128xf32>
    %14 = vector.multi_reduction <minimumf>, %13, %cst_12 [1] : vector<128x128xf32> to vector<128xf32>
    %15 = vector.shape_cast %14 : vector<128xf32> to vector<128x1xf32>
    %16 = tpu.iota {dimensions = array<i32: 1>} : vector<128x128xi32>
    %17 = vector.broadcast %15 : vector<128x1xf32> to vector<128x128xf32>
    %18 = arith.cmpf ole, %13, %17 : vector<128x128xf32>
    %c128_i32 = arith.constant 128 : i32
    %19 = vector.broadcast %c128_i32 : i32 to vector<128x128xi32>
    %20 = arith.select %18, %16, %19 : vector<128x128xi1>, vector<128x128xi32>
    %cst_13 = arith.constant dense<2147483647> : vector<128xi32>
    %21 = vector.multi_reduction <minsi>, %20, %cst_13 [1] : vector<128x128xi32> to vector<128xi32>
    %c0_14 = arith.constant 0 : index
    %c0_15 = arith.constant 0 : index
    %22 = vector.load %arg6[%c0_14, %c0_15] : memref<4x128xi32, #tpu.memory_space<vmem>>, vector<1x128xi32>
    %23 = vector.shape_cast %22 : vector<1x128xi32> to vector<128xi32>
    %24 = vector.shape_cast %21 : vector<128xi32> to vector<1x128xi32>
    tpu.vector_store %arg6[%c0_14, %c0_15], %24 {strides = array<i32>} : memref<4x128xi32, #tpu.memory_space<vmem>>, vector<1x128xi32>,
    %25 = vector.shape_cast %21 : vector<128xi32> to vector<128x1xi32>
    %26 = vector.broadcast %25 : vector<128x1xi32> to vector<128x128xi32>
    %27 = arith.cmpi eq, %16, %26 : vector<128x128xi32>
    %28 = arith.extui %27 : vector<128x128xi1> to vector<128x128xi32>
    %29 = arith.sitofp %28 : vector<128x128xi32> to vector<128x128xf32>
    %cst_16 = arith.constant dense<0.000000e+00> : vector<128x128xf32>
    %30 = tpu.matmul %29, %8, %cst_16 {dimension_numbers = #tpu.dot_dimension_numbers<[1], [1], [0], [0], [0, 0, 1, 0], [], []>} : vector<128x128xf32>, vector<128x128xf32>, vector<128x128xf32> -> vector<128x128xf32>
    %31 = arith.subf %6, %30 : vector<128x128xf32>
    %c1 = arith.constant 1 : index
    %c0_17 = arith.constant 0 : index
    %c0_18 = arith.constant 0 : index
    %32 = vector.load %arg4[%c1, %c0_17, %c0_18] : memref<4x128x128xf32, #tpu.memory_space<vmem>>, vector<1x128x128xf32>
    %33 = vector.shape_cast %32 : vector<1x128x128xf32> to vector<128x128xf32>
    %cst_19 = arith.constant dense<0.000000e+00> : vector<128x128xf32>
    %34 = tpu.matmul %31, %33, %cst_19 {dimension_numbers = #tpu.dot_dimension_numbers<[1], [0], [0], [1], [0, 0, 1, 1], [], []>} : vector<128x128xf32>, vector<128x128xf32>, vector<128x128xf32> -> vector<128x128xf32>
    %c1_20 = arith.constant 1 : index
    %c0_21 = arith.constant 0 : index
    %c0_22 = arith.constant 0 : index
    %35 = vector.load %arg5[%c1_20, %c0_21, %c0_22] : memref<4x1x128xf32, #tpu.memory_space<vmem>>, vector<1x1x128xf32>
    %36 = vector.shape_cast %35 : vector<1x1x128xf32> to vector<1x128xf32>
    %37 = vector.broadcast %36 : vector<1x128xf32> to vector<128x128xf32>
    %38 = arith.subf %37, %34 : vector<128x128xf32>
    %cst_23 = arith.constant dense<0x7F800000> : vector<128xf32>
    %39 = vector.multi_reduction <minimumf>, %38, %cst_23 [1] : vector<128x128xf32> to vector<128xf32>
    %40 = vector.shape_cast %39 : vector<128xf32> to vector<128x1xf32>
    %41 = tpu.iota {dimensions = array<i32: 1>} : vector<128x128xi32>
    %42 = vector.broadcast %40 : vector<128x1xf32> to vector<128x128xf32>
    %43 = arith.cmpf ole, %38, %42 : vector<128x128xf32>
    %c128_i32_24 = arith.constant 128 : i32
    %44 = vector.broadcast %c128_i32_24 : i32 to vector<128x128xi32>
    %45 = arith.select %43, %41, %44 : vector<128x128xi1>, vector<128x128xi32>
    %cst_25 = arith.constant dense<2147483647> : vector<128xi32>
    %46 = vector.multi_reduction <minsi>, %45, %cst_25 [1] : vector<128x128xi32> to vector<128xi32>
    %c1_26 = arith.constant 1 : index
    %c0_27 = arith.constant 0 : index
    %47 = vector.load %arg6[%c1_26, %c0_27] : memref<4x128xi32, #tpu.memory_space<vmem>>, vector<1x128xi32>
    %48 = vector.shape_cast %47 : vector<1x128xi32> to vector<128xi32>
    %49 = vector.shape_cast %46 : vector<128xi32> to vector<1x128xi32>
    tpu.vector_store %arg6[%c1_26, %c0_27], %49 {strides = array<i32>} : memref<4x128xi32, #tpu.memory_space<vmem>>, vector<1x128xi32>,
    %50 = vector.shape_cast %46 : vector<128xi32> to vector<128x1xi32>
    %51 = vector.broadcast %50 : vector<128x1xi32> to vector<128x128xi32>
    %52 = arith.cmpi eq, %41, %51 : vector<128x128xi32>
    %53 = arith.extui %52 : vector<128x128xi1> to vector<128x128xi32>
    %54 = arith.sitofp %53 : vector<128x128xi32> to vector<128x128xf32>
    %cst_28 = arith.constant dense<0.000000e+00> : vector<128x128xf32>
    %55 = tpu.matmul %54, %33, %cst_28 {dimension_numbers = #tpu.dot_dimension_numbers<[1], [1], [0], [0], [0, 0, 1, 0], [], []>} : vector<128x128xf32>, vector<128x128xf32>, vector<128x128xf32> -> vector<128x128xf32>
    %56 = arith.subf %31, %55 : vector<128x128xf32>
    %c2 = arith.constant 2 : index
    %c0_29 = arith.constant 0 : index
    %c0_30 = arith.constant 0 : index
    %57 = vector.load %arg4[%c2, %c0_29, %c0_30] : memref<4x128x128xf32, #tpu.memory_space<vmem>>, vector<1x128x128xf32>
    %58 = vector.shape_cast %57 : vector<1x128x128xf32> to vector<128x128xf32>
    %cst_31 = arith.constant dense<0.000000e+00> : vector<128x128xf32>
    %59 = tpu.matmul %56, %58, %cst_31 {dimension_numbers = #tpu.dot_dimension_numbers<[1], [0], [0], [1], [0, 0, 1, 1], [], []>} : vector<128x128xf32>, vector<128x128xf32>, vector<128x128xf32> -> vector<128x128xf32>
    %c2_32 = arith.constant 2 : index
    %c0_33 = arith.constant 0 : index
    %c0_34 = arith.constant 0 : index
    %60 = vector.load %arg5[%c2_32, %c0_33, %c0_34] : memref<4x1x128xf32, #tpu.memory_space<vmem>>, vector<1x1x128xf32>
    %61 = vector.shape_cast %60 : vector<1x1x128xf32> to vector<1x128xf32>
    %62 = vector.broadcast %61 : vector<1x128xf32> to vector<128x128xf32>
    %63 = arith.subf %62, %59 : vector<128x128xf32>
    %cst_35 = arith.constant dense<0x7F800000> : vector<128xf32>
    %64 = vector.multi_reduction <minimumf>, %63, %cst_35 [1] : vector<128x128xf32> to vector<128xf32>
    %65 = vector.shape_cast %64 : vector<128xf32> to vector<128x1xf32>
    %66 = tpu.iota {dimensions = array<i32: 1>} : vector<128x128xi32>
    %67 = vector.broadcast %65 : vector<128x1xf32> to vector<128x128xf32>
    %68 = arith.cmpf ole, %63, %67 : vector<128x128xf32>
    %c128_i32_36 = arith.constant 128 : i32
    %69 = vector.broadcast %c128_i32_36 : i32 to vector<128x128xi32>
    %70 = arith.select %68, %66, %69 : vector<128x128xi1>, vector<128x128xi32>
    %cst_37 = arith.constant dense<2147483647> : vector<128xi32>
    %71 = vector.multi_reduction <minsi>, %70, %cst_37 [1] : vector<128x128xi32> to vector<128xi32>
    %c2_38 = arith.constant 2 : index
    %c0_39 = arith.constant 0 : index
    %72 = vector.load %arg6[%c2_38, %c0_39] : memref<4x128xi32, #tpu.memory_space<vmem>>, vector<1x128xi32>
    %73 = vector.shape_cast %72 : vector<1x128xi32> to vector<128xi32>
    %74 = vector.shape_cast %71 : vector<128xi32> to vector<1x128xi32>
    tpu.vector_store %arg6[%c2_38, %c0_39], %74 {strides = array<i32>} : memref<4x128xi32, #tpu.memory_space<vmem>>, vector<1x128xi32>,
    %75 = vector.shape_cast %71 : vector<128xi32> to vector<128x1xi32>
    %76 = vector.broadcast %75 : vector<128x1xi32> to vector<128x128xi32>
    %77 = arith.cmpi eq, %66, %76 : vector<128x128xi32>
    %78 = arith.extui %77 : vector<128x128xi1> to vector<128x128xi32>
    %79 = arith.sitofp %78 : vector<128x128xi32> to vector<128x128xf32>
    %cst_40 = arith.constant dense<0.000000e+00> : vector<128x128xf32>
    %80 = tpu.matmul %79, %58, %cst_40 {dimension_numbers = #tpu.dot_dimension_numbers<[1], [1], [0], [0], [0, 0, 1, 0], [], []>} : vector<128x128xf32>, vector<128x128xf32>, vector<128x128xf32> -> vector<128x128xf32>
    %81 = arith.subf %56, %80 : vector<128x128xf32>
    %c3 = arith.constant 3 : index
    %c0_41 = arith.constant 0 : index
    %c0_42 = arith.constant 0 : index
    %82 = vector.load %arg4[%c3, %c0_41, %c0_42] : memref<4x128x128xf32, #tpu.memory_space<vmem>>, vector<1x128x128xf32>
    %83 = vector.shape_cast %82 : vector<1x128x128xf32> to vector<128x128xf32>
    %cst_43 = arith.constant dense<0.000000e+00> : vector<128x128xf32>
    %84 = tpu.matmul %81, %83, %cst_43 {dimension_numbers = #tpu.dot_dimension_numbers<[1], [0], [0], [1], [0, 0, 1, 1], [], []>} : vector<128x128xf32>, vector<128x128xf32>, vector<128x128xf32> -> vector<128x128xf32>
    %c3_44 = arith.constant 3 : index
    %c0_45 = arith.constant 0 : index
    %c0_46 = arith.constant 0 : index
    %85 = vector.load %arg5[%c3_44, %c0_45, %c0_46] : memref<4x1x128xf32, #tpu.memory_space<vmem>>, vector<1x1x128xf32>
    %86 = vector.shape_cast %85 : vector<1x1x128xf32> to vector<1x128xf32>
    %87 = vector.broadcast %86 : vector<1x128xf32> to vector<128x128xf32>
    %88 = arith.subf %87, %84 : vector<128x128xf32>
    %cst_47 = arith.constant dense<0x7F800000> : vector<128xf32>
    %89 = vector.multi_reduction <minimumf>, %88, %cst_47 [1] : vector<128x128xf32> to vector<128xf32>
    %90 = vector.shape_cast %89 : vector<128xf32> to vector<128x1xf32>
    %91 = tpu.iota {dimensions = array<i32: 1>} : vector<128x128xi32>
    %92 = vector.broadcast %90 : vector<128x1xf32> to vector<128x128xf32>
    %93 = arith.cmpf ole, %88, %92 : vector<128x128xf32>
    %c128_i32_48 = arith.constant 128 : i32
    %94 = vector.broadcast %c128_i32_48 : i32 to vector<128x128xi32>
    %95 = arith.select %93, %91, %94 : vector<128x128xi1>, vector<128x128xi32>
    %cst_49 = arith.constant dense<2147483647> : vector<128xi32>
    %96 = vector.multi_reduction <minsi>, %95, %cst_49 [1] : vector<128x128xi32> to vector<128xi32>
    %c3_50 = arith.constant 3 : index
    %c0_51 = arith.constant 0 : index
    %97 = vector.load %arg6[%c3_50, %c0_51] : memref<4x128xi32, #tpu.memory_space<vmem>>, vector<1x128xi32>
    %98 = vector.shape_cast %97 : vector<1x128xi32> to vector<128xi32>
    %99 = vector.shape_cast %96 : vector<128xi32> to vector<1x128xi32>
    tpu.vector_store %arg6[%c3_50, %c0_51], %99 {strides = array<i32>} : memref<4x128xi32, #tpu.memory_space<vmem>>, vector<1x128xi32>,
    return
  }
  func.func @transform_0(%arg0: i32) -> (i32, i32) {
    %c0_i32 = arith.constant 0 : i32
    %c0_i32_0 = arith.constant 0 : i32
    return %arg0, %c0_i32 : i32, i32
  }
  func.func @transform_1(%arg0: i32) -> (i32, i32) {
    %c0_i32 = arith.constant 0 : i32
    %c0_i32_0 = arith.constant 0 : i32
    %c0_i32_1 = arith.constant 0 : i32
    return %c0_i32, %c0_i32_0 : i32, i32
  }
  func.func @transform_2(%arg0: i32) -> (i32, i32) {
    %c0_i32 = arith.constant 0 : i32
    %c0_i32_0 = arith.constant 0 : i32
    %c0_i32_1 = arith.constant 0 : i32
    return %c0_i32, %c0_i32_0 : i32, i32
  }
  func.func @transform_3(%arg0: i32) -> (i32, i32, i32) {
    %c0_i32 = arith.constant 0 : i32
    %c0_i32_0 = arith.constant 0 : i32
    %c0_i32_1 = arith.constant 0 : i32
    %c0_i32_2 = arith.constant 0 : i32
    return %c0_i32, %c0_i32_0, %c0_i32_1 : i32, i32, i32
  }
  func.func @transform_4(%arg0: i32) -> (i32, i32, i32) {
    %c0_i32 = arith.constant 0 : i32
    %c0_i32_0 = arith.constant 0 : i32
    %c0_i32_1 = arith.constant 0 : i32
    %c0_i32_2 = arith.constant 0 : i32
    return %c0_i32, %c0_i32_0, %c0_i32_1 : i32, i32, i32
  }
  func.func @transform_5(%arg0: i32) -> (i32, i32) {
    %c0_i32 = arith.constant 0 : i32
    %c0_i32_0 = arith.constant 0 : i32
    return %c0_i32, %arg0 : i32, i32
  }
}

</mosaic_0001>

<llo_original>
// kernel: tpu_custom_call.1
$region0: #{tpu_custom_call.1}
  #allocation0 [shape = 'u32[]', space=smem, size = 0x4, offset = 0x4, fixed_abs, tag = 'smem constant byte address 0x4 - core index']
  #allocation1 [shape = 'u32[144,128]{1,0:T(1,128)}', space=vmem, size = 0x12000, scoped, tag = 'internal scratch']
  %s0 = inlined_call_operand.vmem [shape: f32[128,16], index: 0, kind: input, shape index: {}]
  %s1 = inlined_call_operand.vmem [shape: f32[16,128], index: 1, kind: input, shape index: {}]
  %s2 = inlined_call_operand.vmem [shape: f32[1,128], index: 2, kind: input, shape index: {}]
  %s3 = inlined_call_operand.hbm [shape: f32[4,128,128], index: 3, kind: input, shape index: {}]
  %s4 = inlined_call_operand.vmem [shape: f32[4,1,128], index: 4, kind: input, shape index: {}]
  %s5 = inlined_call_operand.hbm [shape: s32[4,128], index: 5, kind: output, shape index: {}]
  %s6 = sld [smem:[#allocation0]]
  $region34: #{tpu_custom_call.1} parent=0
    _
  %s8 = ssub.s32 1, %s6
  %s9 = scalar_select 0, %s8, %s6
  $region1: #{tpu_custom_call.1} parent=0
    #allocation2 [shape = 'u8[262144]{0}', space=vmem, size = 0x40000, scoped, tag = 'input window, operand 3, single buffered']
    #allocation3 [shape = 's32[1]{0}', space=sflag, size = 0x4, scoped, tag = 'scoped memory for tpu_custom_call.1']
    #allocation4 [shape = 's32[1]{0}', space=sflag, size = 0x4, scoped, tag = 'scoped memory for tpu_custom_call.1']
    #allocation5 [shape = 'u8[2048]{0}', space=vmem, size = 0x800, scoped, tag = 'output window, operand 0, single buffered']
    %10 = vsyncpa [#allocation3], 0
    %11 = vsyncpa [#allocation4], 0
    // Predicated region
    $region2: #{tpu_custom_call.1} parent=1 // pred_check
      _
    $region3: #{tpu_custom_call.1} parent=1 // pred_check_branch
      %13 = sbr.rel (0) target = $region5
    $region4: #{tpu_custom_call.1} parent=1 // pred_region
      _
    $region5: #{tpu_custom_call.1} parent=1 // pred_fallthru
      _
    // Predicated region
    $region6: #{tpu_custom_call.1} parent=1 // pred_check
      _
    $region7: #{tpu_custom_call.1} parent=1 // pred_check_branch
      %15 = sbr.rel (0) target = $region9
    $region8: #{tpu_custom_call.1} parent=1 // pred_region
      _
    $region9: #{tpu_custom_call.1} parent=1 // pred_fallthru
      _
    // Predicated region
    $region10: #{tpu_custom_call.1} parent=1 // pred_check
      _
    $region11: #{tpu_custom_call.1} parent=1 // pred_check_branch
      %17 = sbr.rel (0) target = $region13
    $region12: #{tpu_custom_call.1} parent=1 // pred_region
      _
    $region13: #{tpu_custom_call.1} parent=1 // pred_fallthru
      _
    // Predicated region
    $region14: #{tpu_custom_call.1} parent=1 // pred_check
      _
    $region15: #{tpu_custom_call.1} parent=1 // pred_check_branch
      %19 = sbr.rel (0) target = $region17
    $region16: #{tpu_custom_call.1} parent=1 // pred_region
      %s21 = ssub.s32 8192, 8192
      %22 = vsyncadd [#allocation3], %s21
      %s23 = sshll.u32 [#allocation2], 4
      %s24 = int_to_ptr.vmem [resolvable:$true] %s23
      %29 = dma.hbm_to_vmem [thread:$0]  %s3, 8192, %s24, [#allocation3], 128, 128, 8
    $region17: #{tpu_custom_call.1} parent=1 // pred_fallthru
      _
    // Predicated region
    $region18: #{tpu_custom_call.1} parent=1 // pred_check
      _
    $region19: #{tpu_custom_call.1} parent=1 // pred_check_branch
      %31 = sbr.rel (0) target = $region21
    $region20: #{tpu_custom_call.1} parent=1 // pred_region
      _
    $region21: #{tpu_custom_call.1} parent=1 // pred_fallthru
      _
    // Predicated region
    $region22: #{tpu_custom_call.1} parent=1 // pred_check
      _
    $region23: #{tpu_custom_call.1} parent=1 // pred_check_branch
      %33 = sbr.rel (0) target = $region25
    $region24: #{tpu_custom_call.1} parent=1 // pred_region
      %34 = dma.done [#allocation3], 8192
    $region25: #{tpu_custom_call.1} parent=1 // pred_fallthru
      _
    %v35 = vld [vmem:[%s0] sm:$0xff]
    %v36 = vld [vmem:[%s0 + $0x8] sm:$0xff]
    %v37 = vld [vmem:[%s0 + $0x10] sm:$0xff]
    %v38 = vld [vmem:[%s0 + $0x18] sm:$0xff]
    %v39 = vld [vmem:[%s0 + $0x20] sm:$0xff]
    %v40 = vld [vmem:[%s0 + $0x28] sm:$0xff]
    %v41 = vld [vmem:[%s0 + $0x30] sm:$0xff]
    %v42 = vld [vmem:[%s0 + $0x38] sm:$0xff]
    %v43 = vld [vmem:[%s0 + $0x40] sm:$0xff]
    %v44 = vld [vmem:[%s0 + $0x48] sm:$0xff]
    %v45 = vld [vmem:[%s0 + $0x50] sm:$0xff]
    %v46 = vld [vmem:[%s0 + $0x58] sm:$0xff]
    %v47 = vld [vmem:[%s0 + $0x60] sm:$0xff]
    %v48 = vld [vmem:[%s0 + $0x68] sm:$0xff]
    %v49 = vld [vmem:[%s0 + $0x70] sm:$0xff]
    %v50 = vld [vmem:[%s0 + $0x78] sm:$0xff]
    %v51 = vld [vmem:[%s1] sm:$0xff]
    %v52 = vld [vmem:[%s1 + $0x8] sm:$0xff]
    %v53 = vld [vmem:[%s2] sm:$0x1]
    %v55 = vlaneseq
    %v56 = vshrl.u32 %v55, 7
    %v57 = vsub.s32 0, %v56
    %v58 = vrot.slane %v53, %v57
    %vm60 = vcmask 130048
    %v62 = vsel %vm60, %v35, 0
    %v65 = vsel %vm60, %v36, 0
    %v68 = vsel %vm60, %v37, 0
    %v71 = vsel %vm60, %v38, 0
    %v74 = vsel %vm60, %v39, 0
    %v77 = vsel %vm60, %v40, 0
    %v80 = vsel %vm60, %v41, 0
    %v83 = vsel %vm60, %v42, 0
    %v86 = vsel %vm60, %v43, 0
    %v89 = vsel %vm60, %v44, 0
    %v92 = vsel %vm60, %v45, 0
    %v95 = vsel %vm60, %v46, 0
    %v98 = vsel %vm60, %v47, 0
    %v101 = vsel %vm60, %v48, 0
    %v104 = vsel %vm60, %v49, 0
    %v107 = vsel %vm60, %v50, 0
    %109 = vmatprep.subr.mxu0 0.0
    %110 = vmatpush1.msra.mxu0 0.0
    %111 = vmatprep.subr.mxu0 0.0
    %112 = vmatpush1.msra.mxu0 0.0
    %113 = vmatprep.subr.mxu0 0.0
    %114 = vmatpush1.msra.mxu0 0.0
    %115 = vmatprep.subr.mxu0 0.0
    %116 = vmatpush1.msra.mxu0 0.0
    %117 = vmatprep.subr.mxu0 0.0
    %118 = vmatpush1.msra.mxu0 0.0
    %119 = vmatprep.subr.mxu0 0.0
    %120 = vmatpush1.msra.mxu0 0.0
    %121 = vmatprep.subr.mxu0 0.0
    %122 = vmatpush1.msra.mxu0 0.0
    %123 = vmatprep.subr.mxu0 0.0
    %124 = vmatpush1.msra.mxu0 0.0
    %125 = vmatprep.subr.mxu0 0.0
    %126 = vmatpush1.msra.mxu0 0.0
    %127 = vmatprep.subr.mxu0 0.0
    %128 = vmatpush1.msra.mxu0 0.0
    %129 = vmatprep.subr.mxu0 0.0
    %130 = vmatpush1.msra.mxu0 0.0
    %131 = vmatprep.subr.mxu0 0.0
    %132 = vmatpush1.msra.mxu0 0.0
    %133 = vmatprep.subr.mxu0 0.0
    %134 = vmatpush1.msra.mxu0 0.0
    %135 = vmatprep.subr.mxu0 0.0
    %136 = vmatpush1.msra.mxu0 0.0
    %137 = vmatprep.subr.mxu0 0.0
    %138 = vmatpush1.msra.mxu0 %v52
    %139 = vmatprep.subr.mxu0 0.0
    %140 = vmatpush1.msra.mxu0 %v51
    %141 = vmatprep.subr.mxu0 0.0
    %142 = vmatpush2.msra.mxu0 0.0
    %143 = vmatprep.subr.mxu0 0.0
    %144 = vmatpush2.msra.mxu0 0.0
    %145 = vmatprep.subr.mxu0 0.0
    %146 = vmatpush2.msra.mxu0 0.0
    %147 = vmatprep.subr.mxu0 0.0
    %148 = vmatpush2.msra.mxu0 0.0
    %149 = vmatprep.subr.mxu0 0.0
    %150 = vmatpush2.msra.mxu0 0.0
    %151 = vmatprep.subr.mxu0 0.0
    %152 = vmatpush2.msra.mxu0 0.0
    %153 = vmatprep.subr.mxu0 0.0
    %154 = vmatpush2.msra.mxu0 0.0
    %155 = vmatprep.subr.mxu0 0.0
    %156 = vmatpush2.msra.mxu0 0.0
    %157 = vmatprep.subr.mxu0 0.0
    %158 = vmatpush2.msra.mxu0 0.0
    %159 = vmatprep.subr.mxu0 0.0
    %160 = vmatpush2.msra.mxu0 0.0
    %161 = vmatprep.subr.mxu0 0.0
    %162 = vmatpush2.msra.mxu0 0.0
    %163 = vmatprep.subr.mxu0 0.0
    %164 = vmatpush2.msra.mxu0 0.0
    %165 = vmatprep.subr.mxu0 0.0
    %166 = vmatpush2.msra.mxu0 0.0
    %167 = vmatprep.subr.mxu0 0.0
    %168 = vmatpush2.msra.mxu0 0.0
    %169 = vmatprep.subr.mxu0 0.0
    %170 = vmatpush2.msra.mxu0 0.0
    %171 = vmatprep.subr.mxu0 0.0
    %172 = vmatpush2.msra.mxu0 0.0
    %173 = vmatprep.mubr.f32.mxu0 0.0
    %174 = vmatmul.mubr.f32.gmra.mxu0 %v62
    %v175 = vpop.f32.mrf.mxu0
    %v176 = vadd.f32 %v58, %v175
    %v177 = vpop.f32.mrf.mxu0
    %178 = vmatprep.mubr.f32.mxu0 0.0
    %179 = vmatmul.mubr.f32.gmra.mxu0 %v65
    %v180 = vpop.f32.mrf.mxu0
    %v181 = vadd.f32 %v58, %v180
    %v182 = vpop.f32.mrf.mxu0
    %183 = vmatprep.mubr.f32.mxu0 0.0
    %184 = vmatmul.mubr.f32.gmra.mxu0 %v68
    %v185 = vpop.f32.mrf.mxu0
    %v186 = vadd.f32 %v58, %v185
    %v187 = vpop.f32.mrf.mxu0
    %188 = vmatprep.mubr.f32.mxu0 0.0
    %189 = vmatmul.mubr.f32.gmra.mxu0 %v71
    %v190 = vpop.f32.mrf.mxu0
    %v191 = vadd.f32 %v58, %v190
    %v192 = vpop.f32.mrf.mxu0
    %193 = vmatprep.mubr.f32.mxu0 0.0
    %194 = vmatmul.mubr.f32.gmra.mxu0 %v74
    %v195 = vpop.f32.mrf.mxu0
    %v196 = vadd.f32 %v58, %v195
    %v197 = vpop.f32.mrf.mxu0
    %198 = vmatprep.mubr.f32.mxu0 0.0
    %199 = vmatmul.mubr.f32.gmra.mxu0 %v77
    %v200 = vpop.f32.mrf.mxu0
    %v201 = vadd.f32 %v58, %v200
    %v202 = vpop.f32.mrf.mxu0
    %203 = vmatprep.mubr.f32.mxu0 0.0
    %204 = vmatmul.mubr.f32.gmra.mxu0 %v80
    %v205 = vpop.f32.mrf.mxu0
    %v206 = vadd.f32 %v58, %v205
    %v207 = vpop.f32.mrf.mxu0
    %208 = vmatprep.mubr.f32.mxu0 0.0
    %209 = vmatmul.mubr.f32.gmra.mxu0 %v83
    %v210 = vpop.f32.mrf.mxu0
    %v211 = vadd.f32 %v58, %v210
    %v212 = vpop.f32.mrf.mxu0
    %213 = vmatprep.mubr.f32.mxu0 0.0
    %214 = vmatmul.mubr.f32.gmra.mxu0 %v86
    %v215 = vpop.f32.mrf.mxu0
    %v216 = vadd.f32 %v58, %v215
    %v217 = vpop.f32.mrf.mxu0
    %218 = vmatprep.mubr.f32.mxu0 0.0
    %219 = vmatmul.mubr.f32.gmra.mxu0 %v89
    %v220 = vpop.f32.mrf.mxu0
    %v221 = vadd.f32 %v58, %v220
    %v222 = vpop.f32.mrf.mxu0
    %223 = vmatprep.mubr.f32.mxu0 0.0
    %224 = vmatmul.mubr.f32.gmra.mxu0 %v92
    %v225 = vpop.f32.mrf.mxu0
    %v226 = vadd.f32 %v58, %v225
    %v227 = vpop.f32.mrf.mxu0
    %228 = vmatprep.mubr.f32.mxu0 0.0
    %229 = vmatmul.mubr.f32.gmra.mxu0 %v95
    %v230 = vpop.f32.mrf.mxu0
    %v231 = vadd.f32 %v58, %v230
    %v232 = vpop.f32.mrf.mxu0
    %233 = vmatprep.mubr.f32.mxu0 0.0
    %234 = vmatmul.mubr.f32.gmra.mxu0 %v98
    %v235 = vpop.f32.mrf.mxu0
    %v236 = vadd.f32 %v58, %v235
    %v237 = vpop.f32.mrf.mxu0
    %238 = vmatprep.mubr.f32.mxu0 0.0
    %239 = vmatmul.mubr.f32.gmra.mxu0 %v101
    %v240 = vpop.f32.mrf.mxu0
    %v241 = vadd.f32 %v58, %v240
    %v242 = vpop.f32.mrf.mxu0
    %243 = vmatprep.mubr.f32.mxu0 0.0
    %244 = vmatmul.mubr.f32.gmra.mxu0 %v104
    %v245 = vpop.f32.mrf.mxu0
    %v246 = vadd.f32 %v58, %v245
    %v247 = vpop.f32.mrf.mxu0
    %248 = vmatprep.mubr.f32.mxu0 0.0
    %249 = vmatmul.mubr.f32.gmra.mxu0 %v107
    %v250 = vpop.f32.mrf.mxu0
    %v251 = vadd.f32 %v58, %v250
    %v252 = vpop.f32.mrf.mxu0
    %253 = vdwg.mxu0
    %v254 = vtanh.pop %v176
    %v255 = vtanh.pop %v181
    %v256 = vtanh.pop %v186
    %v257 = vtanh.pop %v191
    %v258 = vtanh.pop %v196
    %v259 = vtanh.pop %v201
    %v260 = vtanh.pop %v206
    %v261 = vtanh.pop %v211
    %v262 = vtanh.pop %v216
    %v263 = vtanh.pop %v221
    %v264 = vtanh.pop %v226
    %v265 = vtanh.pop %v231
    %v266 = vtanh.pop %v236
    %v267 = vtanh.pop %v241
    %v268 = vtanh.pop %v246
    %v269 = vtanh.pop %v251
    %v270 = vld [vmem:[#allocation2] sm:$0xff]
    %v271 = vld [vmem:[#allocation2 + $0x8] sm:$0xff]
    %v272 = vld [vmem:[#allocation2 + $0x10] sm:$0xff]
    %v273 = vld [vmem:[#allocation2 + $0x18] sm:$0xff]
    %v274 = vld [vmem:[#allocation2 + $0x20] sm:$0xff]
    %v275 = vld [vmem:[#allocation2 + $0x28] sm:$0xff]
    %v276 = vld [vmem:[#allocation2 + $0x30] sm:$0xff]
    %v277 = vld [vmem:[#allocation2 + $0x38] sm:$0xff]
    %v278 = vld [vmem:[#allocation2 + $0x40] sm:$0xff]
    %v279 = vld [vmem:[#allocation2 + $0x48] sm:$0xff]
    %v280 = vld [vmem:[#allocation2 + $0x50] sm:$0xff]
    %v281 = vld [vmem:[#allocation2 + $0x58] sm:$0xff]
    %v282 = vld [vmem:[#allocation2 + $0x60] sm:$0xff]
    %v283 = vld [vmem:[#allocation2 + $0x68] sm:$0xff]
    %v284 = vld [vmem:[#allocation2 + $0x70] sm:$0xff]
    %v285 = vld [vmem:[#allocation2 + $0x78] sm:$0xff]
    %286 = vmatprep.subr.mxu0 0.0
    %287 = vmatpush1.msra.mxu0 %v285
    %288 = vmatprep.subr.mxu0 0.0
    %289 = vmatpush1.msra.mxu0 %v284
    %290 = vmatprep.subr.mxu0 0.0
    %291 = vmatpush1.msra.mxu0 %v283
    %292 = vmatprep.subr.mxu0 0.0
    %293 = vmatpush1.msra.mxu0 %v282
    %294 = vmatprep.subr.mxu0 0.0
    %295 = vmatpush1.msra.mxu0 %v281
    %296 = vmatprep.subr.mxu0 0.0
    %297 = vmatpush1.msra.mxu0 %v280
    %298 = vmatprep.subr.mxu0 0.0
    %299 = vmatpush1.msra.mxu0 %v279
    %300 = vmatprep.subr.mxu0 0.0
    %301 = vmatpush1.msra.mxu0 %v278
    %302 = vmatprep.subr.mxu0 0.0
    %303 = vmatpush1.msra.mxu0 %v277
    %304 = vmatprep.subr.mxu0 0.0
    %305 = vmatpush1.msra.mxu0 %v276
    %306 = vmatprep.subr.mxu0 0.0
    %307 = vmatpush1.msra.mxu0 %v275
    %308 = vmatprep.subr.mxu0 0.0
    %309 = vmatpush1.msra.mxu0 %v274
    %310 = vmatprep.subr.mxu0 0.0
    %311 = vmatpush1.msra.mxu0 %v273
    %312 = vmatprep.subr.mxu0 0.0
    %313 = vmatpush1.msra.mxu0 %v272
    %314 = vmatprep.subr.mxu0 0.0
    %315 = vmatpush1.msra.mxu0 %v271
    %316 = vmatprep.subr.mxu0 0.0
    %317 = vmatpush1.msra.mxu0 %v270
    %318 = vmatprep.subr.mxu0 0.0
    %319 = vmatpush2.msra.mxu0 0.0
    %320 = vmatprep.subr.mxu0 0.0
    %321 = vmatpush2.msra.mxu0 0.0
    %322 = vmatprep.subr.mxu0 0.0
    %323 = vmatpush2.msra.mxu0 0.0
    %324 = vmatprep.subr.mxu0 0.0
    %325 = vmatpush2.msra.mxu0 0.0
    %326 = vmatprep.subr.mxu0 0.0
    %327 = vmatpush2.msra.mxu0 0.0
    %328 = vmatprep.subr.mxu0 0.0
    %329 = vmatpush2.msra.mxu0 0.0
    %330 = vmatprep.subr.mxu0 0.0
    %331 = vmatpush2.msra.mxu0 0.0
    %332 = vmatprep.subr.mxu0 0.0
    %333 = vmatpush2.msra.mxu0 0.0
    %334 = vmatprep.subr.mxu0 0.0
    %335 = vmatpush2.msra.mxu0 0.0
    %336 = vmatprep.subr.mxu0 0.0
    %337 = vmatpush2.msra.mxu0 0.0
    %338 = vmatprep.subr.mxu0 0.0
    %339 = vmatpush2.msra.mxu0 0.0
    %340 = vmatprep.subr.mxu0 0.0
    %341 = vmatpush2.msra.mxu0 0.0
    %342 = vmatprep.subr.mxu0 0.0
    %343 = vmatpush2.msra.mxu0 0.0
    %344 = vmatprep.subr.mxu0 0.0
    %345 = vmatpush2.msra.mxu0 0.0
    %346 = vmatprep.subr.mxu0 0.0
    %347 = vmatpush2.msra.mxu0 0.0
    %348 = vmatprep.subr.mxu0 0.0
    %349 = vmatpush2.msra.mxu0 0.0
    %350 = vmatprep.mubr.f32.mxu0 0.0
    %351 = vmatmul.mubr.f32.gmra.mxu0 %v254
    %v352 = vpop.f32.mrf.mxu0
    %v353 = vadd.f32 0.0, %v352
    %v354 = vpop.f32.mrf.mxu0
    %355 = vmatprep.mubr.f32.mxu0 0.0
    %356 = vmatmul.mubr.f32.gmra.mxu0 %v255
    %v357 = vpop.f32.mrf.mxu0
    %v358 = vadd.f32 0.0, %v357
    %v359 = vpop.f32.mrf.mxu0
    %360 = vmatprep.mubr.f32.mxu0 0.0
    %361 = vmatmul.mubr.f32.gmra.mxu0 %v256
    %v362 = vpop.f32.mrf.mxu0
    %v363 = vadd.f32 0.0, %v362
    %v364 = vpop.f32.mrf.mxu0
    %365 = vmatprep.mubr.f32.mxu0 0.0
    %366 = vmatmul.mubr.f32.gmra.mxu0 %v257
    %v367 = vpop.f32.mrf.mxu0
    %v368 = vadd.f32 0.0, %v367
    %v369 = vpop.f32.mrf.mxu0
    %370 = vmatprep.mubr.f32.mxu0 0.0
    %371 = vmatmul.mubr.f32.gmra.mxu0 %v258
    %v372 = vpop.f32.mrf.mxu0
    %v373 = vadd.f32 0.0, %v372
    %v374 = vpop.f32.mrf.mxu0
    %375 = vmatprep.mubr.f32.mxu0 0.0
    %376 = vmatmul.mubr.f32.gmra.mxu0 %v259
    %v377 = vpop.f32.mrf.mxu0
    %v378 = vadd.f32 0.0, %v377
    %v379 = vpop.f32.mrf.mxu0
    %380 = vmatprep.mubr.f32.mxu0 0.0
    %381 = vmatmul.mubr.f32.gmra.mxu0 %v260
    %v382 = vpop.f32.mrf.mxu0
    %v383 = vadd.f32 0.0, %v382
    %v384 = vpop.f32.mrf.mxu0
    %385 = vmatprep.mubr.f32.mxu0 0.0
    %386 = vmatmul.mubr.f32.gmra.mxu0 %v261
    %v387 = vpop.f32.mrf.mxu0
    %v388 = vadd.f32 0.0, %v387
    %v389 = vpop.f32.mrf.mxu0
    %390 = vmatprep.mubr.f32.mxu0 0.0
    %391 = vmatmul.mubr.f32.gmra.mxu0 %v262
    %v392 = vpop.f32.mrf.mxu0
    %v393 = vadd.f32 0.0, %v392
    %v394 = vpop.f32.mrf.mxu0
    %395 = vmatprep.mubr.f32.mxu0 0.0
    %396 = vmatmul.mubr.f32.gmra.mxu0 %v263
    %v397 = vpop.f32.mrf.mxu0
    %v398 = vadd.f32 0.0, %v397
    %v399 = vpop.f32.mrf.mxu0
    %400 = vmatprep.mubr.f32.mxu0 0.0
    %401 = vmatmul.mubr.f32.gmra.mxu0 %v264
    %v402 = vpop.f32.mrf.mxu0
    %v403 = vadd.f32 0.0, %v402
    %v404 = vpop.f32.mrf.mxu0
    %405 = vmatprep.mubr.f32.mxu0 0.0
    %406 = vmatmul.mubr.f32.gmra.mxu0 %v265
    %v407 = vpop.f32.mrf.mxu0
    %v408 = vadd.f32 0.0, %v407
    %v409 = vpop.f32.mrf.mxu0
    %410 = vmatprep.mubr.f32.mxu0 0.0
    %411 = vmatmul.mubr.f32.gmra.mxu0 %v266
    %v412 = vpop.f32.mrf.mxu0
    %v413 = vadd.f32 0.0, %v412
    %v414 = vpop.f32.mrf.mxu0
    %415 = vmatprep.mubr.f32.mxu0 0.0
    %416 = vmatmul.mubr.f32.gmra.mxu0 %v267
    %v417 = vpop.f32.mrf.mxu0
    %v418 = vadd.f32 0.0, %v417
    %v419 = vpop.f32.mrf.mxu0
    %420 = vmatprep.mubr.f32.mxu0 0.0
    %421 = vmatmul.mubr.f32.gmra.mxu0 %v268
    %v422 = vpop.f32.mrf.mxu0
    %v423 = vadd.f32 0.0, %v422
    %v424 = vpop.f32.mrf.mxu0
    %425 = vmatprep.mubr.f32.mxu0 0.0
    %426 = vmatmul.mubr.f32.gmra.mxu0 %v269
    %v427 = vpop.f32.mrf.mxu0
    %v428 = vadd.f32 0.0, %v427
    %v429 = vpop.f32.mrf.mxu0
    %430 = vdwg.mxu0
    %v431 = vld [vmem:[%s4] sm:$0x1]
    %v433 = vlaneseq
    %v434 = vshrl.u32 %v433, 7
    %v435 = vsub.s32 0, %v434
    %v436 = vrot.slane %v431, %v435
    %v438 = vsub.f32 %v436, %v353
    %v439 = vsub.f32 %v436, %v358
    %v440 = vsub.f32 %v436, %v363
    %v441 = vsub.f32 %v436, %v368
    %v442 = vsub.f32 %v436, %v373
    %v443 = vsub.f32 %v436, %v378
    %v444 = vsub.f32 %v436, %v383
    %v445 = vsub.f32 %v436, %v388
    %v446 = vsub.f32 %v436, %v393
    %v447 = vsub.f32 %v436, %v398
    %v448 = vsub.f32 %v436, %v403
    %v449 = vsub.f32 %v436, %v408
    %v450 = vsub.f32 %v436, %v413
    %v451 = vsub.f32 %v436, %v418
    %v452 = vsub.f32 %v436, %v423
    %v453 = vsub.f32 %v436, %v428
    %454 = vmin.xlane.f32.xlu0 %v438
    %v455 = vpop.xlane.xlu0 %454
    %456 = vmin.xlane.f32.xlu0 %v439
    %v457 = vpop.xlane.xlu0 %456
    %458 = vmin.xlane.f32.xlu0 %v440
    %v459 = vpop.xlane.xlu0 %458
    %460 = vmin.xlane.f32.xlu0 %v441
    %v461 = vpop.xlane.xlu0 %460
    %462 = vmin.xlane.f32.xlu0 %v442
    %v463 = vpop.xlane.xlu0 %462
    %464 = vmin.xlane.f32.xlu0 %v443
    %v465 = vpop.xlane.xlu0 %464
    %466 = vmin.xlane.f32.xlu0 %v444
    %v467 = vpop.xlane.xlu0 %466
    %468 = vmin.xlane.f32.xlu0 %v445
    %v469 = vpop.xlane.xlu0 %468
    %470 = vmin.xlane.f32.xlu0 %v446
    %v471 = vpop.xlane.xlu0 %470
    %472 = vmin.xlane.f32.xlu0 %v447
    %v473 = vpop.xlane.xlu0 %472
    %474 = vmin.xlane.f32.xlu0 %v448
    %v475 = vpop.xlane.xlu0 %474
    %476 = vmin.xlane.f32.xlu0 %v449
    %v477 = vpop.xlane.xlu0 %476
    %478 = vmin.xlane.f32.xlu0 %v450
    %v479 = vpop.xlane.xlu0 %478
    %480 = vmin.xlane.f32.xlu0 %v451
    %v481 = vpop.xlane.xlu0 %480
    %482 = vmin.xlane.f32.xlu0 %v452
    %v483 = vpop.xlane.xlu0 %482
    %484 = vmin.xlane.f32.xlu0 %v453
    %v485 = vpop.xlane.xlu0 %484
    %v486 = vlaneseq
    %v487 = vand.u32 %v486, 127
    %vm488 = vcmp.le.f32.partialorder %v438, %v455
    %vm489 = vcmp.le.f32.partialorder %v439, %v457
    %vm490 = vcmp.le.f32.partialorder %v440, %v459
    %vm491 = vcmp.le.f32.partialorder %v441, %v461
    %vm492 = vcmp.le.f32.partialorder %v442, %v463
    %vm493 = vcmp.le.f32.partialorder %v443, %v465
    %vm494 = vcmp.le.f32.partialorder %v444, %v467
    %vm495 = vcmp.le.f32.partialorder %v445, %v469
    %vm496 = vcmp.le.f32.partialorder %v446, %v471
    %vm497 = vcmp.le.f32.partialorder %v447, %v473
    %vm498 = vcmp.le.f32.partialorder %v448, %v475
    %vm499 = vcmp.le.f32.partialorder %v449, %v477
    %vm500 = vcmp.le.f32.partialorder %v450, %v479
    %vm501 = vcmp.le.f32.partialorder %v451, %v481
    %vm502 = vcmp.le.f32.partialorder %v452, %v483
    %vm503 = vcmp.le.f32.partialorder %v453, %v485
    %v504 = vsel %vm488, %v487, 128
    %v505 = vsel %vm489, %v487, 128
    %v506 = vsel %vm490, %v487, 128
    %v507 = vsel %vm491, %v487, 128
    %v508 = vsel %vm492, %v487, 128
    %v509 = vsel %vm493, %v487, 128
    %v510 = vsel %vm494, %v487, 128
    %v511 = vsel %vm495, %v487, 128
    %v512 = vsel %vm496, %v487, 128
    %v513 = vsel %vm497, %v487, 128
    %v514 = vsel %vm498, %v487, 128
    %v515 = vsel %vm499, %v487, 128
    %v516 = vsel %vm500, %v487, 128
    %v517 = vsel %vm501, %v487, 128
    %v518 = vsel %vm502, %v487, 128
    %v519 = vsel %vm503, %v487, 128
    %v520 = vand.u32 %v504, 65535
    %v521 = vshra.s32 %v504, 16
    %v522 = vcvt.s32.f32 %v520
    %v523 = vcvt.s32.f32 %v521
    %524 = vmin.xlane.f32.xlu0 %v523
    %v525 = vpop.xlane.xlu0 %524
    %vm526 = vcmp.eq.f32.partialorder %v523, %v525
    %v527 = vsel %vm526, %v522, inf
    %528 = vmin.xlane.f32.xlu0 %v527
    %v529 = vpop.xlane.xlu0 %528
    %v530 = vcvt.f32.s32 %v529
    %v531 = vcvt.f32.s32 %v525
    %v532 = vshll.u32 %v531, 16
    %v533 = vadd.s32 %v532, %v530
    %v534 = vand.u32 %v505, 65535
    %v535 = vshra.s32 %v505, 16
    %v536 = vcvt.s32.f32 %v534
    %v537 = vcvt.s32.f32 %v535
    %538 = vmin.xlane.f32.xlu0 %v537
    %v539 = vpop.xlane.xlu0 %538
    %vm540 = vcmp.eq.f32.partialorder %v537, %v539
    %v541 = vsel %vm540, %v536, inf
    %542 = vmin.xlane.f32.xlu0 %v541
    %v543 = vpop.xlane.xlu0 %542
    %v544 = vcvt.f32.s32 %v543
    %v545 = vcvt.f32.s32 %v539
    %v546 = vshll.u32 %v545, 16
    %v547 = vadd.s32 %v546, %v544
    %v548 = vand.u32 %v506, 65535
    %v549 = vshra.s32 %v506, 16
    %v550 = vcvt.s32.f32 %v548
    %v551 = vcvt.s32.f32 %v549
    %552 = vmin.xlane.f32.xlu0 %v551
    %v553 = vpop.xlane.xlu0 %552
    %vm554 = vcmp.eq.f32.partialorder %v551, %v553
    %v555 = vsel %vm554, %v550, inf
    %556 = vmin.xlane.f32.xlu0 %v555
    %v557 = vpop.xlane.xlu0 %556
    %v558 = vcvt.f32.s32 %v557
    %v559 = vcvt.f32.s32 %v553
    %v560 = vshll.u32 %v559, 16
    %v561 = vadd.s32 %v560, %v558
    %v562 = vand.u32 %v507, 65535
    %v563 = vshra.s32 %v507, 16
    %v564 = vcvt.s32.f32 %v562
    %v565 = vcvt.s32.f32 %v563
    %566 = vmin.xlane.f32.xlu0 %v565
    %v567 = vpop.xlane.xlu0 %566
    %vm568 = vcmp.eq.f32.partialorder %v565, %v567
    %v569 = vsel %vm568, %v564, inf
    %570 = vmin.xlane.f32.xlu0 %v569
    %v571 = vpop.xlane.xlu0 %570
    %v572 = vcvt.f32.s32 %v571
    %v573 = vcvt.f32.s32 %v567
    %v574 = vshll.u32 %v573, 16
    %v575 = vadd.s32 %v574, %v572
    %v576 = vand.u32 %v508, 65535
    %v577 = vshra.s32 %v508, 16
    %v578 = vcvt.s32.f32 %v576
    %v579 = vcvt.s32.f32 %v577
    %580 = vmin.xlane.f32.xlu0 %v579
    %v581 = vpop.xlane.xlu0 %580
    %vm582 = vcmp.eq.f32.partialorder %v579, %v581
    %v583 = vsel %vm582, %v578, inf
    %584 = vmin.xlane.f32.xlu0 %v583
    %v585 = vpop.xlane.xlu0 %584
    %v586 = vcvt.f32.s32 %v585
    %v587 = vcvt.f32.s32 %v581
    %v588 = vshll.u32 %v587, 16
    %v589 = vadd.s32 %v588, %v586
    %v590 = vand.u32 %v509, 65535
    %v591 = vshra.s32 %v509, 16
    %v592 = vcvt.s32.f32 %v590
    %v593 = vcvt.s32.f32 %v591
    %594 = vmin.xlane.f32.xlu0 %v593
    %v595 = vpop.xlane.xlu0 %594
    %vm596 = vcmp.eq.f32.partialorder %v593, %v595
    %v597 = vsel %vm596, %v592, inf
    %598 = vmin.xlane.f32.xlu0 %v597
    %v599 = vpop.xlane.xlu0 %598
    %v600 = vcvt.f32.s32 %v599
    %v601 = vcvt.f32.s32 %v595
    %v602 = vshll.u32 %v601, 16
    %v603 = vadd.s32 %v602, %v600
    %v604 = vand.u32 %v510, 65535
    %v605 = vshra.s32 %v510, 16
    %v606 = vcvt.s32.f32 %v604
    %v607 = vcvt.s32.f32 %v605
    %608 = vmin.xlane.f32.xlu0 %v607
    %v609 = vpop.xlane.xlu0 %608
    %vm610 = vcmp.eq.f32.partialorder %v607, %v609
    %v611 = vsel %vm610, %v606, inf
    %612 = vmin.xlane.f32.xlu0 %v611
    %v613 = vpop.xlane.xlu0 %612
    %v614 = vcvt.f32.s32 %v613
    %v615 = vcvt.f32.s32 %v609
    %v616 = vshll.u32 %v615, 16
    %v617 = vadd.s32 %v616, %v614
    %v618 = vand.u32 %v511, 65535
    %v619 = vshra.s32 %v511, 16
    %v620 = vcvt.s32.f32 %v618
    %v621 = vcvt.s32.f32 %v619
    %622 = vmin.xlane.f32.xlu0 %v621
    %v623 = vpop.xlane.xlu0 %622
    %vm624 = vcmp.eq.f32.partialorder %v621, %v623
    %v625 = vsel %vm624, %v620, inf
    %626 = vmin.xlane.f32.xlu0 %v625
    %v627 = vpop.xlane.xlu0 %626
    %v628 = vcvt.f32.s32 %v627
    %v629 = vcvt.f32.s32 %v623
    %v630 = vshll.u32 %v629, 16
    %v631 = vadd.s32 %v630, %v628
    %v632 = vand.u32 %v512, 65535
    %v633 = vshra.s32 %v512, 16
    %v634 = vcvt.s32.f32 %v632
    %v635 = vcvt.s32.f32 %v633
    %636 = vmin.xlane.f32.xlu0 %v635
    %v637 = vpop.xlane.xlu0 %636
    %vm638 = vcmp.eq.f32.partialorder %v635, %v637
    %v639 = vsel %vm638, %v634, inf
    %640 = vmin.xlane.f32.xlu0 %v639
    %v641 = vpop.xlane.xlu0 %640
    %v642 = vcvt.f32.s32 %v641
    %v643 = vcvt.f32.s32 %v637
    %v644 = vshll.u32 %v643, 16
    %v645 = vadd.s32 %v644, %v642
    %v646 = vand.u32 %v513, 65535
    %v647 = vshra.s32 %v513, 16
    %v648 = vcvt.s32.f32 %v646
    %v649 = vcvt.s32.f32 %v647
    %650 = vmin.xlane.f32.xlu0 %v649
    %v651 = vpop.xlane.xlu0 %650
    %vm652 = vcmp.eq.f32.partialorder %v649, %v651
    %v653 = vsel %vm652, %v648, inf
    %654 = vmin.xlane.f32.xlu0 %v653
    %v655 = vpop.xlane.xlu0 %654
    %v656 = vcvt.f32.s32 %v655
    %v657 = vcvt.f32.s32 %v651
    %v658 = vshll.u32 %v657, 16
    %v659 = vadd.s32 %v658, %v656
    %v660 = vand.u32 %v514, 65535
    %v661 = vshra.s32 %v514, 16
    %v662 = vcvt.s32.f32 %v660
    %v663 = vcvt.s32.f32 %v661
    %664 = vmin.xlane.f32.xlu0 %v663
    %v665 = vpop.xlane.xlu0 %664
    %vm666 = vcmp.eq.f32.partialorder %v663, %v665
    %v667 = vsel %vm666, %v662, inf
    %668 = vmin.xlane.f32.xlu0 %v667
    %v669 = vpop.xlane.xlu0 %668
    %v670 = vcvt.f32.s32 %v669
    %v671 = vcvt.f32.s32 %v665
    %v672 = vshll.u32 %v671, 16
    %v673 = vadd.s32 %v672, %v670
    %v674 = vand.u32 %v515, 65535
    %v675 = vshra.s32 %v515, 16
    %v676 = vcvt.s32.f32 %v674
    %v677 = vcvt.s32.f32 %v675
    %678 = vmin.xlane.f32.xlu0 %v677
    %v679 = vpop.xlane.xlu0 %678
    %vm680 = vcmp.eq.f32.partialorder %v677, %v679
    %v681 = vsel %vm680, %v676, inf
    %682 = vmin.xlane.f32.xlu0 %v681
    %v683 = vpop.xlane.xlu0 %682
    %v684 = vcvt.f32.s32 %v683
    %v685 = vcvt.f32.s32 %v679
    %v686 = vshll.u32 %v685, 16
    %v687 = vadd.s32 %v686, %v684
    %v688 = vand.u32 %v516, 65535
    %v689 = vshra.s32 %v516, 16
    %v690 = vcvt.s32.f32 %v688
    %v691 = vcvt.s32.f32 %v689
    %692 = vmin.xlane.f32.xlu0 %v691
    %v693 = vpop.xlane.xlu0 %692
    %vm694 = vcmp.eq.f32.partialorder %v691, %v693
    %v695 = vsel %vm694, %v690, inf
    %696 = vmin.xlane.f32.xlu0 %v695
    %v697 = vpop.xlane.xlu0 %696
    %v698 = vcvt.f32.s32 %v697
    %v699 = vcvt.f32.s32 %v693
    %v700 = vshll.u32 %v699, 16
    %v701 = vadd.s32 %v700, %v698
    %v702 = vand.u32 %v517, 65535
    %v703 = vshra.s32 %v517, 16
    %v704 = vcvt.s32.f32 %v702
    %v705 = vcvt.s32.f32 %v703
    %706 = vmin.xlane.f32.xlu0 %v705
    %v707 = vpop.xlane.xlu0 %706
    %vm708 = vcmp.eq.f32.partialorder %v705, %v707
    %v709 = vsel %vm708, %v704, inf
    %710 = vmin.xlane.f32.xlu0 %v709
    %v711 = vpop.xlane.xlu0 %710
    %v712 = vcvt.f32.s32 %v711
    %v713 = vcvt.f32.s32 %v707
    %v714 = vshll.u32 %v713, 16
    %v715 = vadd.s32 %v714, %v712
    %v716 = vand.u32 %v518, 65535
    %v717 = vshra.s32 %v518, 16
    %v718 = vcvt.s32.f32 %v716
    %v719 = vcvt.s32.f32 %v717
    %720 = vmin.xlane.f32.xlu0 %v719
    %v721 = vpop.xlane.xlu0 %720
    %vm722 = vcmp.eq.f32.partialorder %v719, %v721
    %v723 = vsel %vm722, %v718, inf
    %724 = vmin.xlane.f32.xlu0 %v723
    %v725 = vpop.xlane.xlu0 %724
    %v726 = vcvt.f32.s32 %v725
    %v727 = vcvt.f32.s32 %v721
    %v728 = vshll.u32 %v727, 16
    %v729 = vadd.s32 %v728, %v726
    %v730 = vand.u32 %v519, 65535
    %v731 = vshra.s32 %v519, 16
    %v732 = vcvt.s32.f32 %v730
    %v733 = vcvt.s32.f32 %v731
    %734 = vmin.xlane.f32.xlu0 %v733
    %v735 = vpop.xlane.xlu0 %734
    %vm736 = vcmp.eq.f32.partialorder %v733, %v735
    %v737 = vsel %vm736, %v732, inf
    %738 = vmin.xlane.f32.xlu0 %v737
    %v739 = vpop.xlane.xlu0 %738
    %v740 = vcvt.f32.s32 %v739
    %v741 = vcvt.f32.s32 %v735
    %v742 = vshll.u32 %v741, 16
    %v743 = vadd.s32 %v742, %v740
    %v744 = vlaneseq
    %v745 = vshrl.u32 %v744, 7
    %v746 = vsub.s32 %v487, %v745
    %v747 = vrot.slane %v533, %v746
    %v748 = vadd.s32 %v487, 4294967288
    %v749 = vlaneseq
    %v750 = vshrl.u32 %v749, 7
    %v751 = vsub.s32 %v748, %v750
    %v752 = vrot.slane %v547, %v751
    %vm753 = vcmask 130112
    %v754 = vsel %vm753, %v752, %v747
    %v755 = vadd.s32 %v487, 4294967280
    %v756 = vlaneseq
    %v757 = vshrl.u32 %v756, 7
    %v758 = vsub.s32 %v755, %v757
    %v759 = vrot.slane %v561, %v758
    %vm760 = vcmask 195712
    %v761 = vsel %vm760, %v759, %v754
    %v762 = vadd.s32 %v487, 4294967272
    %v763 = vlaneseq
    %v764 = vshrl.u32 %v763, 7
    %v765 = vsub.s32 %v762, %v764
    %v766 = vrot.slane %v575, %v765
    %vm767 = vcmask 261312
    %v768 = vsel %vm767, %v766, %v761
    %v769 = vadd.s32 %v487, 4294967264
    %v770 = vlaneseq
    %v771 = vshrl.u32 %v770, 7
    %v772 = vsub.s32 %v769, %v771
    %v773 = vrot.slane %v589, %v772
    %vm774 = vcmask 326912
    %v775 = vsel %vm774, %v773, %v768
    %v776 = vadd.s32 %v487, 4294967256
    %v777 = vlaneseq
    %v778 = vshrl.u32 %v777, 7
    %v779 = vsub.s32 %v776, %v778
    %v780 = vrot.slane %v603, %v779
    %vm781 = vcmask 392512
    %v782 = vsel %vm781, %v780, %v775
    %v783 = vadd.s32 %v487, 4294967248
    %v784 = vlaneseq
    %v785 = vshrl.u32 %v784, 7
    %v786 = vsub.s32 %v783, %v785
    %v787 = vrot.slane %v617, %v786
    %vm788 = vcmask 458112
    %v789 = vsel %vm788, %v787, %v782
    %v790 = vadd.s32 %v487, 4294967240
    %v791 = vlaneseq
    %v792 = vshrl.u32 %v791, 7
    %v793 = vsub.s32 %v790, %v792
    %v794 = vrot.slane %v631, %v793
    %vm795 = vcmask 523712
    %v796 = vsel %vm795, %v794, %v789
    %v797 = vadd.s32 %v487, 4294967232
    %v798 = vlaneseq
    %v799 = vshrl.u32 %v798, 7
    %v800 = vsub.s32 %v797, %v799
    %v801 = vrot.slane %v645, %v800
    %vm802 = vcmask 589312
    %v803 = vsel %vm802, %v801, %v796
    %v804 = vadd.s32 %v487, 4294967224
    %v805 = vlaneseq
    %v806 = vshrl.u32 %v805, 7
    %v807 = vsub.s32 %v804, %v806
    %v808 = vrot.slane %v659, %v807
    %vm809 = vcmask 654912
    %v810 = vsel %vm809, %v808, %v803
    %v811 = vadd.s32 %v487, 4294967216
    %v812 = vlaneseq
    %v813 = vshrl.u32 %v812, 7
    %v814 = vsub.s32 %v811, %v813
    %v815 = vrot.slane %v673, %v814
    %vm816 = vcmask 720512
    %v817 = vsel %vm816, %v815, %v810
    %v818 = vadd.s32 %v487, 4294967208
    %v819 = vlaneseq
    %v820 = vshrl.u32 %v819, 7
    %v821 = vsub.s32 %v818, %v820
    %v822 = vrot.slane %v687, %v821
    %vm823 = vcmask 786112
    %v824 = vsel %vm823, %v822, %v817
    %v825 = vadd.s32 %v487, 4294967200
    %v826 = vlaneseq
    %v827 = vshrl.u32 %v826, 7
    %v828 = vsub.s32 %v825, %v827
    %v829 = vrot.slane %v701, %v828
    %vm830 = vcmask 851712
    %v831 = vsel %vm830, %v829, %v824
    %v832 = vadd.s32 %v487, 4294967192
    %v833 = vlaneseq
    %v834 = vshrl.u32 %v833, 7
    %v835 = vsub.s32 %v832, %v834
    %v836 = vrot.slane %v715, %v835
    %vm837 = vcmask 917312
    %v838 = vsel %vm837, %v836, %v831
    %v839 = vadd.s32 %v487, 4294967184
    %v840 = vlaneseq
    %v841 = vshrl.u32 %v840, 7
    %v842 = vsub.s32 %v839, %v841
    %v843 = vrot.slane %v729, %v842
    %vm844 = vcmask 982912
    %v845 = vsel %vm844, %v843, %v838
    %v846 = vadd.s32 %v487, 4294967176
    %v847 = vlaneseq
    %v848 = vshrl.u32 %v847, 7
    %v849 = vsub.s32 %v846, %v848
    %v850 = vrot.slane %v743, %v849
    %vm851 = vcmask 1048512
    %v852 = vsel %vm851, %v850, %v845
    %853 = vst [vmem:[#allocation5] sm:$0x1] %v852
    %vm854 = vcmp.eq.s32.totalorder %v487, %v533
    %vm855 = vcmp.eq.s32.totalorder %v487, %v547
    %vm856 = vcmp.eq.s32.totalorder %v487, %v561
    %vm857 = vcmp.eq.s32.totalorder %v487, %v575
    %vm858 = vcmp.eq.s32.totalorder %v487, %v589
    %vm859 = vcmp.eq.s32.totalorder %v487, %v603
    %vm860 = vcmp.eq.s32.totalorder %v487, %v617
    %vm861 = vcmp.eq.s32.totalorder %v487, %v631
    %vm862 = vcmp.eq.s32.totalorder %v487, %v645
    %vm863 = vcmp.eq.s32.totalorder %v487, %v659
    %vm864 = vcmp.eq.s32.totalorder %v487, %v673
    %vm865 = vcmp.eq.s32.totalorder %v487, %v687
    %vm866 = vcmp.eq.s32.totalorder %v487, %v701
    %vm867 = vcmp.eq.s32.totalorder %v487, %v715
    %vm868 = vcmp.eq.s32.totalorder %v487, %v729
    %vm869 = vcmp.eq.s32.totalorder %v487, %v743
    %v870 = vsel %vm854, 1, 0
    %v871 = vsel %vm855, 1, 0
    %v872 = vsel %vm856, 1, 0
    %v873 = vsel %vm857, 1, 0
    %v874 = vsel %vm858, 1, 0
    %v875 = vsel %vm859, 1, 0
    %v876 = vsel %vm860, 1, 0
    %v877 = vsel %vm861, 1, 0
    %v878 = vsel %vm862, 1, 0
    %v879 = vsel %vm863, 1, 0
    %v880 = vsel %vm864, 1, 0
    %v881 = vsel %vm865, 1, 0
    %v882 = vsel %vm866, 1, 0
    %v883 = vsel %vm867, 1, 0
    %v884 = vsel %vm868, 1, 0
    %v885 = vsel %vm869, 1, 0
    %v886 = vcvt.s32.f32 %v870
    %v887 = vcvt.s32.f32 %v871
    %v888 = vcvt.s32.f32 %v872
    %v889 = vcvt.s32.f32 %v873
    %v890 = vcvt.s32.f32 %v874
    %v891 = vcvt.s32.f32 %v875
    %v892 = vcvt.s32.f32 %v876
    %v893 = vcvt.s32.f32 %v877
    %v894 = vcvt.s32.f32 %v878
    %v895 = vcvt.s32.f32 %v879
    %v896 = vcvt.s32.f32 %v880
    %v897 = vcvt.s32.f32 %v881
    %v898 = vcvt.s32.f32 %v882
    %v899 = vcvt.s32.f32 %v883
    %v900 = vcvt.s32.f32 %v884
    %v901 = vcvt.s32.f32 %v885
    %902 = vmatprep.subr.mxu0 0.0
    %903 = vmatpush1.xpose.msra.mxu0 %v285
    %904 = vmatprep.subr.mxu0 0.0
    %905 = vmatpush1.xpose.msra.mxu0 %v284
    %906 = vmatprep.subr.mxu0 0.0
    %907 = vmatpush1.xpose.msra.mxu0 %v283
    %908 = vmatprep.subr.mxu0 0.0
    %909 = vmatpush1.xpose.msra.mxu0 %v282
    %910 = vmatprep.subr.mxu0 0.0
    %911 = vmatpush1.xpose.msra.mxu0 %v281
    %912 = vmatprep.subr.mxu0 0.0
    %913 = vmatpush1.xpose.msra.mxu0 %v280
    %914 = vmatprep.subr.mxu0 0.0
    %915 = vmatpush1.xpose.msra.mxu0 %v279
    %916 = vmatprep.subr.mxu0 0.0
    %917 = vmatpush1.xpose.msra.mxu0 %v278
    %918 = vmatprep.subr.mxu0 0.0
    %919 = vmatpush1.xpose.msra.mxu0 %v277
    %920 = vmatprep.subr.mxu0 0.0
    %921 = vmatpush1.xpose.msra.mxu0 %v276
    %922 = vmatprep.subr.mxu0 0.0
    %923 = vmatpush1.xpose.msra.mxu0 %v275
    %924 = vmatprep.subr.mxu0 0.0
    %925 = vmatpush1.xpose.msra.mxu0 %v274
    %926 = vmatprep.subr.mxu0 0.0
    %927 = vmatpush1.xpose.msra.mxu0 %v273
    %928 = vmatprep.subr.mxu0 0.0
    %929 = vmatpush1.xpose.msra.mxu0 %v272
    %930 = vmatprep.subr.mxu0 0.0
    %931 = vmatpush1.xpose.msra.mxu0 %v271
    %932 = vmatprep.subr.mxu0 0.0
    %933 = vmatpush1.xpose.msra.mxu0 %v270
    %934 = vmatprep.subr.mxu0 0.0
    %935 = vmatpush2.xpose.msra.mxu0 0.0
    %936 = vmatprep.subr.mxu0 0.0
    %937 = vmatpush2.xpose.msra.mxu0 0.0
    %938 = vmatprep.subr.mxu0 0.0
    %939 = vmatpush2.xpose.msra.mxu0 0.0
    %940 = vmatprep.subr.mxu0 0.0
    %941 = vmatpush2.xpose.msra.mxu0 0.0
    %942 = vmatprep.subr.mxu0 0.0
    %943 = vmatpush2.xpose.msra.mxu0 0.0
    %944 = vmatprep.subr.mxu0 0.0
    %945 = vmatpush2.xpose.msra.mxu0 0.0
    %946 = vmatprep.subr.mxu0 0.0
    %947 = vmatpush2.xpose.msra.mxu0 0.0
    %948 = vmatprep.subr.mxu0 0.0
    %949 = vmatpush2.xpose.msra.mxu0 0.0
    %950 = vmatprep.subr.mxu0 0.0
    %951 = vmatpush2.xpose.msra.mxu0 0.0
    %952 = vmatprep.subr.mxu0 0.0
    %953 = vmatpush2.xpose.msra.mxu0 0.0
    %954 = vmatprep.subr.mxu0 0.0
    %955 = vmatpush2.xpose.msra.mxu0 0.0
    %956 = vmatprep.subr.mxu0 0.0
    %957 = vmatpush2.xpose.msra.mxu0 0.0
    %958 = vmatprep.subr.mxu0 0.0
    %959 = vmatpush2.xpose.msra.mxu0 0.0
    %960 = vmatprep.subr.mxu0 0.0
    %961 = vmatpush2.xpose.msra.mxu0 0.0
    %962 = vmatprep.subr.mxu0 0.0
    %963 = vmatpush2.xpose.msra.mxu0 0.0
    %964 = vmatprep.subr.mxu0 0.0
    %965 = vmatpush2.xpose.msra.mxu0 0.0
    %966 = vmatprep.mubr.f32.mxu0 0.0
    %967 = vmatmul.mubr.f32.gmra.mxu0 %v886
    %v968 = vpop.f32.mrf.mxu0
    %v969 = vadd.f32 0.0, %v968
    %v970 = vpop.f32.mrf.mxu0
    %971 = vmatprep.mubr.f32.mxu0 0.0
    %972 = vmatmul.mubr.f32.gmra.mxu0 %v887
    %v973 = vpop.f32.mrf.mxu0
    %v974 = vadd.f32 0.0, %v973
    %v975 = vpop.f32.mrf.mxu0
    %976 = vmatprep.mubr.f32.mxu0 0.0
    %977 = vmatmul.mubr.f32.gmra.mxu0 %v888
    %v978 = vpop.f32.mrf.mxu0
    %v979 = vadd.f32 0.0, %v978
    %v980 = vpop.f32.mrf.mxu0
    %981 = vmatprep.mubr.f32.mxu0 0.0
    %982 = vmatmul.mubr.f32.gmra.mxu0 %v889
    %v983 = vpop.f32.mrf.mxu0
    %v984 = vadd.f32 0.0, %v983
    %v985 = vpop.f32.mrf.mxu0
    %986 = vmatprep.mubr.f32.mxu0 0.0
    %987 = vmatmul.mubr.f32.gmra.mxu0 %v890
    %v988 = vpop.f32.mrf.mxu0
    %v989 = vadd.f32 0.0, %v988
    %v990 = vpop.f32.mrf.mxu0
    %991 = vmatprep.mubr.f32.mxu0 0.0
    %992 = vmatmul.mubr.f32.gmra.mxu0 %v891
    %v993 = vpop.f32.mrf.mxu0
    %v994 = vadd.f32 0.0, %v993
    %v995 = vpop.f32.mrf.mxu0
    %996 = vmatprep.mubr.f32.mxu0 0.0
    %997 = vmatmul.mubr.f32.gmra.mxu0 %v892
    %v998 = vpop.f32.mrf.mxu0
    %v999 = vadd.f32 0.0, %v998
    %v1000 = vpop.f32.mrf.mxu0
    %1001 = vmatprep.mubr.f32.mxu0 0.0
    %1002 = vmatmul.mubr.f32.gmra.mxu0 %v893
    %v1003 = vpop.f32.mrf.mxu0
    %v1004 = vadd.f32 0.0, %v1003
    %v1005 = vpop.f32.mrf.mxu0
    %1006 = vmatprep.mubr.f32.mxu0 0.0
    %1007 = vmatmul.mubr.f32.gmra.mxu0 %v894
    %v1008 = vpop.f32.mrf.mxu0
    %v1009 = vadd.f32 0.0, %v1008
    %v1010 = vpop.f32.mrf.mxu0
    %1011 = vmatprep.mubr.f32.mxu0 0.0
    %1012 = vmatmul.mubr.f32.gmra.mxu0 %v895
    %v1013 = vpop.f32.mrf.mxu0
    %v1014 = vadd.f32 0.0, %v1013
    %v1015 = vpop.f32.mrf.mxu0
    %1016 = vmatprep.mubr.f32.mxu0 0.0
    %1017 = vmatmul.mubr.f32.gmra.mxu0 %v896
    %v1018 = vpop.f32.mrf.mxu0
    %v1019 = vadd.f32 0.0, %v1018
    %v1020 = vpop.f32.mrf.mxu0
    %1021 = vmatprep.mubr.f32.mxu0 0.0
    %1022 = vmatmul.mubr.f32.gmra.mxu0 %v897
    %v1023 = vpop.f32.mrf.mxu0
    %v1024 = vadd.f32 0.0, %v1023
    %v1025 = vpop.f32.mrf.mxu0
    %1026 = vmatprep.mubr.f32.mxu0 0.0
    %1027 = vmatmul.mubr.f32.gmra.mxu0 %v898
    %v1028 = vpop.f32.mrf.mxu0
    %v1029 = vadd.f32 0.0, %v1028
    %v1030 = vpop.f32.mrf.mxu0
    %1031 = vmatprep.mubr.f32.mxu0 0.0
    %1032 = vmatmul.mubr.f32.gmra.mxu0 %v899
    %v1033 = vpop.f32.mrf.mxu0
    %v1034 = vadd.f32 0.0, %v1033
    %v1035 = vpop.f32.mrf.mxu0
    %1036 = vmatprep.mubr.f32.mxu0 0.0
    %1037 = vmatmul.mubr.f32.gmra.mxu0 %v900
    %v1038 = vpop.f32.mrf.mxu0
    %v1039 = vadd.f32 0.0, %v1038
    %v1040 = vpop.f32.mrf.mxu0
    %1041 = vmatprep.mubr.f32.mxu0 0.0
    %1042 = vmatmul.mubr.f32.gmra.mxu0 %v901
    %v1043 = vpop.f32.mrf.mxu0
    %v1044 = vadd.f32 0.0, %v1043
    %v1045 = vpop.f32.mrf.mxu0
    %1046 = vdwg.mxu0
    %v1047 = vsub.f32 %v254, %v969
    %v1048 = vsub.f32 %v255, %v974
    %v1049 = vsub.f32 %v256, %v979
    %v1050 = vsub.f32 %v257, %v984
    %v1051 = vsub.f32 %v258, %v989
    %v1052 = vsub.f32 %v259, %v994
    %v1053 = vsub.f32 %v260, %v999
    %v1054 = vsub.f32 %v261, %v1004
    %v1055 = vsub.f32 %v262, %v1009
    %v1056 = vsub.f32 %v263, %v1014
    %v1057 = vsub.f32 %v264, %v1019
    %v1058 = vsub.f32 %v265, %v1024
    %v1059 = vsub.f32 %v266, %v1029
    %v1060 = vsub.f32 %v267, %v1034
    %v1061 = vsub.f32 %v268, %v1039
    %v1062 = vsub.f32 %v269, %v1044
    %s1063 = scalar_lea.vmem [#allocation2], 128
    %v1064 = vld [vmem:[%s1063] sm:$0xff]
    %v1065 = vld [vmem:[%s1063 + $0x8] sm:$0xff]
    %v1066 = vld [vmem:[%s1063 + $0x10] sm:$0xff]
    %v1067 = vld [vmem:[%s1063 + $0x18] sm:$0xff]
    %v1068 = vld [vmem:[%s1063 + $0x20] sm:$0xff]
    %v1069 = vld [vmem:[%s1063 + $0x28] sm:$0xff]
    %v1070 = vld [vmem:[%s1063 + $0x30] sm:$0xff]
    %v1071 = vld [vmem:[%s1063 + $0x38] sm:$0xff]
    %v1072 = vld [vmem:[%s1063 + $0x40] sm:$0xff]
    %v1073 = vld [vmem:[%s1063 + $0x48] sm:$0xff]
    %v1074 = vld [vmem:[%s1063 + $0x50] sm:$0xff]
    %v1075 = vld [vmem:[%s1063 + $0x58] sm:$0xff]
    %v1076 = vld [vmem:[%s1063 + $0x60] sm:$0xff]
    %v1077 = vld [vmem:[%s1063 + $0x68] sm:$0xff]
    %v1078 = vld [vmem:[%s1063 + $0x70] sm:$0xff]
    %v1079 = vld [vmem:[%s1063 + $0x78] sm:$0xff]
    %1080 = vmatprep.subr.mxu0 0.0
    %1081 = vmatpush1.msra.mxu0 %v1079
    %1082 = vmatprep.subr.mxu0 0.0
    %1083 = vmatpush1.msra.mxu0 %v1078
    %1084 = vmatprep.subr.mxu0 0.0
    %1085 = vmatpush1.msra.mxu0 %v1077
    %1086 = vmatprep.subr.mxu0 0.0
    %1087 = vmatpush1.msra.mxu0 %v1076
    %1088 = vmatprep.subr.mxu0 0.0
    %1089 = vmatpush1.msra.mxu0 %v1075
    %1090 = vmatprep.subr.mxu0 0.0
    %1091 = vmatpush1.msra.mxu0 %v1074
    %1092 = vmatprep.subr.mxu0 0.0
    %1093 = vmatpush1.msra.mxu0 %v1073
    %1094 = vmatprep.subr.mxu0 0.0
    %1095 = vmatpush1.msra.mxu0 %v1072
    %1096 = vmatprep.subr.mxu0 0.0
    %1097 = vmatpush1.msra.mxu0 %v1071
    %1098 = vmatprep.subr.mxu0 0.0
    %1099 = vmatpush1.msra.mxu0 %v1070
    %1100 = vmatprep.subr.mxu0 0.0
    %1101 = vmatpush1.msra.mxu0 %v1069
    %1102 = vmatprep.subr.mxu0 0.0
    %1103 = vmatpush1.msra.mxu0 %v1068
    %1104 = vmatprep.subr.mxu0 0.0
    %1105 = vmatpush1.msra.mxu0 %v1067
    %1106 = vmatprep.subr.mxu0 0.0
    %1107 = vmatpush1.msra.mxu0 %v1066
    %1108 = vmatprep.subr.mxu0 0.0
    %1109 = vmatpush1.msra.mxu0 %v1065
    %1110 = vmatprep.subr.mxu0 0.0
    %1111 = vmatpush1.msra.mxu0 %v1064
    %1112 = vmatprep.subr.mxu0 0.0
    %1113 = vmatpush2.msra.mxu0 0.0
    %1114 = vmatprep.subr.mxu0 0.0
    %1115 = vmatpush2.msra.mxu0 0.0
    %1116 = vmatprep.subr.mxu0 0.0
    %1117 = vmatpush2.msra.mxu0 0.0
    %1118 = vmatprep.subr.mxu0 0.0
    %1119 = vmatpush2.msra.mxu0 0.0
    %1120 = vmatprep.subr.mxu0 0.0
    %1121 = vmatpush2.msra.mxu0 0.0
    %1122 = vmatprep.subr.mxu0 0.0
    %1123 = vmatpush2.msra.mxu0 0.0
    %1124 = vmatprep.subr.mxu0 0.0
    %1125 = vmatpush2.msra.mxu0 0.0
    %1126 = vmatprep.subr.mxu0 0.0
    %1127 = vmatpush2.msra.mxu0 0.0
    %1128 = vmatprep.subr.mxu0 0.0
    %1129 = vmatpush2.msra.mxu0 0.0
    %1130 = vmatprep.subr.mxu0 0.0
    %1131 = vmatpush2.msra.mxu0 0.0
    %1132 = vmatprep.subr.mxu0 0.0
    %1133 = vmatpush2.msra.mxu0 0.0
    %1134 = vmatprep.subr.mxu0 0.0
    %1135 = vmatpush2.msra.mxu0 0.0
    %1136 = vmatprep.subr.mxu0 0.0
    %1137 = vmatpush2.msra.mxu0 0.0
    %1138 = vmatprep.subr.mxu0 0.0
    %1139 = vmatpush2.msra.mxu0 0.0
    %1140 = vmatprep.subr.mxu0 0.0
    %1141 = vmatpush2.msra.mxu0 0.0
    %1142 = vmatprep.subr.mxu0 0.0
    %1143 = vmatpush2.msra.mxu0 0.0
    %1144 = vmatprep.mubr.f32.mxu0 0.0
    %1145 = vmatmul.mubr.f32.gmra.mxu0 %v1047
    %v1146 = vpop.f32.mrf.mxu0
    %v1147 = vadd.f32 0.0, %v1146
    %v1148 = vpop.f32.mrf.mxu0
    %1149 = vmatprep.mubr.f32.mxu0 0.0
    %1150 = vmatmul.mubr.f32.gmra.mxu0 %v1048
    %v1151 = vpop.f32.mrf.mxu0
    %v1152 = vadd.f32 0.0, %v1151
    %v1153 = vpop.f32.mrf.mxu0
    %1154 = vmatprep.mubr.f32.mxu0 0.0
    %1155 = vmatmul.mubr.f32.gmra.mxu0 %v1049
    %v1156 = vpop.f32.mrf.mxu0
    %v1157 = vadd.f32 0.0, %v1156
    %v1158 = vpop.f32.mrf.mxu0
    %1159 = vmatprep.mubr.f32.mxu0 0.0
    %1160 = vmatmul.mubr.f32.gmra.mxu0 %v1050
    %v1161 = vpop.f32.mrf.mxu0
    %v1162 = vadd.f32 0.0, %v1161
    %v1163 = vpop.f32.mrf.mxu0
    %1164 = vmatprep.mubr.f32.mxu0 0.0
    %1165 = vmatmul.mubr.f32.gmra.mxu0 %v1051
    %v1166 = vpop.f32.mrf.mxu0
    %v1167 = vadd.f32 0.0, %v1166
    %v1168 = vpop.f32.mrf.mxu0
    %1169 = vmatprep.mubr.f32.mxu0 0.0
    %1170 = vmatmul.mubr.f32.gmra.mxu0 %v1052
    %v1171 = vpop.f32.mrf.mxu0
    %v1172 = vadd.f32 0.0, %v1171
    %v1173 = vpop.f32.mrf.mxu0
    %1174 = vmatprep.mubr.f32.mxu0 0.0
    %1175 = vmatmul.mubr.f32.gmra.mxu0 %v1053
    %v1176 = vpop.f32.mrf.mxu0
    %v1177 = vadd.f32 0.0, %v1176
    %v1178 = vpop.f32.mrf.mxu0
    %1179 = vmatprep.mubr.f32.mxu0 0.0
    %1180 = vmatmul.mubr.f32.gmra.mxu0 %v1054
    %v1181 = vpop.f32.mrf.mxu0
    %v1182 = vadd.f32 0.0, %v1181
    %v1183 = vpop.f32.mrf.mxu0
    %1184 = vmatprep.mubr.f32.mxu0 0.0
    %1185 = vmatmul.mubr.f32.gmra.mxu0 %v1055
    %v1186 = vpop.f32.mrf.mxu0
    %v1187 = vadd.f32 0.0, %v1186
    %v1188 = vpop.f32.mrf.mxu0
    %1189 = vmatprep.mubr.f32.mxu0 0.0
    %1190 = vmatmul.mubr.f32.gmra.mxu0 %v1056
    %v1191 = vpop.f32.mrf.mxu0
    %v1192 = vadd.f32 0.0, %v1191
    %v1193 = vpop.f32.mrf.mxu0
    %1194 = vmatprep.mubr.f32.mxu0 0.0
    %1195 = vmatmul.mubr.f32.gmra.mxu0 %v1057
    %v1196 = vpop.f32.mrf.mxu0
    %v1197 = vadd.f32 0.0, %v1196
    %v1198 = vpop.f32.mrf.mxu0
    %1199 = vmatprep.mubr.f32.mxu0 0.0
    %1200 = vmatmul.mubr.f32.gmra.mxu0 %v1058
    %v1201 = vpop.f32.mrf.mxu0
    %v1202 = vadd.f32 0.0, %v1201
    %v1203 = vpop.f32.mrf.mxu0
    %1204 = vmatprep.mubr.f32.mxu0 0.0
    %1205 = vmatmul.mubr.f32.gmra.mxu0 %v1059
    %v1206 = vpop.f32.mrf.mxu0
    %v1207 = vadd.f32 0.0, %v1206
    %v1208 = vpop.f32.mrf.mxu0
    %1209 = vmatprep.mubr.f32.mxu0 0.0
    %1210 = vmatmul.mubr.f32.gmra.mxu0 %v1060
    %v1211 = vpop.f32.mrf.mxu0
    %v1212 = vadd.f32 0.0, %v1211
    %v1213 = vpop.f32.mrf.mxu0
    %1214 = vmatprep.mubr.f32.mxu0 0.0
    %1215 = vmatmul.mubr.f32.gmra.mxu0 %v1061
    %v1216 = vpop.f32.mrf.mxu0
    %v1217 = vadd.f32 0.0, %v1216
    %v1218 = vpop.f32.mrf.mxu0
    %1219 = vmatprep.mubr.f32.mxu0 0.0
    %1220 = vmatmul.mubr.f32.gmra.mxu0 %v1062
    %v1221 = vpop.f32.mrf.mxu0
    %v1222 = vadd.f32 0.0, %v1221
    %v1223 = vpop.f32.mrf.mxu0
    %1224 = vdwg.mxu0
    %s1225 = scalar_lea.vmem %s4, 1
    %v1226 = vld [vmem:[%s1225] sm:$0x1]
    %v1228 = vlaneseq
    %v1229 = vshrl.u32 %v1228, 7
    %v1230 = vsub.s32 0, %v1229
    %v1231 = vrot.slane %v1226, %v1230
    %v1233 = vsub.f32 %v1231, %v1147
    %v1234 = vsub.f32 %v1231, %v1152
    %v1235 = vsub.f32 %v1231, %v1157
    %v1236 = vsub.f32 %v1231, %v1162
    %v1237 = vsub.f32 %v1231, %v1167
    %v1238 = vsub.f32 %v1231, %v1172
    %v1239 = vsub.f32 %v1231, %v1177
    %v1240 = vsub.f32 %v1231, %v1182
    %v1241 = vsub.f32 %v1231, %v1187
    %v1242 = vsub.f32 %v1231, %v1192
    %v1243 = vsub.f32 %v1231, %v1197
    %v1244 = vsub.f32 %v1231, %v1202
    %v1245 = vsub.f32 %v1231, %v1207
    %v1246 = vsub.f32 %v1231, %v1212
    %v1247 = vsub.f32 %v1231, %v1217
    %v1248 = vsub.f32 %v1231, %v1222
    %1249 = vmin.xlane.f32.xlu0 %v1233
    %v1250 = vpop.xlane.xlu0 %1249
    %1251 = vmin.xlane.f32.xlu0 %v1234
    %v1252 = vpop.xlane.xlu0 %1251
    %1253 = vmin.xlane.f32.xlu0 %v1235
    %v1254 = vpop.xlane.xlu0 %1253
    %1255 = vmin.xlane.f32.xlu0 %v1236
    %v1256 = vpop.xlane.xlu0 %1255
    %1257 = vmin.xlane.f32.xlu0 %v1237
    %v1258 = vpop.xlane.xlu0 %1257
    %1259 = vmin.xlane.f32.xlu0 %v1238
    %v1260 = vpop.xlane.xlu0 %1259
    %1261 = vmin.xlane.f32.xlu0 %v1239
    %v1262 = vpop.xlane.xlu0 %1261
    %1263 = vmin.xlane.f32.xlu0 %v1240
    %v1264 = vpop.xlane.xlu0 %1263
    %1265 = vmin.xlane.f32.xlu0 %v1241
    %v1266 = vpop.xlane.xlu0 %1265
    %1267 = vmin.xlane.f32.xlu0 %v1242
    %v1268 = vpop.xlane.xlu0 %1267
    %1269 = vmin.xlane.f32.xlu0 %v1243
    %v1270 = vpop.xlane.xlu0 %1269
    %1271 = vmin.xlane.f32.xlu0 %v1244
    %v1272 = vpop.xlane.xlu0 %1271
    %1273 = vmin.xlane.f32.xlu0 %v1245
    %v1274 = vpop.xlane.xlu0 %1273
    %1275 = vmin.xlane.f32.xlu0 %v1246
    %v1276 = vpop.xlane.xlu0 %1275
    %1277 = vmin.xlane.f32.xlu0 %v1247
    %v1278 = vpop.xlane.xlu0 %1277
    %1279 = vmin.xlane.f32.xlu0 %v1248
    %v1280 = vpop.xlane.xlu0 %1279
    %vm1281 = vcmp.le.f32.partialorder %v1233, %v1250
    %vm1282 = vcmp.le.f32.partialorder %v1234, %v1252
    %vm1283 = vcmp.le.f32.partialorder %v1235, %v1254
    %vm1284 = vcmp.le.f32.partialorder %v1236, %v1256
    %vm1285 = vcmp.le.f32.partialorder %v1237, %v1258
    %vm1286 = vcmp.le.f32.partialorder %v1238, %v1260
    %vm1287 = vcmp.le.f32.partialorder %v1239, %v1262
    %vm1288 = vcmp.le.f32.partialorder %v1240, %v1264
    %vm1289 = vcmp.le.f32.partialorder %v1241, %v1266
    %vm1290 = vcmp.le.f32.partialorder %v1242, %v1268
    %vm1291 = vcmp.le.f32.partialorder %v1243, %v1270
    %vm1292 = vcmp.le.f32.partialorder %v1244, %v1272
    %vm1293 = vcmp.le.f32.partialorder %v1245, %v1274
    %vm1294 = vcmp.le.f32.partialorder %v1246, %v1276
    %vm1295 = vcmp.le.f32.partialorder %v1247, %v1278
    %vm1296 = vcmp.le.f32.partialorder %v1248, %v1280
    %v1297 = vsel %vm1281, %v487, 128
    %v1298 = vsel %vm1282, %v487, 128
    %v1299 = vsel %vm1283, %v487, 128
    %v1300 = vsel %vm1284, %v487, 128
    %v1301 = vsel %vm1285, %v487, 128
    %v1302 = vsel %vm1286, %v487, 128
    %v1303 = vsel %vm1287, %v487, 128
    %v1304 = vsel %vm1288, %v487, 128
    %v1305 = vsel %vm1289, %v487, 128
    %v1306 = vsel %vm1290, %v487, 128
    %v1307 = vsel %vm1291, %v487, 128
    %v1308 = vsel %vm1292, %v487, 128
    %v1309 = vsel %vm1293, %v487, 128
    %v1310 = vsel %vm1294, %v487, 128
    %v1311 = vsel %vm1295, %v487, 128
    %v1312 = vsel %vm1296, %v487, 128
    %v1313 = vand.u32 %v1297, 65535
    %v1314 = vshra.s32 %v1297, 16
    %v1315 = vcvt.s32.f32 %v1313
    %v1316 = vcvt.s32.f32 %v1314
    %1317 = vmin.xlane.f32.xlu0 %v1316
    %v1318 = vpop.xlane.xlu0 %1317
    %vm1319 = vcmp.eq.f32.partialorder %v1316, %v1318
    %v1320 = vsel %vm1319, %v1315, inf
    %1321 = vmin.xlane.f32.xlu0 %v1320
    %v1322 = vpop.xlane.xlu0 %1321
    %v1323 = vcvt.f32.s32 %v1322
    %v1324 = vcvt.f32.s32 %v1318
    %v1325 = vshll.u32 %v1324, 16
    %v1326 = vadd.s32 %v1325, %v1323
    %v1327 = vand.u32 %v1298, 65535
    %v1328 = vshra.s32 %v1298, 16
    %v1329 = vcvt.s32.f32 %v1327
    %v1330 = vcvt.s32.f32 %v1328
    %1331 = vmin.xlane.f32.xlu0 %v1330
    %v1332 = vpop.xlane.xlu0 %1331
    %vm1333 = vcmp.eq.f32.partialorder %v1330, %v1332
    %v1334 = vsel %vm1333, %v1329, inf
    %1335 = vmin.xlane.f32.xlu0 %v1334
    %v1336 = vpop.xlane.xlu0 %1335
    %v1337 = vcvt.f32.s32 %v1336
    %v1338 = vcvt.f32.s32 %v1332
    %v1339 = vshll.u32 %v1338, 16
    %v1340 = vadd.s32 %v1339, %v1337
    %v1341 = vand.u32 %v1299, 65535
    %v1342 = vshra.s32 %v1299, 16
    %v1343 = vcvt.s32.f32 %v1341
    %v1344 = vcvt.s32.f32 %v1342
    %1345 = vmin.xlane.f32.xlu0 %v1344
    %v1346 = vpop.xlane.xlu0 %1345
    %vm1347 = vcmp.eq.f32.partialorder %v1344, %v1346
    %v1348 = vsel %vm1347, %v1343, inf
    %1349 = vmin.xlane.f32.xlu0 %v1348
    %v1350 = vpop.xlane.xlu0 %1349
    %v1351 = vcvt.f32.s32 %v1350
    %v1352 = vcvt.f32.s32 %v1346
    %v1353 = vshll.u32 %v1352, 16
    %v1354 = vadd.s32 %v1353, %v1351
    %v1355 = vand.u32 %v1300, 65535
    %v1356 = vshra.s32 %v1300, 16
    %v1357 = vcvt.s32.f32 %v1355
    %v1358 = vcvt.s32.f32 %v1356
    %1359 = vmin.xlane.f32.xlu0 %v1358
    %v1360 = vpop.xlane.xlu0 %1359
    %vm1361 = vcmp.eq.f32.partialorder %v1358, %v1360
    %v1362 = vsel %vm1361, %v1357, inf
    %1363 = vmin.xlane.f32.xlu0 %v1362
    %v1364 = vpop.xlane.xlu0 %1363
    %v1365 = vcvt.f32.s32 %v1364
    %v1366 = vcvt.f32.s32 %v1360
    %v1367 = vshll.u32 %v1366, 16
    %v1368 = vadd.s32 %v1367, %v1365
    %v1369 = vand.u32 %v1301, 65535
    %v1370 = vshra.s32 %v1301, 16
    %v1371 = vcvt.s32.f32 %v1369
    %v1372 = vcvt.s32.f32 %v1370
    %1373 = vmin.xlane.f32.xlu0 %v1372
    %v1374 = vpop.xlane.xlu0 %1373
    %vm1375 = vcmp.eq.f32.partialorder %v1372, %v1374
    %v1376 = vsel %vm1375, %v1371, inf
    %1377 = vmin.xlane.f32.xlu0 %v1376
    %v1378 = vpop.xlane.xlu0 %1377
    %v1379 = vcvt.f32.s32 %v1378
    %v1380 = vcvt.f32.s32 %v1374
    %v1381 = vshll.u32 %v1380, 16
    %v1382 = vadd.s32 %v1381, %v1379
    %v1383 = vand.u32 %v1302, 65535
    %v1384 = vshra.s32 %v1302, 16
    %v1385 = vcvt.s32.f32 %v1383
    %v1386 = vcvt.s32.f32 %v1384
    %1387 = vmin.xlane.f32.xlu0 %v1386
    %v1388 = vpop.xlane.xlu0 %1387
    %vm1389 = vcmp.eq.f32.partialorder %v1386, %v1388
    %v1390 = vsel %vm1389, %v1385, inf
    %1391 = vmin.xlane.f32.xlu0 %v1390
    %v1392 = vpop.xlane.xlu0 %1391
    %v1393 = vcvt.f32.s32 %v1392
    %v1394 = vcvt.f32.s32 %v1388
    %v1395 = vshll.u32 %v1394, 16
    %v1396 = vadd.s32 %v1395, %v1393
    %v1397 = vand.u32 %v1303, 65535
    %v1398 = vshra.s32 %v1303, 16
    %v1399 = vcvt.s32.f32 %v1397
    %v1400 = vcvt.s32.f32 %v1398
    %1401 = vmin.xlane.f32.xlu0 %v1400
    %v1402 = vpop.xlane.xlu0 %1401
    %vm1403 = vcmp.eq.f32.partialorder %v1400, %v1402
    %v1404 = vsel %vm1403, %v1399, inf
    %1405 = vmin.xlane.f32.xlu0 %v1404
    %v1406 = vpop.xlane.xlu0 %1405
    %v1407 = vcvt.f32.s32 %v1406
    %v1408 = vcvt.f32.s32 %v1402
    %v1409 = vshll.u32 %v1408, 16
    %v1410 = vadd.s32 %v1409, %v1407
    %v1411 = vand.u32 %v1304, 65535
    %v1412 = vshra.s32 %v1304, 16
    %v1413 = vcvt.s32.f32 %v1411
    %v1414 = vcvt.s32.f32 %v1412
    %1415 = vmin.xlane.f32.xlu0 %v1414
    %v1416 = vpop.xlane.xlu0 %1415
    %vm1417 = vcmp.eq.f32.partialorder %v1414, %v1416
    %v1418 = vsel %vm1417, %v1413, inf
    %1419 = vmin.xlane.f32.xlu0 %v1418
    %v1420 = vpop.xlane.xlu0 %1419
    %v1421 = vcvt.f32.s32 %v1420
    %v1422 = vcvt.f32.s32 %v1416
    %v1423 = vshll.u32 %v1422, 16
    %v1424 = vadd.s32 %v1423, %v1421
    %v1425 = vand.u32 %v1305, 65535
    %v1426 = vshra.s32 %v1305, 16
    %v1427 = vcvt.s32.f32 %v1425
    %v1428 = vcvt.s32.f32 %v1426
    %1429 = vmin.xlane.f32.xlu0 %v1428
    %v1430 = vpop.xlane.xlu0 %1429
    %vm1431 = vcmp.eq.f32.partialorder %v1428, %v1430
    %v1432 = vsel %vm1431, %v1427, inf
    %1433 = vmin.xlane.f32.xlu0 %v1432
    %v1434 = vpop.xlane.xlu0 %1433
    %v1435 = vcvt.f32.s32 %v1434
    %v1436 = vcvt.f32.s32 %v1430
    %v1437 = vshll.u32 %v1436, 16
    %v1438 = vadd.s32 %v1437, %v1435
    %v1439 = vand.u32 %v1306, 65535
    %v1440 = vshra.s32 %v1306, 16
    %v1441 = vcvt.s32.f32 %v1439
    %v1442 = vcvt.s32.f32 %v1440
    %1443 = vmin.xlane.f32.xlu0 %v1442
    %v1444 = vpop.xlane.xlu0 %1443
    %vm1445 = vcmp.eq.f32.partialorder %v1442, %v1444
    %v1446 = vsel %vm1445, %v1441, inf
    %1447 = vmin.xlane.f32.xlu0 %v1446
    %v1448 = vpop.xlane.xlu0 %1447
    %v1449 = vcvt.f32.s32 %v1448
    %v1450 = vcvt.f32.s32 %v1444
    %v1451 = vshll.u32 %v1450, 16
    %v1452 = vadd.s32 %v1451, %v1449
    %v1453 = vand.u32 %v1307, 65535
    %v1454 = vshra.s32 %v1307, 16
    %v1455 = vcvt.s32.f32 %v1453
    %v1456 = vcvt.s32.f32 %v1454
    %1457 = vmin.xlane.f32.xlu0 %v1456
    %v1458 = vpop.xlane.xlu0 %1457
    %vm1459 = vcmp.eq.f32.partialorder %v1456, %v1458
    %v1460 = vsel %vm1459, %v1455, inf
    %1461 = vmin.xlane.f32.xlu0 %v1460
    %v1462 = vpop.xlane.xlu0 %1461
    %v1463 = vcvt.f32.s32 %v1462
    %v1464 = vcvt.f32.s32 %v1458
    %v1465 = vshll.u32 %v1464, 16
    %v1466 = vadd.s32 %v1465, %v1463
    %v1467 = vand.u32 %v1308, 65535
    %v1468 = vshra.s32 %v1308, 16
    %v1469 = vcvt.s32.f32 %v1467
    %v1470 = vcvt.s32.f32 %v1468
    %1471 = vmin.xlane.f32.xlu0 %v1470
    %v1472 = vpop.xlane.xlu0 %1471
    %vm1473 = vcmp.eq.f32.partialorder %v1470, %v1472
    %v1474 = vsel %vm1473, %v1469, inf
    %1475 = vmin.xlane.f32.xlu0 %v1474
    %v1476 = vpop.xlane.xlu0 %1475
    %v1477 = vcvt.f32.s32 %v1476
    %v1478 = vcvt.f32.s32 %v1472
    %v1479 = vshll.u32 %v1478, 16
    %v1480 = vadd.s32 %v1479, %v1477
    %v1481 = vand.u32 %v1309, 65535
    %v1482 = vshra.s32 %v1309, 16
    %v1483 = vcvt.s32.f32 %v1481
    %v1484 = vcvt.s32.f32 %v1482
    %1485 = vmin.xlane.f32.xlu0 %v1484
    %v1486 = vpop.xlane.xlu0 %1485
    %vm1487 = vcmp.eq.f32.partialorder %v1484, %v1486
    %v1488 = vsel %vm1487, %v1483, inf
    %1489 = vmin.xlane.f32.xlu0 %v1488
    %v1490 = vpop.xlane.xlu0 %1489
    %v1491 = vcvt.f32.s32 %v1490
    %v1492 = vcvt.f32.s32 %v1486
    %v1493 = vshll.u32 %v1492, 16
    %v1494 = vadd.s32 %v1493, %v1491
    %v1495 = vand.u32 %v1310, 65535
    %v1496 = vshra.s32 %v1310, 16
    %v1497 = vcvt.s32.f32 %v1495
    %v1498 = vcvt.s32.f32 %v1496
    %1499 = vmin.xlane.f32.xlu0 %v1498
    %v1500 = vpop.xlane.xlu0 %1499
    %vm1501 = vcmp.eq.f32.partialorder %v1498, %v1500
    %v1502 = vsel %vm1501, %v1497, inf
    %1503 = vmin.xlane.f32.xlu0 %v1502
    %v1504 = vpop.xlane.xlu0 %1503
    %v1505 = vcvt.f32.s32 %v1504
    %v1506 = vcvt.f32.s32 %v1500
    %v1507 = vshll.u32 %v1506, 16
    %v1508 = vadd.s32 %v1507, %v1505
    %v1509 = vand.u32 %v1311, 65535
    %v1510 = vshra.s32 %v1311, 16
    %v1511 = vcvt.s32.f32 %v1509
    %v1512 = vcvt.s32.f32 %v1510
    %1513 = vmin.xlane.f32.xlu0 %v1512
    %v1514 = vpop.xlane.xlu0 %1513
    %vm1515 = vcmp.eq.f32.partialorder %v1512, %v1514
    %v1516 = vsel %vm1515, %v1511, inf
    %1517 = vmin.xlane.f32.xlu0 %v1516
    %v1518 = vpop.xlane.xlu0 %1517
    %v1519 = vcvt.f32.s32 %v1518
    %v1520 = vcvt.f32.s32 %v1514
    %v1521 = vshll.u32 %v1520, 16
    %v1522 = vadd.s32 %v1521, %v1519
    %v1523 = vand.u32 %v1312, 65535
    %v1524 = vshra.s32 %v1312, 16
    %v1525 = vcvt.s32.f32 %v1523
    %v1526 = vcvt.s32.f32 %v1524
    %1527 = vmin.xlane.f32.xlu0 %v1526
    %v1528 = vpop.xlane.xlu0 %1527
    %vm1529 = vcmp.eq.f32.partialorder %v1526, %v1528
    %v1530 = vsel %vm1529, %v1525, inf
    %1531 = vmin.xlane.f32.xlu0 %v1530
    %v1532 = vpop.xlane.xlu0 %1531
    %v1533 = vcvt.f32.s32 %v1532
    %v1534 = vcvt.f32.s32 %v1528
    %v1535 = vshll.u32 %v1534, 16
    %v1536 = vadd.s32 %v1535, %v1533
    %v1537 = vlaneseq
    %v1538 = vshrl.u32 %v1537, 7
    %v1539 = vsub.s32 %v487, %v1538
    %v1540 = vrot.slane %v1326, %v1539
    %v1541 = vlaneseq
    %v1542 = vshrl.u32 %v1541, 7
    %v1543 = vsub.s32 %v748, %v1542
    %v1544 = vrot.slane %v1340, %v1543
    %v1545 = vsel %vm753, %v1544, %v1540
    %v1546 = vlaneseq
    %v1547 = vshrl.u32 %v1546, 7
    %v1548 = vsub.s32 %v755, %v1547
    %v1549 = vrot.slane %v1354, %v1548
    %v1550 = vsel %vm760, %v1549, %v1545
    %v1551 = vlaneseq
    %v1552 = vshrl.u32 %v1551, 7
    %v1553 = vsub.s32 %v762, %v1552
    %v1554 = vrot.slane %v1368, %v1553
    %v1555 = vsel %vm767, %v1554, %v1550
    %v1556 = vlaneseq
    %v1557 = vshrl.u32 %v1556, 7
    %v1558 = vsub.s32 %v769, %v1557
    %v1559 = vrot.slane %v1382, %v1558
    %v1560 = vsel %vm774, %v1559, %v1555
    %v1561 = vlaneseq
    %v1562 = vshrl.u32 %v1561, 7
    %v1563 = vsub.s32 %v776, %v1562
    %v1564 = vrot.slane %v1396, %v1563
    %v1565 = vsel %vm781, %v1564, %v1560
    %v1566 = vlaneseq
    %v1567 = vshrl.u32 %v1566, 7
    %v1568 = vsub.s32 %v783, %v1567
    %v1569 = vrot.slane %v1410, %v1568
    %v1570 = vsel %vm788, %v1569, %v1565
    %v1571 = vlaneseq
    %v1572 = vshrl.u32 %v1571, 7
    %v1573 = vsub.s32 %v790, %v1572
    %v1574 = vrot.slane %v1424, %v1573
    %v1575 = vsel %vm795, %v1574, %v1570
    %v1576 = vlaneseq
    %v1577 = vshrl.u32 %v1576, 7
    %v1578 = vsub.s32 %v797, %v1577
    %v1579 = vrot.slane %v1438, %v1578
    %v1580 = vsel %vm802, %v1579, %v1575
    %v1581 = vlaneseq
    %v1582 = vshrl.u32 %v1581, 7
    %v1583 = vsub.s32 %v804, %v1582
    %v1584 = vrot.slane %v1452, %v1583
    %v1585 = vsel %vm809, %v1584, %v1580
    %v1586 = vlaneseq
    %v1587 = vshrl.u32 %v1586, 7
    %v1588 = vsub.s32 %v811, %v1587
    %v1589 = vrot.slane %v1466, %v1588
    %v1590 = vsel %vm816, %v1589, %v1585
    %v1591 = vlaneseq
    %v1592 = vshrl.u32 %v1591, 7
    %v1593 = vsub.s32 %v818, %v1592
    %v1594 = vrot.slane %v1480, %v1593
    %v1595 = vsel %vm823, %v1594, %v1590
    %v1596 = vlaneseq
    %v1597 = vshrl.u32 %v1596, 7
    %v1598 = vsub.s32 %v825, %v1597
    %v1599 = vrot.slane %v1494, %v1598
    %v1600 = vsel %vm830, %v1599, %v1595
    %v1601 = vlaneseq
    %v1602 = vshrl.u32 %v1601, 7
    %v1603 = vsub.s32 %v832, %v1602
    %v1604 = vrot.slane %v1508, %v1603
    %v1605 = vsel %vm837, %v1604, %v1600
    %v1606 = vlaneseq
    %v1607 = vshrl.u32 %v1606, 7
    %v1608 = vsub.s32 %v839, %v1607
    %v1609 = vrot.slane %v1522, %v1608
    %v1610 = vsel %vm844, %v1609, %v1605
    %v1611 = vlaneseq
    %v1612 = vshrl.u32 %v1611, 7
    %v1613 = vsub.s32 %v846, %v1612
    %v1614 = vrot.slane %v1536, %v1613
    %v1615 = vsel %vm851, %v1614, %v1610
    %1616 = vst [vmem:[#allocation5 + $0x1] sm:$0x1] %v1615
    %vm1617 = vcmp.eq.s32.totalorder %v487, %v1326
    %vm1618 = vcmp.eq.s32.totalorder %v487, %v1340
    %vm1619 = vcmp.eq.s32.totalorder %v487, %v1354
    %vm1620 = vcmp.eq.s32.totalorder %v487, %v1368
    %vm1621 = vcmp.eq.s32.totalorder %v487, %v1382
    %vm1622 = vcmp.eq.s32.totalorder %v487, %v1396
    %vm1623 = vcmp.eq.s32.totalorder %v487, %v1410
    %vm1624 = vcmp.eq.s32.totalorder %v487, %v1424
    %vm1625 = vcmp.eq.s32.totalorder %v487, %v1438
    %vm1626 = vcmp.eq.s32.totalorder %v487, %v1452
    %vm1627 = vcmp.eq.s32.totalorder %v487, %v1466
    %vm1628 = vcmp.eq.s32.totalorder %v487, %v1480
    %vm1629 = vcmp.eq.s32.totalorder %v487, %v1494
    %vm1630 = vcmp.eq.s32.totalorder %v487, %v1508
    %vm1631 = vcmp.eq.s32.totalorder %v487, %v1522
    %vm1632 = vcmp.eq.s32.totalorder %v487, %v1536
    %v1633 = vsel %vm1617, 1, 0
    %v1634 = vsel %vm1618, 1, 0
    %v1635 = vsel %vm1619, 1, 0
    %v1636 = vsel %vm1620, 1, 0
    %v1637 = vsel %vm1621, 1, 0
    %v1638 = vsel %vm1622, 1, 0
    %v1639 = vsel %vm1623, 1, 0
    %v1640 = vsel %vm1624, 1, 0
    %v1641 = vsel %vm1625, 1, 0
    %v1642 = vsel %vm1626, 1, 0
    %v1643 = vsel %vm1627, 1, 0
    %v1644 = vsel %vm1628, 1, 0
    %v1645 = vsel %vm1629, 1, 0
    %v1646 = vsel %vm1630, 1, 0
    %v1647 = vsel %vm1631, 1, 0
    %v1648 = vsel %vm1632, 1, 0
    %v1649 = vcvt.s32.f32 %v1633
    %v1650 = vcvt.s32.f32 %v1634
    %v1651 = vcvt.s32.f32 %v1635
    %v1652 = vcvt.s32.f32 %v1636
    %v1653 = vcvt.s32.f32 %v1637
    %v1654 = vcvt.s32.f32 %v1638
    %v1655 = vcvt.s32.f32 %v1639
    %v1656 = vcvt.s32.f32 %v1640
    %v1657 = vcvt.s32.f32 %v1641
    %v1658 = vcvt.s32.f32 %v1642
    %v1659 = vcvt.s32.f32 %v1643
    %v1660 = vcvt.s32.f32 %v1644
    %v1661 = vcvt.s32.f32 %v1645
    %v1662 = vcvt.s32.f32 %v1646
    %v1663 = vcvt.s32.f32 %v1647
    %v1664 = vcvt.s32.f32 %v1648
    %1665 = vmatprep.subr.mxu0 0.0
    %1666 = vmatpush1.xpose.msra.mxu0 %v1079
    %1667 = vmatprep.subr.mxu0 0.0
    %1668 = vmatpush1.xpose.msra.mxu0 %v1078
    %1669 = vmatprep.subr.mxu0 0.0
    %1670 = vmatpush1.xpose.msra.mxu0 %v1077
    %1671 = vmatprep.subr.mxu0 0.0
    %1672 = vmatpush1.xpose.msra.mxu0 %v1076
    %1673 = vmatprep.subr.mxu0 0.0
    %1674 = vmatpush1.xpose.msra.mxu0 %v1075
    %1675 = vmatprep.subr.mxu0 0.0
    %1676 = vmatpush1.xpose.msra.mxu0 %v1074
    %1677 = vmatprep.subr.mxu0 0.0
    %1678 = vmatpush1.xpose.msra.mxu0 %v1073
    %1679 = vmatprep.subr.mxu0 0.0
    %1680 = vmatpush1.xpose.msra.mxu0 %v1072
    %1681 = vmatprep.subr.mxu0 0.0
    %1682 = vmatpush1.xpose.msra.mxu0 %v1071
    %1683 = vmatprep.subr.mxu0 0.0
    %1684 = vmatpush1.xpose.msra.mxu0 %v1070
    %1685 = vmatprep.subr.mxu0 0.0
    %1686 = vmatpush1.xpose.msra.mxu0 %v1069
    %1687 = vmatprep.subr.mxu0 0.0
    %1688 = vmatpush1.xpose.msra.mxu0 %v1068
    %1689 = vmatprep.subr.mxu0 0.0
    %1690 = vmatpush1.xpose.msra.mxu0 %v1067
    %1691 = vmatprep.subr.mxu0 0.0
    %1692 = vmatpush1.xpose.msra.mxu0 %v1066
    %1693 = vmatprep.subr.mxu0 0.0
    %1694 = vmatpush1.xpose.msra.mxu0 %v1065
    %1695 = vmatprep.subr.mxu0 0.0
    %1696 = vmatpush1.xpose.msra.mxu0 %v1064
    %1697 = vmatprep.subr.mxu0 0.0
    %1698 = vmatpush2.xpose.msra.mxu0 0.0
    %1699 = vmatprep.subr.mxu0 0.0
    %1700 = vmatpush2.xpose.msra.mxu0 0.0
    %1701 = vmatprep.subr.mxu0 0.0
    %1702 = vmatpush2.xpose.msra.mxu0 0.0
    %1703 = vmatprep.subr.mxu0 0.0
    %1704 = vmatpush2.xpose.msra.mxu0 0.0
    %1705 = vmatprep.subr.mxu0 0.0
    %1706 = vmatpush2.xpose.msra.mxu0 0.0
    %1707 = vmatprep.subr.mxu0 0.0
    %1708 = vmatpush2.xpose.msra.mxu0 0.0
    %1709 = vmatprep.subr.mxu0 0.0
    %1710 = vmatpush2.xpose.msra.mxu0 0.0
    %1711 = vmatprep.subr.mxu0 0.0
    %1712 = vmatpush2.xpose.msra.mxu0 0.0
    %1713 = vmatprep.subr.mxu0 0.0
    %1714 = vmatpush2.xpose.msra.mxu0 0.0
    %1715 = vmatprep.subr.mxu0 0.0
    %1716 = vmatpush2.xpose.msra.mxu0 0.0
    %1717 = vmatprep.subr.mxu0 0.0
    %1718 = vmatpush2.xpose.msra.mxu0 0.0
    %1719 = vmatprep.subr.mxu0 0.0
    %1720 = vmatpush2.xpose.msra.mxu0 0.0
    %1721 = vmatprep.subr.mxu0 0.0
    %1722 = vmatpush2.xpose.msra.mxu0 0.0
    %1723 = vmatprep.subr.mxu0 0.0
    %1724 = vmatpush2.xpose.msra.mxu0 0.0
    %1725 = vmatprep.subr.mxu0 0.0
    %1726 = vmatpush2.xpose.msra.mxu0 0.0
    %1727 = vmatprep.subr.mxu0 0.0
    %1728 = vmatpush2.xpose.msra.mxu0 0.0
    %1729 = vmatprep.mubr.f32.mxu0 0.0
    %1730 = vmatmul.mubr.f32.gmra.mxu0 %v1649
    %v1731 = vpop.f32.mrf.mxu0
    %v1732 = vadd.f32 0.0, %v1731
    %v1733 = vpop.f32.mrf.mxu0
    %1734 = vmatprep.mubr.f32.mxu0 0.0
    %1735 = vmatmul.mubr.f32.gmra.mxu0 %v1650
    %v1736 = vpop.f32.mrf.mxu0
    %v1737 = vadd.f32 0.0, %v1736
    %v1738 = vpop.f32.mrf.mxu0
    %1739 = vmatprep.mubr.f32.mxu0 0.0
    %1740 = vmatmul.mubr.f32.gmra.mxu0 %v1651
    %v1741 = vpop.f32.mrf.mxu0
    %v1742 = vadd.f32 0.0, %v1741
    %v1743 = vpop.f32.mrf.mxu0
    %1744 = vmatprep.mubr.f32.mxu0 0.0
    %1745 = vmatmul.mubr.f32.gmra.mxu0 %v1652
    %v1746 = vpop.f32.mrf.mxu0
    %v1747 = vadd.f32 0.0, %v1746
    %v1748 = vpop.f32.mrf.mxu0
    %1749 = vmatprep.mubr.f32.mxu0 0.0
    %1750 = vmatmul.mubr.f32.gmra.mxu0 %v1653
    %v1751 = vpop.f32.mrf.mxu0
    %v1752 = vadd.f32 0.0, %v1751
    %v1753 = vpop.f32.mrf.mxu0
    %1754 = vmatprep.mubr.f32.mxu0 0.0
    %1755 = vmatmul.mubr.f32.gmra.mxu0 %v1654
    %v1756 = vpop.f32.mrf.mxu0
    %v1757 = vadd.f32 0.0, %v1756
    %v1758 = vpop.f32.mrf.mxu0
    %1759 = vmatprep.mubr.f32.mxu0 0.0
    %1760 = vmatmul.mubr.f32.gmra.mxu0 %v1655
    %v1761 = vpop.f32.mrf.mxu0
    %v1762 = vadd.f32 0.0, %v1761
    %v1763 = vpop.f32.mrf.mxu0
    %1764 = vmatprep.mubr.f32.mxu0 0.0
    %1765 = vmatmul.mubr.f32.gmra.mxu0 %v1656
    %v1766 = vpop.f32.mrf.mxu0
    %v1767 = vadd.f32 0.0, %v1766
    %v1768 = vpop.f32.mrf.mxu0
    %1769 = vmatprep.mubr.f32.mxu0 0.0
    %1770 = vmatmul.mubr.f32.gmra.mxu0 %v1657
    %v1771 = vpop.f32.mrf.mxu0
    %v1772 = vadd.f32 0.0, %v1771
    %v1773 = vpop.f32.mrf.mxu0
    %1774 = vmatprep.mubr.f32.mxu0 0.0
    %1775 = vmatmul.mubr.f32.gmra.mxu0 %v1658
    %v1776 = vpop.f32.mrf.mxu0
    %v1777 = vadd.f32 0.0, %v1776
    %v1778 = vpop.f32.mrf.mxu0
    %1779 = vmatprep.mubr.f32.mxu0 0.0
    %1780 = vmatmul.mubr.f32.gmra.mxu0 %v1659
    %v1781 = vpop.f32.mrf.mxu0
    %v1782 = vadd.f32 0.0, %v1781
    %v1783 = vpop.f32.mrf.mxu0
    %1784 = vmatprep.mubr.f32.mxu0 0.0
    %1785 = vmatmul.mubr.f32.gmra.mxu0 %v1660
    %v1786 = vpop.f32.mrf.mxu0
    %v1787 = vadd.f32 0.0, %v1786
    %v1788 = vpop.f32.mrf.mxu0
    %1789 = vmatprep.mubr.f32.mxu0 0.0
    %1790 = vmatmul.mubr.f32.gmra.mxu0 %v1661
    %v1791 = vpop.f32.mrf.mxu0
    %v1792 = vadd.f32 0.0, %v1791
    %v1793 = vpop.f32.mrf.mxu0
    %1794 = vmatprep.mubr.f32.mxu0 0.0
    %1795 = vmatmul.mubr.f32.gmra.mxu0 %v1662
    %v1796 = vpop.f32.mrf.mxu0
    %v1797 = vadd.f32 0.0, %v1796
    %v1798 = vpop.f32.mrf.mxu0
    %1799 = vmatprep.mubr.f32.mxu0 0.0
    %1800 = vmatmul.mubr.f32.gmra.mxu0 %v1663
    %v1801 = vpop.f32.mrf.mxu0
    %v1802 = vadd.f32 0.0, %v1801
    %v1803 = vpop.f32.mrf.mxu0
    %1804 = vmatprep.mubr.f32.mxu0 0.0
    %1805 = vmatmul.mubr.f32.gmra.mxu0 %v1664
    %v1806 = vpop.f32.mrf.mxu0
    %v1807 = vadd.f32 0.0, %v1806
    %v1808 = vpop.f32.mrf.mxu0
    %1809 = vdwg.mxu0
    %v1810 = vsub.f32 %v1047, %v1732
    %v1811 = vsub.f32 %v1048, %v1737
    %v1812 = vsub.f32 %v1049, %v1742
    %v1813 = vsub.f32 %v1050, %v1747
    %v1814 = vsub.f32 %v1051, %v1752
    %v1815 = vsub.f32 %v1052, %v1757
    %v1816 = vsub.f32 %v1053, %v1762
    %v1817 = vsub.f32 %v1054, %v1767
    %v1818 = vsub.f32 %v1055, %v1772
    %v1819 = vsub.f32 %v1056, %v1777
    %v1820 = vsub.f32 %v1057, %v1782
    %v1821 = vsub.f32 %v1058, %v1787
    %v1822 = vsub.f32 %v1059, %v1792
    %v1823 = vsub.f32 %v1060, %v1797
    %v1824 = vsub.f32 %v1061, %v1802
    %v1825 = vsub.f32 %v1062, %v1807
    %s1826 = scalar_lea.vmem [#allocation2], 256
    %v1827 = vld [vmem:[%s1826] sm:$0xff]
    %v1828 = vld [vmem:[%s1826 + $0x8] sm:$0xff]
    %v1829 = vld [vmem:[%s1826 + $0x10] sm:$0xff]
    %v1830 = vld [vmem:[%s1826 + $0x18] sm:$0xff]
    %v1831 = vld [vmem:[%s1826 + $0x20] sm:$0xff]
    %v1832 = vld [vmem:[%s1826 + $0x28] sm:$0xff]
    %v1833 = vld [vmem:[%s1826 + $0x30] sm:$0xff]
    %v1834 = vld [vmem:[%s1826 + $0x38] sm:$0xff]
    %v1835 = vld [vmem:[%s1826 + $0x40] sm:$0xff]
    %v1836 = vld [vmem:[%s1826 + $0x48] sm:$0xff]
    %v1837 = vld [vmem:[%s1826 + $0x50] sm:$0xff]
    %v1838 = vld [vmem:[%s1826 + $0x58] sm:$0xff]
    %v1839 = vld [vmem:[%s1826 + $0x60] sm:$0xff]
    %v1840 = vld [vmem:[%s1826 + $0x68] sm:$0xff]
    %v1841 = vld [vmem:[%s1826 + $0x70] sm:$0xff]
    %v1842 = vld [vmem:[%s1826 + $0x78] sm:$0xff]
    %1843 = vmatprep.subr.mxu0 0.0
    %1844 = vmatpush1.msra.mxu0 %v1842
    %1845 = vmatprep.subr.mxu0 0.0
    %1846 = vmatpush1.msra.mxu0 %v1841
    %1847 = vmatprep.subr.mxu0 0.0
    %1848 = vmatpush1.msra.mxu0 %v1840
    %1849 = vmatprep.subr.mxu0 0.0
    %1850 = vmatpush1.msra.mxu0 %v1839
    %1851 = vmatprep.subr.mxu0 0.0
    %1852 = vmatpush1.msra.mxu0 %v1838
    %1853 = vmatprep.subr.mxu0 0.0
    %1854 = vmatpush1.msra.mxu0 %v1837
    %1855 = vmatprep.subr.mxu0 0.0
    %1856 = vmatpush1.msra.mxu0 %v1836
    %1857 = vmatprep.subr.mxu0 0.0
    %1858 = vmatpush1.msra.mxu0 %v1835
    %1859 = vmatprep.subr.mxu0 0.0
    %1860 = vmatpush1.msra.mxu0 %v1834
    %1861 = vmatprep.subr.mxu0 0.0
    %1862 = vmatpush1.msra.mxu0 %v1833
    %1863 = vmatprep.subr.mxu0 0.0
    %1864 = vmatpush1.msra.mxu0 %v1832
    %1865 = vmatprep.subr.mxu0 0.0
    %1866 = vmatpush1.msra.mxu0 %v1831
    %1867 = vmatprep.subr.mxu0 0.0
    %1868 = vmatpush1.msra.mxu0 %v1830
    %1869 = vmatprep.subr.mxu0 0.0
    %1870 = vmatpush1.msra.mxu0 %v1829
    %1871 = vmatprep.subr.mxu0 0.0
    %1872 = vmatpush1.msra.mxu0 %v1828
    %1873 = vmatprep.subr.mxu0 0.0
    %1874 = vmatpush1.msra.mxu0 %v1827
    %1875 = vmatprep.subr.mxu0 0.0
    %1876 = vmatpush2.msra.mxu0 0.0
    %1877 = vmatprep.subr.mxu0 0.0
    %1878 = vmatpush2.msra.mxu0 0.0
    %1879 = vmatprep.subr.mxu0 0.0
    %1880 = vmatpush2.msra.mxu0 0.0
    %1881 = vmatprep.subr.mxu0 0.0
    %1882 = vmatpush2.msra.mxu0 0.0
    %1883 = vmatprep.subr.mxu0 0.0
    %1884 = vmatpush2.msra.mxu0 0.0
    %1885 = vmatprep.subr.mxu0 0.0
    %1886 = vmatpush2.msra.mxu0 0.0
    %1887 = vmatprep.subr.mxu0 0.0
    %1888 = vmatpush2.msra.mxu0 0.0
    %1889 = vmatprep.subr.mxu0 0.0
    %1890 = vmatpush2.msra.mxu0 0.0
    %1891 = vmatprep.subr.mxu0 0.0
    %1892 = vmatpush2.msra.mxu0 0.0
    %1893 = vmatprep.subr.mxu0 0.0
    %1894 = vmatpush2.msra.mxu0 0.0
    %1895 = vmatprep.subr.mxu0 0.0
    %1896 = vmatpush2.msra.mxu0 0.0
    %1897 = vmatprep.subr.mxu0 0.0
    %1898 = vmatpush2.msra.mxu0 0.0
    %1899 = vmatprep.subr.mxu0 0.0
    %1900 = vmatpush2.msra.mxu0 0.0
    %1901 = vmatprep.subr.mxu0 0.0
    %1902 = vmatpush2.msra.mxu0 0.0
    %1903 = vmatprep.subr.mxu0 0.0
    %1904 = vmatpush2.msra.mxu0 0.0
    %1905 = vmatprep.subr.mxu0 0.0
    %1906 = vmatpush2.msra.mxu0 0.0
    %1907 = vmatprep.mubr.f32.mxu0 0.0
    %1908 = vmatmul.mubr.f32.gmra.mxu0 %v1810
    %v1909 = vpop.f32.mrf.mxu0
    %v1910 = vadd.f32 0.0, %v1909
    %v1911 = vpop.f32.mrf.mxu0
    %1912 = vmatprep.mubr.f32.mxu0 0.0
    %1913 = vmatmul.mubr.f32.gmra.mxu0 %v1811
    %v1914 = vpop.f32.mrf.mxu0
    %v1915 = vadd.f32 0.0, %v1914
    %v1916 = vpop.f32.mrf.mxu0
    %1917 = vmatprep.mubr.f32.mxu0 0.0
    %1918 = vmatmul.mubr.f32.gmra.mxu0 %v1812
    %v1919 = vpop.f32.mrf.mxu0
    %v1920 = vadd.f32 0.0, %v1919
    %v1921 = vpop.f32.mrf.mxu0
    %1922 = vmatprep.mubr.f32.mxu0 0.0
    %1923 = vmatmul.mubr.f32.gmra.mxu0 %v1813
    %v1924 = vpop.f32.mrf.mxu0
    %v1925 = vadd.f32 0.0, %v1924
    %v1926 = vpop.f32.mrf.mxu0
    %1927 = vmatprep.mubr.f32.mxu0 0.0
    %1928 = vmatmul.mubr.f32.gmra.mxu0 %v1814
    %v1929 = vpop.f32.mrf.mxu0
    %v1930 = vadd.f32 0.0, %v1929
    %v1931 = vpop.f32.mrf.mxu0
    %1932 = vmatprep.mubr.f32.mxu0 0.0
    %1933 = vmatmul.mubr.f32.gmra.mxu0 %v1815
    %v1934 = vpop.f32.mrf.mxu0
    %v1935 = vadd.f32 0.0, %v1934
    %v1936 = vpop.f32.mrf.mxu0
    %1937 = vmatprep.mubr.f32.mxu0 0.0
    %1938 = vmatmul.mubr.f32.gmra.mxu0 %v1816
    %v1939 = vpop.f32.mrf.mxu0
    %v1940 = vadd.f32 0.0, %v1939
    %v1941 = vpop.f32.mrf.mxu0
    %1942 = vmatprep.mubr.f32.mxu0 0.0
    %1943 = vmatmul.mubr.f32.gmra.mxu0 %v1817
    %v1944 = vpop.f32.mrf.mxu0
    %v1945 = vadd.f32 0.0, %v1944
    %v1946 = vpop.f32.mrf.mxu0
    %1947 = vmatprep.mubr.f32.mxu0 0.0
    %1948 = vmatmul.mubr.f32.gmra.mxu0 %v1818
    %v1949 = vpop.f32.mrf.mxu0
    %v1950 = vadd.f32 0.0, %v1949
    %v1951 = vpop.f32.mrf.mxu0
    %1952 = vmatprep.mubr.f32.mxu0 0.0
    %1953 = vmatmul.mubr.f32.gmra.mxu0 %v1819
    %v1954 = vpop.f32.mrf.mxu0
    %v1955 = vadd.f32 0.0, %v1954
    %v1956 = vpop.f32.mrf.mxu0
    %1957 = vmatprep.mubr.f32.mxu0 0.0
    %1958 = vmatmul.mubr.f32.gmra.mxu0 %v1820
    %v1959 = vpop.f32.mrf.mxu0
    %v1960 = vadd.f32 0.0, %v1959
    %v1961 = vpop.f32.mrf.mxu0
    %1962 = vmatprep.mubr.f32.mxu0 0.0
    %1963 = vmatmul.mubr.f32.gmra.mxu0 %v1821
    %v1964 = vpop.f32.mrf.mxu0
    %v1965 = vadd.f32 0.0, %v1964
    %v1966 = vpop.f32.mrf.mxu0
    %1967 = vmatprep.mubr.f32.mxu0 0.0
    %1968 = vmatmul.mubr.f32.gmra.mxu0 %v1822
    %v1969 = vpop.f32.mrf.mxu0
    %v1970 = vadd.f32 0.0, %v1969
    %v1971 = vpop.f32.mrf.mxu0
    %1972 = vmatprep.mubr.f32.mxu0 0.0
    %1973 = vmatmul.mubr.f32.gmra.mxu0 %v1823
    %v1974 = vpop.f32.mrf.mxu0
    %v1975 = vadd.f32 0.0, %v1974
    %v1976 = vpop.f32.mrf.mxu0
    %1977 = vmatprep.mubr.f32.mxu0 0.0
    %1978 = vmatmul.mubr.f32.gmra.mxu0 %v1824
    %v1979 = vpop.f32.mrf.mxu0
    %v1980 = vadd.f32 0.0, %v1979
    %v1981 = vpop.f32.mrf.mxu0
    %1982 = vmatprep.mubr.f32.mxu0 0.0
    %1983 = vmatmul.mubr.f32.gmra.mxu0 %v1825
    %v1984 = vpop.f32.mrf.mxu0
    %v1985 = vadd.f32 0.0, %v1984
    %v1986 = vpop.f32.mrf.mxu0
    %1987 = vdwg.mxu0
    %s1988 = scalar_lea.vmem %s4, 2
    %v1989 = vld [vmem:[%s1988] sm:$0x1]
    %v1991 = vlaneseq
    %v1992 = vshrl.u32 %v1991, 7
    %v1993 = vsub.s32 0, %v1992
    %v1994 = vrot.slane %v1989, %v1993
    %v1996 = vsub.f32 %v1994, %v1910
    %v1997 = vsub.f32 %v1994, %v1915
    %v1998 = vsub.f32 %v1994, %v1920
    %v1999 = vsub.f32 %v1994, %v1925
    %v2000 = vsub.f32 %v1994, %v1930
    %v2001 = vsub.f32 %v1994, %v1935
    %v2002 = vsub.f32 %v1994, %v1940
    %v2003 = vsub.f32 %v1994, %v1945
    %v2004 = vsub.f32 %v1994, %v1950
    %v2005 = vsub.f32 %v1994, %v1955
    %v2006 = vsub.f32 %v1994, %v1960
    %v2007 = vsub.f32 %v1994, %v1965
    %v2008 = vsub.f32 %v1994, %v1970
    %v2009 = vsub.f32 %v1994, %v1975
    %v2010 = vsub.f32 %v1994, %v1980
    %v2011 = vsub.f32 %v1994, %v1985
    %2012 = vmin.xlane.f32.xlu0 %v1996
    %v2013 = vpop.xlane.xlu0 %2012
    %2014 = vmin.xlane.f32.xlu0 %v1997
    %v2015 = vpop.xlane.xlu0 %2014
    %2016 = vmin.xlane.f32.xlu0 %v1998
    %v2017 = vpop.xlane.xlu0 %2016
    %2018 = vmin.xlane.f32.xlu0 %v1999
    %v2019 = vpop.xlane.xlu0 %2018
    %2020 = vmin.xlane.f32.xlu0 %v2000
    %v2021 = vpop.xlane.xlu0 %2020
    %2022 = vmin.xlane.f32.xlu0 %v2001
    %v2023 = vpop.xlane.xlu0 %2022
    %2024 = vmin.xlane.f32.xlu0 %v2002
    %v2025 = vpop.xlane.xlu0 %2024
    %2026 = vmin.xlane.f32.xlu0 %v2003
    %v2027 = vpop.xlane.xlu0 %2026
    %2028 = vmin.xlane.f32.xlu0 %v2004
    %v2029 = vpop.xlane.xlu0 %2028
    %2030 = vmin.xlane.f32.xlu0 %v2005
    %v2031 = vpop.xlane.xlu0 %2030
    %2032 = vmin.xlane.f32.xlu0 %v2006
    %v2033 = vpop.xlane.xlu0 %2032
    %2034 = vmin.xlane.f32.xlu0 %v2007
    %v2035 = vpop.xlane.xlu0 %2034
    %2036 = vmin.xlane.f32.xlu0 %v2008
    %v2037 = vpop.xlane.xlu0 %2036
    %2038 = vmin.xlane.f32.xlu0 %v2009
    %v2039 = vpop.xlane.xlu0 %2038
    %2040 = vmin.xlane.f32.xlu0 %v2010
    %v2041 = vpop.xlane.xlu0 %2040
    %2042 = vmin.xlane.f32.xlu0 %v2011
    %v2043 = vpop.xlane.xlu0 %2042
    %vm2044 = vcmp.le.f32.partialorder %v1996, %v2013
    %vm2045 = vcmp.le.f32.partialorder %v1997, %v2015
    %vm2046 = vcmp.le.f32.partialorder %v1998, %v2017
    %vm2047 = vcmp.le.f32.partialorder %v1999, %v2019
    %vm2048 = vcmp.le.f32.partialorder %v2000, %v2021
    %vm2049 = vcmp.le.f32.partialorder %v2001, %v2023
    %vm2050 = vcmp.le.f32.partialorder %v2002, %v2025
    %vm2051 = vcmp.le.f32.partialorder %v2003, %v2027
    %vm2052 = vcmp.le.f32.partialorder %v2004, %v2029
    %vm2053 = vcmp.le.f32.partialorder %v2005, %v2031
    %vm2054 = vcmp.le.f32.partialorder %v2006, %v2033
    %vm2055 = vcmp.le.f32.partialorder %v2007, %v2035
    %vm2056 = vcmp.le.f32.partialorder %v2008, %v2037
    %vm2057 = vcmp.le.f32.partialorder %v2009, %v2039
    %vm2058 = vcmp.le.f32.partialorder %v2010, %v2041
    %vm2059 = vcmp.le.f32.partialorder %v2011, %v2043
    %v2060 = vsel %vm2044, %v487, 128
    %v2061 = vsel %vm2045, %v487, 128
    %v2062 = vsel %vm2046, %v487, 128
    %v2063 = vsel %vm2047, %v487, 128
    %v2064 = vsel %vm2048, %v487, 128
    %v2065 = vsel %vm2049, %v487, 128
    %v2066 = vsel %vm2050, %v487, 128
    %v2067 = vsel %vm2051, %v487, 128
    %v2068 = vsel %vm2052, %v487, 128
    %v2069 = vsel %vm2053, %v487, 128
    %v2070 = vsel %vm2054, %v487, 128
    %v2071 = vsel %vm2055, %v487, 128
    %v2072 = vsel %vm2056, %v487, 128
    %v2073 = vsel %vm2057, %v487, 128
    %v2074 = vsel %vm2058, %v487, 128
    %v2075 = vsel %vm2059, %v487, 128
    %v2076 = vand.u32 %v2060, 65535
    %v2077 = vshra.s32 %v2060, 16
    %v2078 = vcvt.s32.f32 %v2076
    %v2079 = vcvt.s32.f32 %v2077
    %2080 = vmin.xlane.f32.xlu0 %v2079
    %v2081 = vpop.xlane.xlu0 %2080
    %vm2082 = vcmp.eq.f32.partialorder %v2079, %v2081
    %v2083 = vsel %vm2082, %v2078, inf
    %2084 = vmin.xlane.f32.xlu0 %v2083
    %v2085 = vpop.xlane.xlu0 %2084
    %v2086 = vcvt.f32.s32 %v2085
    %v2087 = vcvt.f32.s32 %v2081
    %v2088 = vshll.u32 %v2087, 16
    %v2089 = vadd.s32 %v2088, %v2086
    %v2090 = vand.u32 %v2061, 65535
    %v2091 = vshra.s32 %v2061, 16
    %v2092 = vcvt.s32.f32 %v2090
    %v2093 = vcvt.s32.f32 %v2091
    %2094 = vmin.xlane.f32.xlu0 %v2093
    %v2095 = vpop.xlane.xlu0 %2094
    %vm2096 = vcmp.eq.f32.partialorder %v2093, %v2095
    %v2097 = vsel %vm2096, %v2092, inf
    %2098 = vmin.xlane.f32.xlu0 %v2097
    %v2099 = vpop.xlane.xlu0 %2098
    %v2100 = vcvt.f32.s32 %v2099
    %v2101 = vcvt.f32.s32 %v2095
    %v2102 = vshll.u32 %v2101, 16
    %v2103 = vadd.s32 %v2102, %v2100
    %v2104 = vand.u32 %v2062, 65535
    %v2105 = vshra.s32 %v2062, 16
    %v2106 = vcvt.s32.f32 %v2104
    %v2107 = vcvt.s32.f32 %v2105
    %2108 = vmin.xlane.f32.xlu0 %v2107
    %v2109 = vpop.xlane.xlu0 %2108
    %vm2110 = vcmp.eq.f32.partialorder %v2107, %v2109
    %v2111 = vsel %vm2110, %v2106, inf
    %2112 = vmin.xlane.f32.xlu0 %v2111
    %v2113 = vpop.xlane.xlu0 %2112
    %v2114 = vcvt.f32.s32 %v2113
    %v2115 = vcvt.f32.s32 %v2109
    %v2116 = vshll.u32 %v2115, 16
    %v2117 = vadd.s32 %v2116, %v2114
    %v2118 = vand.u32 %v2063, 65535
    %v2119 = vshra.s32 %v2063, 16
    %v2120 = vcvt.s32.f32 %v2118
    %v2121 = vcvt.s32.f32 %v2119
    %2122 = vmin.xlane.f32.xlu0 %v2121
    %v2123 = vpop.xlane.xlu0 %2122
    %vm2124 = vcmp.eq.f32.partialorder %v2121, %v2123
    %v2125 = vsel %vm2124, %v2120, inf
    %2126 = vmin.xlane.f32.xlu0 %v2125
    %v2127 = vpop.xlane.xlu0 %2126
    %v2128 = vcvt.f32.s32 %v2127
    %v2129 = vcvt.f32.s32 %v2123
    %v2130 = vshll.u32 %v2129, 16
    %v2131 = vadd.s32 %v2130, %v2128
    %v2132 = vand.u32 %v2064, 65535
    %v2133 = vshra.s32 %v2064, 16
    %v2134 = vcvt.s32.f32 %v2132
    %v2135 = vcvt.s32.f32 %v2133
    %2136 = vmin.xlane.f32.xlu0 %v2135
    %v2137 = vpop.xlane.xlu0 %2136
    %vm2138 = vcmp.eq.f32.partialorder %v2135, %v2137
    %v2139 = vsel %vm2138, %v2134, inf
    %2140 = vmin.xlane.f32.xlu0 %v2139
    %v2141 = vpop.xlane.xlu0 %2140
    %v2142 = vcvt.f32.s32 %v2141
    %v2143 = vcvt.f32.s32 %v2137
    %v2144 = vshll.u32 %v2143, 16
    %v2145 = vadd.s32 %v2144, %v2142
    %v2146 = vand.u32 %v2065, 65535
    %v2147 = vshra.s32 %v2065, 16
    %v2148 = vcvt.s32.f32 %v2146
    %v2149 = vcvt.s32.f32 %v2147
    %2150 = vmin.xlane.f32.xlu0 %v2149
    %v2151 = vpop.xlane.xlu0 %2150
    %vm2152 = vcmp.eq.f32.partialorder %v2149, %v2151
    %v2153 = vsel %vm2152, %v2148, inf
    %2154 = vmin.xlane.f32.xlu0 %v2153
    %v2155 = vpop.xlane.xlu0 %2154
    %v2156 = vcvt.f32.s32 %v2155
    %v2157 = vcvt.f32.s32 %v2151
    %v2158 = vshll.u32 %v2157, 16
    %v2159 = vadd.s32 %v2158, %v2156
    %v2160 = vand.u32 %v2066, 65535
    %v2161 = vshra.s32 %v2066, 16
    %v2162 = vcvt.s32.f32 %v2160
    %v2163 = vcvt.s32.f32 %v2161
    %2164 = vmin.xlane.f32.xlu0 %v2163
    %v2165 = vpop.xlane.xlu0 %2164
    %vm2166 = vcmp.eq.f32.partialorder %v2163, %v2165
    %v2167 = vsel %vm2166, %v2162, inf
    %2168 = vmin.xlane.f32.xlu0 %v2167
    %v2169 = vpop.xlane.xlu0 %2168
    %v2170 = vcvt.f32.s32 %v2169
    %v2171 = vcvt.f32.s32 %v2165
    %v2172 = vshll.u32 %v2171, 16
    %v2173 = vadd.s32 %v2172, %v2170
    %v2174 = vand.u32 %v2067, 65535
    %v2175 = vshra.s32 %v2067, 16
    %v2176 = vcvt.s32.f32 %v2174
    %v2177 = vcvt.s32.f32 %v2175
    %2178 = vmin.xlane.f32.xlu0 %v2177
    %v2179 = vpop.xlane.xlu0 %2178
    %vm2180 = vcmp.eq.f32.partialorder %v2177, %v2179
    %v2181 = vsel %vm2180, %v2176, inf
    %2182 = vmin.xlane.f32.xlu0 %v2181
    %v2183 = vpop.xlane.xlu0 %2182
    %v2184 = vcvt.f32.s32 %v2183
    %v2185 = vcvt.f32.s32 %v2179
    %v2186 = vshll.u32 %v2185, 16
    %v2187 = vadd.s32 %v2186, %v2184
    %v2188 = vand.u32 %v2068, 65535
    %v2189 = vshra.s32 %v2068, 16
    %v2190 = vcvt.s32.f32 %v2188
    %v2191 = vcvt.s32.f32 %v2189
    %2192 = vmin.xlane.f32.xlu0 %v2191
    %v2193 = vpop.xlane.xlu0 %2192
    %vm2194 = vcmp.eq.f32.partialorder %v2191, %v2193
    %v2195 = vsel %vm2194, %v2190, inf
    %2196 = vmin.xlane.f32.xlu0 %v2195
    %v2197 = vpop.xlane.xlu0 %2196
    %v2198 = vcvt.f32.s32 %v2197
    %v2199 = vcvt.f32.s32 %v2193
    %v2200 = vshll.u32 %v2199, 16
    %v2201 = vadd.s32 %v2200, %v2198
    %v2202 = vand.u32 %v2069, 65535
    %v2203 = vshra.s32 %v2069, 16
    %v2204 = vcvt.s32.f32 %v2202
    %v2205 = vcvt.s32.f32 %v2203
    %2206 = vmin.xlane.f32.xlu0 %v2205
    %v2207 = vpop.xlane.xlu0 %2206
    %vm2208 = vcmp.eq.f32.partialorder %v2205, %v2207
    %v2209 = vsel %vm2208, %v2204, inf
    %2210 = vmin.xlane.f32.xlu0 %v2209
    %v2211 = vpop.xlane.xlu0 %2210
    %v2212 = vcvt.f32.s32 %v2211
    %v2213 = vcvt.f32.s32 %v2207
    %v2214 = vshll.u32 %v2213, 16
    %v2215 = vadd.s32 %v2214, %v2212
    %v2216 = vand.u32 %v2070, 65535
    %v2217 = vshra.s32 %v2070, 16
    %v2218 = vcvt.s32.f32 %v2216
    %v2219 = vcvt.s32.f32 %v2217
    %2220 = vmin.xlane.f32.xlu0 %v2219
    %v2221 = vpop.xlane.xlu0 %2220
    %vm2222 = vcmp.eq.f32.partialorder %v2219, %v2221
    %v2223 = vsel %vm2222, %v2218, inf
    %2224 = vmin.xlane.f32.xlu0 %v2223
    %v2225 = vpop.xlane.xlu0 %2224
    %v2226 = vcvt.f32.s32 %v2225
    %v2227 = vcvt.f32.s32 %v2221
    %v2228 = vshll.u32 %v2227, 16
    %v2229 = vadd.s32 %v2228, %v2226
    %v2230 = vand.u32 %v2071, 65535
    %v2231 = vshra.s32 %v2071, 16
    %v2232 = vcvt.s32.f32 %v2230
    %v2233 = vcvt.s32.f32 %v2231
    %2234 = vmin.xlane.f32.xlu0 %v2233
    %v2235 = vpop.xlane.xlu0 %2234
    %vm2236 = vcmp.eq.f32.partialorder %v2233, %v2235
    %v2237 = vsel %vm2236, %v2232, inf
    %2238 = vmin.xlane.f32.xlu0 %v2237
    %v2239 = vpop.xlane.xlu0 %2238
    %v2240 = vcvt.f32.s32 %v2239
    %v2241 = vcvt.f32.s32 %v2235
    %v2242 = vshll.u32 %v2241, 16
    %v2243 = vadd.s32 %v2242, %v2240
    %v2244 = vand.u32 %v2072, 65535
    %v2245 = vshra.s32 %v2072, 16
    %v2246 = vcvt.s32.f32 %v2244
    %v2247 = vcvt.s32.f32 %v2245
    %2248 = vmin.xlane.f32.xlu0 %v2247
    %v2249 = vpop.xlane.xlu0 %2248
    %vm2250 = vcmp.eq.f32.partialorder %v2247, %v2249
    %v2251 = vsel %vm2250, %v2246, inf
    %2252 = vmin.xlane.f32.xlu0 %v2251
    %v2253 = vpop.xlane.xlu0 %2252
    %v2254 = vcvt.f32.s32 %v2253
    %v2255 = vcvt.f32.s32 %v2249
    %v2256 = vshll.u32 %v2255, 16
    %v2257 = vadd.s32 %v2256, %v2254
    %v2258 = vand.u32 %v2073, 65535
    %v2259 = vshra.s32 %v2073, 16
    %v2260 = vcvt.s32.f32 %v2258
    %v2261 = vcvt.s32.f32 %v2259
    %2262 = vmin.xlane.f32.xlu0 %v2261
    %v2263 = vpop.xlane.xlu0 %2262
    %vm2264 = vcmp.eq.f32.partialorder %v2261, %v2263
    %v2265 = vsel %vm2264, %v2260, inf
    %2266 = vmin.xlane.f32.xlu0 %v2265
    %v2267 = vpop.xlane.xlu0 %2266
    %v2268 = vcvt.f32.s32 %v2267
    %v2269 = vcvt.f32.s32 %v2263
    %v2270 = vshll.u32 %v2269, 16
    %v2271 = vadd.s32 %v2270, %v2268
    %v2272 = vand.u32 %v2074, 65535
    %v2273 = vshra.s32 %v2074, 16
    %v2274 = vcvt.s32.f32 %v2272
    %v2275 = vcvt.s32.f32 %v2273
    %2276 = vmin.xlane.f32.xlu0 %v2275
    %v2277 = vpop.xlane.xlu0 %2276
    %vm2278 = vcmp.eq.f32.partialorder %v2275, %v2277
    %v2279 = vsel %vm2278, %v2274, inf
    %2280 = vmin.xlane.f32.xlu0 %v2279
    %v2281 = vpop.xlane.xlu0 %2280
    %v2282 = vcvt.f32.s32 %v2281
    %v2283 = vcvt.f32.s32 %v2277
    %v2284 = vshll.u32 %v2283, 16
    %v2285 = vadd.s32 %v2284, %v2282
    %v2286 = vand.u32 %v2075, 65535
    %v2287 = vshra.s32 %v2075, 16
    %v2288 = vcvt.s32.f32 %v2286
    %v2289 = vcvt.s32.f32 %v2287
    %2290 = vmin.xlane.f32.xlu0 %v2289
    %v2291 = vpop.xlane.xlu0 %2290
    %vm2292 = vcmp.eq.f32.partialorder %v2289, %v2291
    %v2293 = vsel %vm2292, %v2288, inf
    %2294 = vmin.xlane.f32.xlu0 %v2293
    %v2295 = vpop.xlane.xlu0 %2294
    %v2296 = vcvt.f32.s32 %v2295
    %v2297 = vcvt.f32.s32 %v2291
    %v2298 = vshll.u32 %v2297, 16
    %v2299 = vadd.s32 %v2298, %v2296
    %v2300 = vlaneseq
    %v2301 = vshrl.u32 %v2300, 7
    %v2302 = vsub.s32 %v487, %v2301
    %v2303 = vrot.slane %v2089, %v2302
    %v2304 = vlaneseq
    %v2305 = vshrl.u32 %v2304, 7
    %v2306 = vsub.s32 %v748, %v2305
    %v2307 = vrot.slane %v2103, %v2306
    %v2308 = vsel %vm753, %v2307, %v2303
    %v2309 = vlaneseq
    %v2310 = vshrl.u32 %v2309, 7
    %v2311 = vsub.s32 %v755, %v2310
    %v2312 = vrot.slane %v2117, %v2311
    %v2313 = vsel %vm760, %v2312, %v2308
    %v2314 = vlaneseq
    %v2315 = vshrl.u32 %v2314, 7
    %v2316 = vsub.s32 %v762, %v2315
    %v2317 = vrot.slane %v2131, %v2316
    %v2318 = vsel %vm767, %v2317, %v2313
    %v2319 = vlaneseq
    %v2320 = vshrl.u32 %v2319, 7
    %v2321 = vsub.s32 %v769, %v2320
    %v2322 = vrot.slane %v2145, %v2321
    %v2323 = vsel %vm774, %v2322, %v2318
    %v2324 = vlaneseq
    %v2325 = vshrl.u32 %v2324, 7
    %v2326 = vsub.s32 %v776, %v2325
    %v2327 = vrot.slane %v2159, %v2326
    %v2328 = vsel %vm781, %v2327, %v2323
    %v2329 = vlaneseq
    %v2330 = vshrl.u32 %v2329, 7
    %v2331 = vsub.s32 %v783, %v2330
    %v2332 = vrot.slane %v2173, %v2331
    %v2333 = vsel %vm788, %v2332, %v2328
    %v2334 = vlaneseq
    %v2335 = vshrl.u32 %v2334, 7
    %v2336 = vsub.s32 %v790, %v2335
    %v2337 = vrot.slane %v2187, %v2336
    %v2338 = vsel %vm795, %v2337, %v2333
    %v2339 = vlaneseq
    %v2340 = vshrl.u32 %v2339, 7
    %v2341 = vsub.s32 %v797, %v2340
    %v2342 = vrot.slane %v2201, %v2341
    %v2343 = vsel %vm802, %v2342, %v2338
    %v2344 = vlaneseq
    %v2345 = vshrl.u32 %v2344, 7
    %v2346 = vsub.s32 %v804, %v2345
    %v2347 = vrot.slane %v2215, %v2346
    %v2348 = vsel %vm809, %v2347, %v2343
    %v2349 = vlaneseq
    %v2350 = vshrl.u32 %v2349, 7
    %v2351 = vsub.s32 %v811, %v2350
    %v2352 = vrot.slane %v2229, %v2351
    %v2353 = vsel %vm816, %v2352, %v2348
    %v2354 = vlaneseq
    %v2355 = vshrl.u32 %v2354, 7
    %v2356 = vsub.s32 %v818, %v2355
    %v2357 = vrot.slane %v2243, %v2356
    %v2358 = vsel %vm823, %v2357, %v2353
    %v2359 = vlaneseq
    %v2360 = vshrl.u32 %v2359, 7
    %v2361 = vsub.s32 %v825, %v2360
    %v2362 = vrot.slane %v2257, %v2361
    %v2363 = vsel %vm830, %v2362, %v2358
    %v2364 = vlaneseq
    %v2365 = vshrl.u32 %v2364, 7
    %v2366 = vsub.s32 %v832, %v2365
    %v2367 = vrot.slane %v2271, %v2366
    %v2368 = vsel %vm837, %v2367, %v2363
    %v2369 = vlaneseq
    %v2370 = vshrl.u32 %v2369, 7
    %v2371 = vsub.s32 %v839, %v2370
    %v2372 = vrot.slane %v2285, %v2371
    %v2373 = vsel %vm844, %v2372, %v2368
    %v2374 = vlaneseq
    %v2375 = vshrl.u32 %v2374, 7
    %v2376 = vsub.s32 %v846, %v2375
    %v2377 = vrot.slane %v2299, %v2376
    %v2378 = vsel %vm851, %v2377, %v2373
    %2379 = vst [vmem:[#allocation5 + $0x2] sm:$0x1] %v2378
    %vm2380 = vcmp.eq.s32.totalorder %v487, %v2089
    %vm2381 = vcmp.eq.s32.totalorder %v487, %v2103
    %vm2382 = vcmp.eq.s32.totalorder %v487, %v2117
    %vm2383 = vcmp.eq.s32.totalorder %v487, %v2131
    %vm2384 = vcmp.eq.s32.totalorder %v487, %v2145
    %vm2385 = vcmp.eq.s32.totalorder %v487, %v2159
    %vm2386 = vcmp.eq.s32.totalorder %v487, %v2173
    %vm2387 = vcmp.eq.s32.totalorder %v487, %v2187
    %vm2388 = vcmp.eq.s32.totalorder %v487, %v2201
    %vm2389 = vcmp.eq.s32.totalorder %v487, %v2215
    %vm2390 = vcmp.eq.s32.totalorder %v487, %v2229
    %vm2391 = vcmp.eq.s32.totalorder %v487, %v2243
    %vm2392 = vcmp.eq.s32.totalorder %v487, %v2257
    %vm2393 = vcmp.eq.s32.totalorder %v487, %v2271
    %vm2394 = vcmp.eq.s32.totalorder %v487, %v2285
    %vm2395 = vcmp.eq.s32.totalorder %v487, %v2299
    %v2396 = vsel %vm2380, 1, 0
    %v2397 = vsel %vm2381, 1, 0
    %v2398 = vsel %vm2382, 1, 0
    %v2399 = vsel %vm2383, 1, 0
    %v2400 = vsel %vm2384, 1, 0
    %v2401 = vsel %vm2385, 1, 0
    %v2402 = vsel %vm2386, 1, 0
    %v2403 = vsel %vm2387, 1, 0
    %v2404 = vsel %vm2388, 1, 0
    %v2405 = vsel %vm2389, 1, 0
    %v2406 = vsel %vm2390, 1, 0
    %v2407 = vsel %vm2391, 1, 0
    %v2408 = vsel %vm2392, 1, 0
    %v2409 = vsel %vm2393, 1, 0
    %v2410 = vsel %vm2394, 1, 0
    %v2411 = vsel %vm2395, 1, 0
    %v2412 = vcvt.s32.f32 %v2396
    %v2413 = vcvt.s32.f32 %v2397
    %v2414 = vcvt.s32.f32 %v2398
    %v2415 = vcvt.s32.f32 %v2399
    %v2416 = vcvt.s32.f32 %v2400
    %v2417 = vcvt.s32.f32 %v2401
    %v2418 = vcvt.s32.f32 %v2402
    %v2419 = vcvt.s32.f32 %v2403
    %v2420 = vcvt.s32.f32 %v2404
    %v2421 = vcvt.s32.f32 %v2405
    %v2422 = vcvt.s32.f32 %v2406
    %v2423 = vcvt.s32.f32 %v2407
    %v2424 = vcvt.s32.f32 %v2408
    %v2425 = vcvt.s32.f32 %v2409
    %v2426 = vcvt.s32.f32 %v2410
    %v2427 = vcvt.s32.f32 %v2411
    %2428 = vmatprep.subr.mxu0 0.0
    %2429 = vmatpush1.xpose.msra.mxu0 %v1842
    %2430 = vmatprep.subr.mxu0 0.0
    %2431 = vmatpush1.xpose.msra.mxu0 %v1841
    %2432 = vmatprep.subr.mxu0 0.0
    %2433 = vmatpush1.xpose.msra.mxu0 %v1840
    %2434 = vmatprep.subr.mxu0 0.0
    %2435 = vmatpush1.xpose.msra.mxu0 %v1839
    %2436 = vmatprep.subr.mxu0 0.0
    %2437 = vmatpush1.xpose.msra.mxu0 %v1838
    %2438 = vmatprep.subr.mxu0 0.0
    %2439 = vmatpush1.xpose.msra.mxu0 %v1837
    %2440 = vmatprep.subr.mxu0 0.0
    %2441 = vmatpush1.xpose.msra.mxu0 %v1836
    %2442 = vmatprep.subr.mxu0 0.0
    %2443 = vmatpush1.xpose.msra.mxu0 %v1835
    %2444 = vmatprep.subr.mxu0 0.0
    %2445 = vmatpush1.xpose.msra.mxu0 %v1834
    %2446 = vmatprep.subr.mxu0 0.0
    %2447 = vmatpush1.xpose.msra.mxu0 %v1833
    %2448 = vmatprep.subr.mxu0 0.0
    %2449 = vmatpush1.xpose.msra.mxu0 %v1832
    %2450 = vmatprep.subr.mxu0 0.0
    %2451 = vmatpush1.xpose.msra.mxu0 %v1831
    %2452 = vmatprep.subr.mxu0 0.0
    %2453 = vmatpush1.xpose.msra.mxu0 %v1830
    %2454 = vmatprep.subr.mxu0 0.0
    %2455 = vmatpush1.xpose.msra.mxu0 %v1829
    %2456 = vmatprep.subr.mxu0 0.0
    %2457 = vmatpush1.xpose.msra.mxu0 %v1828
    %2458 = vmatprep.subr.mxu0 0.0
    %2459 = vmatpush1.xpose.msra.mxu0 %v1827
    %2460 = vmatprep.subr.mxu0 0.0
    %2461 = vmatpush2.xpose.msra.mxu0 0.0
    %2462 = vmatprep.subr.mxu0 0.0
    %2463 = vmatpush2.xpose.msra.mxu0 0.0
    %2464 = vmatprep.subr.mxu0 0.0
    %2465 = vmatpush2.xpose.msra.mxu0 0.0
    %2466 = vmatprep.subr.mxu0 0.0
    %2467 = vmatpush2.xpose.msra.mxu0 0.0
    %2468 = vmatprep.subr.mxu0 0.0
    %2469 = vmatpush2.xpose.msra.mxu0 0.0
    %2470 = vmatprep.subr.mxu0 0.0
    %2471 = vmatpush2.xpose.msra.mxu0 0.0
    %2472 = vmatprep.subr.mxu0 0.0
    %2473 = vmatpush2.xpose.msra.mxu0 0.0
    %2474 = vmatprep.subr.mxu0 0.0
    %2475 = vmatpush2.xpose.msra.mxu0 0.0
    %2476 = vmatprep.subr.mxu0 0.0
    %2477 = vmatpush2.xpose.msra.mxu0 0.0
    %2478 = vmatprep.subr.mxu0 0.0
    %2479 = vmatpush2.xpose.msra.mxu0 0.0
    %2480 = vmatprep.subr.mxu0 0.0
    %2481 = vmatpush2.xpose.msra.mxu0 0.0
    %2482 = vmatprep.subr.mxu0 0.0
    %2483 = vmatpush2.xpose.msra.mxu0 0.0
    %2484 = vmatprep.subr.mxu0 0.0
    %2485 = vmatpush2.xpose.msra.mxu0 0.0
    %2486 = vmatprep.subr.mxu0 0.0
    %2487 = vmatpush2.xpose.msra.mxu0 0.0
    %2488 = vmatprep.subr.mxu0 0.0
    %2489 = vmatpush2.xpose.msra.mxu0 0.0
    %2490 = vmatprep.subr.mxu0 0.0
    %2491 = vmatpush2.xpose.msra.mxu0 0.0
    %2492 = vmatprep.mubr.f32.mxu0 0.0
    %2493 = vmatmul.mubr.f32.gmra.mxu0 %v2412
    %v2494 = vpop.f32.mrf.mxu0
    %v2495 = vadd.f32 0.0, %v2494
    %v2496 = vpop.f32.mrf.mxu0
    %2497 = vmatprep.mubr.f32.mxu0 0.0
    %2498 = vmatmul.mubr.f32.gmra.mxu0 %v2413
    %v2499 = vpop.f32.mrf.mxu0
    %v2500 = vadd.f32 0.0, %v2499
    %v2501 = vpop.f32.mrf.mxu0
    %2502 = vmatprep.mubr.f32.mxu0 0.0
    %2503 = vmatmul.mubr.f32.gmra.mxu0 %v2414
    %v2504 = vpop.f32.mrf.mxu0
    %v2505 = vadd.f32 0.0, %v2504
    %v2506 = vpop.f32.mrf.mxu0
    %2507 = vmatprep.mubr.f32.mxu0 0.0
    %2508 = vmatmul.mubr.f32.gmra.mxu0 %v2415
    %v2509 = vpop.f32.mrf.mxu0
    %v2510 = vadd.f32 0.0, %v2509
    %v2511 = vpop.f32.mrf.mxu0
    %2512 = vmatprep.mubr.f32.mxu0 0.0
    %2513 = vmatmul.mubr.f32.gmra.mxu0 %v2416
    %v2514 = vpop.f32.mrf.mxu0
    %v2515 = vadd.f32 0.0, %v2514
    %v2516 = vpop.f32.mrf.mxu0
    %2517 = vmatprep.mubr.f32.mxu0 0.0
    %2518 = vmatmul.mubr.f32.gmra.mxu0 %v2417
    %v2519 = vpop.f32.mrf.mxu0
    %v2520 = vadd.f32 0.0, %v2519
    %v2521 = vpop.f32.mrf.mxu0
    %2522 = vmatprep.mubr.f32.mxu0 0.0
    %2523 = vmatmul.mubr.f32.gmra.mxu0 %v2418
    %v2524 = vpop.f32.mrf.mxu0
    %v2525 = vadd.f32 0.0, %v2524
    %v2526 = vpop.f32.mrf.mxu0
    %2527 = vmatprep.mubr.f32.mxu0 0.0
    %2528 = vmatmul.mubr.f32.gmra.mxu0 %v2419
    %v2529 = vpop.f32.mrf.mxu0
    %v2530 = vadd.f32 0.0, %v2529
    %v2531 = vpop.f32.mrf.mxu0
    %2532 = vmatprep.mubr.f32.mxu0 0.0
    %2533 = vmatmul.mubr.f32.gmra.mxu0 %v2420
    %v2534 = vpop.f32.mrf.mxu0
    %v2535 = vadd.f32 0.0, %v2534
    %v2536 = vpop.f32.mrf.mxu0
    %2537 = vmatprep.mubr.f32.mxu0 0.0
    %2538 = vmatmul.mubr.f32.gmra.mxu0 %v2421
    %v2539 = vpop.f32.mrf.mxu0
    %v2540 = vadd.f32 0.0, %v2539
    %v2541 = vpop.f32.mrf.mxu0
    %2542 = vmatprep.mubr.f32.mxu0 0.0
    %2543 = vmatmul.mubr.f32.gmra.mxu0 %v2422
    %v2544 = vpop.f32.mrf.mxu0
    %v2545 = vadd.f32 0.0, %v2544
    %v2546 = vpop.f32.mrf.mxu0
    %2547 = vmatprep.mubr.f32.mxu0 0.0
    %2548 = vmatmul.mubr.f32.gmra.mxu0 %v2423
    %v2549 = vpop.f32.mrf.mxu0
    %v2550 = vadd.f32 0.0, %v2549
    %v2551 = vpop.f32.mrf.mxu0
    %2552 = vmatprep.mubr.f32.mxu0 0.0
    %2553 = vmatmul.mubr.f32.gmra.mxu0 %v2424
    %v2554 = vpop.f32.mrf.mxu0
    %v2555 = vadd.f32 0.0, %v2554
    %v2556 = vpop.f32.mrf.mxu0
    %2557 = vmatprep.mubr.f32.mxu0 0.0
    %2558 = vmatmul.mubr.f32.gmra.mxu0 %v2425
    %v2559 = vpop.f32.mrf.mxu0
    %v2560 = vadd.f32 0.0, %v2559
    %v2561 = vpop.f32.mrf.mxu0
    %2562 = vmatprep.mubr.f32.mxu0 0.0
    %2563 = vmatmul.mubr.f32.gmra.mxu0 %v2426
    %v2564 = vpop.f32.mrf.mxu0
    %v2565 = vadd.f32 0.0, %v2564
    %v2566 = vpop.f32.mrf.mxu0
    %2567 = vmatprep.mubr.f32.mxu0 0.0
    %2568 = vmatmul.mubr.f32.gmra.mxu0 %v2427
    %v2569 = vpop.f32.mrf.mxu0
    %v2570 = vadd.f32 0.0, %v2569
    %v2571 = vpop.f32.mrf.mxu0
    %2572 = vdwg.mxu0
    %v2573 = vsub.f32 %v1810, %v2495
    %v2574 = vsub.f32 %v1811, %v2500
    %v2575 = vsub.f32 %v1812, %v2505
    %v2576 = vsub.f32 %v1813, %v2510
    %v2577 = vsub.f32 %v1814, %v2515
    %v2578 = vsub.f32 %v1815, %v2520
    %v2579 = vsub.f32 %v1816, %v2525
    %v2580 = vsub.f32 %v1817, %v2530
    %v2581 = vsub.f32 %v1818, %v2535
    %v2582 = vsub.f32 %v1819, %v2540
    %v2583 = vsub.f32 %v1820, %v2545
    %v2584 = vsub.f32 %v1821, %v2550
    %v2585 = vsub.f32 %v1822, %v2555
    %v2586 = vsub.f32 %v1823, %v2560
    %v2587 = vsub.f32 %v1824, %v2565
    %v2588 = vsub.f32 %v1825, %v2570
    %s2589 = scalar_lea.vmem [#allocation2], 384
    %v2590 = vld [vmem:[%s2589] sm:$0xff]
    %v2591 = vld [vmem:[%s2589 + $0x8] sm:$0xff]
    %v2592 = vld [vmem:[%s2589 + $0x10] sm:$0xff]
    %v2593 = vld [vmem:[%s2589 + $0x18] sm:$0xff]
    %v2594 = vld [vmem:[%s2589 + $0x20] sm:$0xff]
    %v2595 = vld [vmem:[%s2589 + $0x28] sm:$0xff]
    %v2596 = vld [vmem:[%s2589 + $0x30] sm:$0xff]
    %v2597 = vld [vmem:[%s2589 + $0x38] sm:$0xff]
    %v2598 = vld [vmem:[%s2589 + $0x40] sm:$0xff]
    %v2599 = vld [vmem:[%s2589 + $0x48] sm:$0xff]
    %v2600 = vld [vmem:[%s2589 + $0x50] sm:$0xff]
    %v2601 = vld [vmem:[%s2589 + $0x58] sm:$0xff]
    %v2602 = vld [vmem:[%s2589 + $0x60] sm:$0xff]
    %v2603 = vld [vmem:[%s2589 + $0x68] sm:$0xff]
    %v2604 = vld [vmem:[%s2589 + $0x70] sm:$0xff]
    %v2605 = vld [vmem:[%s2589 + $0x78] sm:$0xff]
    %2606 = vmatprep.subr.mxu0 0.0
    %2607 = vmatpush1.msra.mxu0 %v2605
    %2608 = vmatprep.subr.mxu0 0.0
    %2609 = vmatpush1.msra.mxu0 %v2604
    %2610 = vmatprep.subr.mxu0 0.0
    %2611 = vmatpush1.msra.mxu0 %v2603
    %2612 = vmatprep.subr.mxu0 0.0
    %2613 = vmatpush1.msra.mxu0 %v2602
    %2614 = vmatprep.subr.mxu0 0.0
    %2615 = vmatpush1.msra.mxu0 %v2601
    %2616 = vmatprep.subr.mxu0 0.0
    %2617 = vmatpush1.msra.mxu0 %v2600
    %2618 = vmatprep.subr.mxu0 0.0
    %2619 = vmatpush1.msra.mxu0 %v2599
    %2620 = vmatprep.subr.mxu0 0.0
    %2621 = vmatpush1.msra.mxu0 %v2598
    %2622 = vmatprep.subr.mxu0 0.0
    %2623 = vmatpush1.msra.mxu0 %v2597
    %2624 = vmatprep.subr.mxu0 0.0
    %2625 = vmatpush1.msra.mxu0 %v2596
    %2626 = vmatprep.subr.mxu0 0.0
    %2627 = vmatpush1.msra.mxu0 %v2595
    %2628 = vmatprep.subr.mxu0 0.0
    %2629 = vmatpush1.msra.mxu0 %v2594
    %2630 = vmatprep.subr.mxu0 0.0
    %2631 = vmatpush1.msra.mxu0 %v2593
    %2632 = vmatprep.subr.mxu0 0.0
    %2633 = vmatpush1.msra.mxu0 %v2592
    %2634 = vmatprep.subr.mxu0 0.0
    %2635 = vmatpush1.msra.mxu0 %v2591
    %2636 = vmatprep.subr.mxu0 0.0
    %2637 = vmatpush1.msra.mxu0 %v2590
    %2638 = vmatprep.subr.mxu0 0.0
    %2639 = vmatpush2.msra.mxu0 0.0
    %2640 = vmatprep.subr.mxu0 0.0
    %2641 = vmatpush2.msra.mxu0 0.0
    %2642 = vmatprep.subr.mxu0 0.0
    %2643 = vmatpush2.msra.mxu0 0.0
    %2644 = vmatprep.subr.mxu0 0.0
    %2645 = vmatpush2.msra.mxu0 0.0
    %2646 = vmatprep.subr.mxu0 0.0
    %2647 = vmatpush2.msra.mxu0 0.0
    %2648 = vmatprep.subr.mxu0 0.0
    %2649 = vmatpush2.msra.mxu0 0.0
    %2650 = vmatprep.subr.mxu0 0.0
    %2651 = vmatpush2.msra.mxu0 0.0
    %2652 = vmatprep.subr.mxu0 0.0
    %2653 = vmatpush2.msra.mxu0 0.0
    %2654 = vmatprep.subr.mxu0 0.0
    %2655 = vmatpush2.msra.mxu0 0.0
    %2656 = vmatprep.subr.mxu0 0.0
    %2657 = vmatpush2.msra.mxu0 0.0
    %2658 = vmatprep.subr.mxu0 0.0
    %2659 = vmatpush2.msra.mxu0 0.0
    %2660 = vmatprep.subr.mxu0 0.0
    %2661 = vmatpush2.msra.mxu0 0.0
    %2662 = vmatprep.subr.mxu0 0.0
    %2663 = vmatpush2.msra.mxu0 0.0
    %2664 = vmatprep.subr.mxu0 0.0
    %2665 = vmatpush2.msra.mxu0 0.0
    %2666 = vmatprep.subr.mxu0 0.0
    %2667 = vmatpush2.msra.mxu0 0.0
    %2668 = vmatprep.subr.mxu0 0.0
    %2669 = vmatpush2.msra.mxu0 0.0
    %2670 = vmatprep.mubr.f32.mxu0 0.0
    %2671 = vmatmul.mubr.f32.gmra.mxu0 %v2573
    %v2672 = vpop.f32.mrf.mxu0
    %v2673 = vadd.f32 0.0, %v2672
    %v2674 = vpop.f32.mrf.mxu0
    %2675 = vmatprep.mubr.f32.mxu0 0.0
    %2676 = vmatmul.mubr.f32.gmra.mxu0 %v2574
    %v2677 = vpop.f32.mrf.mxu0
    %v2678 = vadd.f32 0.0, %v2677
    %v2679 = vpop.f32.mrf.mxu0
    %2680 = vmatprep.mubr.f32.mxu0 0.0
    %2681 = vmatmul.mubr.f32.gmra.mxu0 %v2575
    %v2682 = vpop.f32.mrf.mxu0
    %v2683 = vadd.f32 0.0, %v2682
    %v2684 = vpop.f32.mrf.mxu0
    %2685 = vmatprep.mubr.f32.mxu0 0.0
    %2686 = vmatmul.mubr.f32.gmra.mxu0 %v2576
    %v2687 = vpop.f32.mrf.mxu0
    %v2688 = vadd.f32 0.0, %v2687
    %v2689 = vpop.f32.mrf.mxu0
    %2690 = vmatprep.mubr.f32.mxu0 0.0
    %2691 = vmatmul.mubr.f32.gmra.mxu0 %v2577
    %v2692 = vpop.f32.mrf.mxu0
    %v2693 = vadd.f32 0.0, %v2692
    %v2694 = vpop.f32.mrf.mxu0
    %2695 = vmatprep.mubr.f32.mxu0 0.0
    %2696 = vmatmul.mubr.f32.gmra.mxu0 %v2578
    %v2697 = vpop.f32.mrf.mxu0
    %v2698 = vadd.f32 0.0, %v2697
    %v2699 = vpop.f32.mrf.mxu0
    %2700 = vmatprep.mubr.f32.mxu0 0.0
    %2701 = vmatmul.mubr.f32.gmra.mxu0 %v2579
    %v2702 = vpop.f32.mrf.mxu0
    %v2703 = vadd.f32 0.0, %v2702
    %v2704 = vpop.f32.mrf.mxu0
    %2705 = vmatprep.mubr.f32.mxu0 0.0
    %2706 = vmatmul.mubr.f32.gmra.mxu0 %v2580
    %v2707 = vpop.f32.mrf.mxu0
    %v2708 = vadd.f32 0.0, %v2707
    %v2709 = vpop.f32.mrf.mxu0
    %2710 = vmatprep.mubr.f32.mxu0 0.0
    %2711 = vmatmul.mubr.f32.gmra.mxu0 %v2581
    %v2712 = vpop.f32.mrf.mxu0
    %v2713 = vadd.f32 0.0, %v2712
    %v2714 = vpop.f32.mrf.mxu0
    %2715 = vmatprep.mubr.f32.mxu0 0.0
    %2716 = vmatmul.mubr.f32.gmra.mxu0 %v2582
    %v2717 = vpop.f32.mrf.mxu0
    %v2718 = vadd.f32 0.0, %v2717
    %v2719 = vpop.f32.mrf.mxu0
    %2720 = vmatprep.mubr.f32.mxu0 0.0
    %2721 = vmatmul.mubr.f32.gmra.mxu0 %v2583
    %v2722 = vpop.f32.mrf.mxu0
    %v2723 = vadd.f32 0.0, %v2722
    %v2724 = vpop.f32.mrf.mxu0
    %2725 = vmatprep.mubr.f32.mxu0 0.0
    %2726 = vmatmul.mubr.f32.gmra.mxu0 %v2584
    %v2727 = vpop.f32.mrf.mxu0
    %v2728 = vadd.f32 0.0, %v2727
    %v2729 = vpop.f32.mrf.mxu0
    %2730 = vmatprep.mubr.f32.mxu0 0.0
    %2731 = vmatmul.mubr.f32.gmra.mxu0 %v2585
    %v2732 = vpop.f32.mrf.mxu0
    %v2733 = vadd.f32 0.0, %v2732
    %v2734 = vpop.f32.mrf.mxu0
    %2735 = vmatprep.mubr.f32.mxu0 0.0
    %2736 = vmatmul.mubr.f32.gmra.mxu0 %v2586
    %v2737 = vpop.f32.mrf.mxu0
    %v2738 = vadd.f32 0.0, %v2737
    %v2739 = vpop.f32.mrf.mxu0
    %2740 = vmatprep.mubr.f32.mxu0 0.0
    %2741 = vmatmul.mubr.f32.gmra.mxu0 %v2587
    %v2742 = vpop.f32.mrf.mxu0
    %v2743 = vadd.f32 0.0, %v2742
    %v2744 = vpop.f32.mrf.mxu0
    %2745 = vmatprep.mubr.f32.mxu0 0.0
    %2746 = vmatmul.mubr.f32.gmra.mxu0 %v2588
    %v2747 = vpop.f32.mrf.mxu0
    %v2748 = vadd.f32 0.0, %v2747
    %v2749 = vpop.f32.mrf.mxu0
    %2750 = vdwg.mxu0
    %s2751 = scalar_lea.vmem %s4, 3
    %v2752 = vld [vmem:[%s2751] sm:$0x1]
    %v2754 = vlaneseq
    %v2755 = vshrl.u32 %v2754, 7
    %v2756 = vsub.s32 0, %v2755
    %v2757 = vrot.slane %v2752, %v2756
    %v2759 = vsub.f32 %v2757, %v2673
    %v2760 = vsub.f32 %v2757, %v2678
    %v2761 = vsub.f32 %v2757, %v2683
    %v2762 = vsub.f32 %v2757, %v2688
    %v2763 = vsub.f32 %v2757, %v2693
    %v2764 = vsub.f32 %v2757, %v2698
    %v2765 = vsub.f32 %v2757, %v2703
    %v2766 = vsub.f32 %v2757, %v2708
    %v2767 = vsub.f32 %v2757, %v2713
    %v2768 = vsub.f32 %v2757, %v2718
    %v2769 = vsub.f32 %v2757, %v2723
    %v2770 = vsub.f32 %v2757, %v2728
    %v2771 = vsub.f32 %v2757, %v2733
    %v2772 = vsub.f32 %v2757, %v2738
    %v2773 = vsub.f32 %v2757, %v2743
    %v2774 = vsub.f32 %v2757, %v2748
    %2775 = vmin.xlane.f32.xlu0 %v2759
    %v2776 = vpop.xlane.xlu0 %2775
    %2777 = vmin.xlane.f32.xlu0 %v2760
    %v2778 = vpop.xlane.xlu0 %2777
    %2779 = vmin.xlane.f32.xlu0 %v2761
    %v2780 = vpop.xlane.xlu0 %2779
    %2781 = vmin.xlane.f32.xlu0 %v2762
    %v2782 = vpop.xlane.xlu0 %2781
    %2783 = vmin.xlane.f32.xlu0 %v2763
    %v2784 = vpop.xlane.xlu0 %2783
    %2785 = vmin.xlane.f32.xlu0 %v2764
    %v2786 = vpop.xlane.xlu0 %2785
    %2787 = vmin.xlane.f32.xlu0 %v2765
    %v2788 = vpop.xlane.xlu0 %2787
    %2789 = vmin.xlane.f32.xlu0 %v2766
    %v2790 = vpop.xlane.xlu0 %2789
    %2791 = vmin.xlane.f32.xlu0 %v2767
    %v2792 = vpop.xlane.xlu0 %2791
    %2793 = vmin.xlane.f32.xlu0 %v2768
    %v2794 = vpop.xlane.xlu0 %2793
    %2795 = vmin.xlane.f32.xlu0 %v2769
    %v2796 = vpop.xlane.xlu0 %2795
    %2797 = vmin.xlane.f32.xlu0 %v2770
    %v2798 = vpop.xlane.xlu0 %2797
    %2799 = vmin.xlane.f32.xlu0 %v2771
    %v2800 = vpop.xlane.xlu0 %2799
    %2801 = vmin.xlane.f32.xlu0 %v2772
    %v2802 = vpop.xlane.xlu0 %2801
    %2803 = vmin.xlane.f32.xlu0 %v2773
    %v2804 = vpop.xlane.xlu0 %2803
    %2805 = vmin.xlane.f32.xlu0 %v2774
    %v2806 = vpop.xlane.xlu0 %2805
    %vm2807 = vcmp.le.f32.partialorder %v2759, %v2776
    %vm2808 = vcmp.le.f32.partialorder %v2760, %v2778
    %vm2809 = vcmp.le.f32.partialorder %v2761, %v2780
    %vm2810 = vcmp.le.f32.partialorder %v2762, %v2782
    %vm2811 = vcmp.le.f32.partialorder %v2763, %v2784
    %vm2812 = vcmp.le.f32.partialorder %v2764, %v2786
    %vm2813 = vcmp.le.f32.partialorder %v2765, %v2788
    %vm2814 = vcmp.le.f32.partialorder %v2766, %v2790
    %vm2815 = vcmp.le.f32.partialorder %v2767, %v2792
    %vm2816 = vcmp.le.f32.partialorder %v2768, %v2794
    %vm2817 = vcmp.le.f32.partialorder %v2769, %v2796
    %vm2818 = vcmp.le.f32.partialorder %v2770, %v2798
    %vm2819 = vcmp.le.f32.partialorder %v2771, %v2800
    %vm2820 = vcmp.le.f32.partialorder %v2772, %v2802
    %vm2821 = vcmp.le.f32.partialorder %v2773, %v2804
    %vm2822 = vcmp.le.f32.partialorder %v2774, %v2806
    %v2823 = vsel %vm2807, %v487, 128
    %v2824 = vsel %vm2808, %v487, 128
    %v2825 = vsel %vm2809, %v487, 128
    %v2826 = vsel %vm2810, %v487, 128
    %v2827 = vsel %vm2811, %v487, 128
    %v2828 = vsel %vm2812, %v487, 128
    %v2829 = vsel %vm2813, %v487, 128
    %v2830 = vsel %vm2814, %v487, 128
    %v2831 = vsel %vm2815, %v487, 128
    %v2832 = vsel %vm2816, %v487, 128
    %v2833 = vsel %vm2817, %v487, 128
    %v2834 = vsel %vm2818, %v487, 128
    %v2835 = vsel %vm2819, %v487, 128
    %v2836 = vsel %vm2820, %v487, 128
    %v2837 = vsel %vm2821, %v487, 128
    %v2838 = vsel %vm2822, %v487, 128
    %v2839 = vand.u32 %v2823, 65535
    %v2840 = vshra.s32 %v2823, 16
    %v2841 = vcvt.s32.f32 %v2839
    %v2842 = vcvt.s32.f32 %v2840
    %2843 = vmin.xlane.f32.xlu0 %v2842
    %v2844 = vpop.xlane.xlu0 %2843
    %vm2845 = vcmp.eq.f32.partialorder %v2842, %v2844
    %v2846 = vsel %vm2845, %v2841, inf
    %2847 = vmin.xlane.f32.xlu0 %v2846
    %v2848 = vpop.xlane.xlu0 %2847
    %v2849 = vcvt.f32.s32 %v2848
    %v2850 = vcvt.f32.s32 %v2844
    %v2851 = vshll.u32 %v2850, 16
    %v2852 = vadd.s32 %v2851, %v2849
    %v2853 = vand.u32 %v2824, 65535
    %v2854 = vshra.s32 %v2824, 16
    %v2855 = vcvt.s32.f32 %v2853
    %v2856 = vcvt.s32.f32 %v2854
    %2857 = vmin.xlane.f32.xlu0 %v2856
    %v2858 = vpop.xlane.xlu0 %2857
    %vm2859 = vcmp.eq.f32.partialorder %v2856, %v2858
    %v2860 = vsel %vm2859, %v2855, inf
    %2861 = vmin.xlane.f32.xlu0 %v2860
    %v2862 = vpop.xlane.xlu0 %2861
    %v2863 = vcvt.f32.s32 %v2862
    %v2864 = vcvt.f32.s32 %v2858
    %v2865 = vshll.u32 %v2864, 16
    %v2866 = vadd.s32 %v2865, %v2863
    %v2867 = vand.u32 %v2825, 65535
    %v2868 = vshra.s32 %v2825, 16
    %v2869 = vcvt.s32.f32 %v2867
    %v2870 = vcvt.s32.f32 %v2868
    %2871 = vmin.xlane.f32.xlu0 %v2870
    %v2872 = vpop.xlane.xlu0 %2871
    %vm2873 = vcmp.eq.f32.partialorder %v2870, %v2872
    %v2874 = vsel %vm2873, %v2869, inf
    %2875 = vmin.xlane.f32.xlu0 %v2874
    %v2876 = vpop.xlane.xlu0 %2875
    %v2877 = vcvt.f32.s32 %v2876
    %v2878 = vcvt.f32.s32 %v2872
    %v2879 = vshll.u32 %v2878, 16
    %v2880 = vadd.s32 %v2879, %v2877
    %v2881 = vand.u32 %v2826, 65535
    %v2882 = vshra.s32 %v2826, 16
    %v2883 = vcvt.s32.f32 %v2881
    %v2884 = vcvt.s32.f32 %v2882
    %2885 = vmin.xlane.f32.xlu0 %v2884
    %v2886 = vpop.xlane.xlu0 %2885
    %vm2887 = vcmp.eq.f32.partialorder %v2884, %v2886
    %v2888 = vsel %vm2887, %v2883, inf
    %2889 = vmin.xlane.f32.xlu0 %v2888
    %v2890 = vpop.xlane.xlu0 %2889
    %v2891 = vcvt.f32.s32 %v2890
    %v2892 = vcvt.f32.s32 %v2886
    %v2893 = vshll.u32 %v2892, 16
    %v2894 = vadd.s32 %v2893, %v2891
    %v2895 = vand.u32 %v2827, 65535
    %v2896 = vshra.s32 %v2827, 16
    %v2897 = vcvt.s32.f32 %v2895
    %v2898 = vcvt.s32.f32 %v2896
    %2899 = vmin.xlane.f32.xlu0 %v2898
    %v2900 = vpop.xlane.xlu0 %2899
    %vm2901 = vcmp.eq.f32.partialorder %v2898, %v2900
    %v2902 = vsel %vm2901, %v2897, inf
    %2903 = vmin.xlane.f32.xlu0 %v2902
    %v2904 = vpop.xlane.xlu0 %2903
    %v2905 = vcvt.f32.s32 %v2904
    %v2906 = vcvt.f32.s32 %v2900
    %v2907 = vshll.u32 %v2906, 16
    %v2908 = vadd.s32 %v2907, %v2905
    %v2909 = vand.u32 %v2828, 65535
    %v2910 = vshra.s32 %v2828, 16
    %v2911 = vcvt.s32.f32 %v2909
    %v2912 = vcvt.s32.f32 %v2910
    %2913 = vmin.xlane.f32.xlu0 %v2912
    %v2914 = vpop.xlane.xlu0 %2913
    %vm2915 = vcmp.eq.f32.partialorder %v2912, %v2914
    %v2916 = vsel %vm2915, %v2911, inf
    %2917 = vmin.xlane.f32.xlu0 %v2916
    %v2918 = vpop.xlane.xlu0 %2917
    %v2919 = vcvt.f32.s32 %v2918
    %v2920 = vcvt.f32.s32 %v2914
    %v2921 = vshll.u32 %v2920, 16
    %v2922 = vadd.s32 %v2921, %v2919
    %v2923 = vand.u32 %v2829, 65535
    %v2924 = vshra.s32 %v2829, 16
    %v2925 = vcvt.s32.f32 %v2923
    %v2926 = vcvt.s32.f32 %v2924
    %2927 = vmin.xlane.f32.xlu0 %v2926
    %v2928 = vpop.xlane.xlu0 %2927
    %vm2929 = vcmp.eq.f32.partialorder %v2926, %v2928
    %v2930 = vsel %vm2929, %v2925, inf
    %2931 = vmin.xlane.f32.xlu0 %v2930
    %v2932 = vpop.xlane.xlu0 %2931
    %v2933 = vcvt.f32.s32 %v2932
    %v2934 = vcvt.f32.s32 %v2928
    %v2935 = vshll.u32 %v2934, 16
    %v2936 = vadd.s32 %v2935, %v2933
    %v2937 = vand.u32 %v2830, 65535
    %v2938 = vshra.s32 %v2830, 16
    %v2939 = vcvt.s32.f32 %v2937
    %v2940 = vcvt.s32.f32 %v2938
    %2941 = vmin.xlane.f32.xlu0 %v2940
    %v2942 = vpop.xlane.xlu0 %2941
    %vm2943 = vcmp.eq.f32.partialorder %v2940, %v2942
    %v2944 = vsel %vm2943, %v2939, inf
    %2945 = vmin.xlane.f32.xlu0 %v2944
    %v2946 = vpop.xlane.xlu0 %2945
    %v2947 = vcvt.f32.s32 %v2946
    %v2948 = vcvt.f32.s32 %v2942
    %v2949 = vshll.u32 %v2948, 16
    %v2950 = vadd.s32 %v2949, %v2947
    %v2951 = vand.u32 %v2831, 65535
    %v2952 = vshra.s32 %v2831, 16
    %v2953 = vcvt.s32.f32 %v2951
    %v2954 = vcvt.s32.f32 %v2952
    %2955 = vmin.xlane.f32.xlu0 %v2954
    %v2956 = vpop.xlane.xlu0 %2955
    %vm2957 = vcmp.eq.f32.partialorder %v2954, %v2956
    %v2958 = vsel %vm2957, %v2953, inf
    %2959 = vmin.xlane.f32.xlu0 %v2958
    %v2960 = vpop.xlane.xlu0 %2959
    %v2961 = vcvt.f32.s32 %v2960
    %v2962 = vcvt.f32.s32 %v2956
    %v2963 = vshll.u32 %v2962, 16
    %v2964 = vadd.s32 %v2963, %v2961
    %v2965 = vand.u32 %v2832, 65535
    %v2966 = vshra.s32 %v2832, 16
    %v2967 = vcvt.s32.f32 %v2965
    %v2968 = vcvt.s32.f32 %v2966
    %2969 = vmin.xlane.f32.xlu0 %v2968
    %v2970 = vpop.xlane.xlu0 %2969
    %vm2971 = vcmp.eq.f32.partialorder %v2968, %v2970
    %v2972 = vsel %vm2971, %v2967, inf
    %2973 = vmin.xlane.f32.xlu0 %v2972
    %v2974 = vpop.xlane.xlu0 %2973
    %v2975 = vcvt.f32.s32 %v2974
    %v2976 = vcvt.f32.s32 %v2970
    %v2977 = vshll.u32 %v2976, 16
    %v2978 = vadd.s32 %v2977, %v2975
    %v2979 = vand.u32 %v2833, 65535
    %v2980 = vshra.s32 %v2833, 16
    %v2981 = vcvt.s32.f32 %v2979
    %v2982 = vcvt.s32.f32 %v2980
    %2983 = vmin.xlane.f32.xlu0 %v2982
    %v2984 = vpop.xlane.xlu0 %2983
    %vm2985 = vcmp.eq.f32.partialorder %v2982, %v2984
    %v2986 = vsel %vm2985, %v2981, inf
    %2987 = vmin.xlane.f32.xlu0 %v2986
    %v2988 = vpop.xlane.xlu0 %2987
    %v2989 = vcvt.f32.s32 %v2988
    %v2990 = vcvt.f32.s32 %v2984
    %v2991 = vshll.u32 %v2990, 16
    %v2992 = vadd.s32 %v2991, %v2989
    %v2993 = vand.u32 %v2834, 65535
    %v2994 = vshra.s32 %v2834, 16
    %v2995 = vcvt.s32.f32 %v2993
    %v2996 = vcvt.s32.f32 %v2994
    %2997 = vmin.xlane.f32.xlu0 %v2996
    %v2998 = vpop.xlane.xlu0 %2997
    %vm2999 = vcmp.eq.f32.partialorder %v2996, %v2998
    %v3000 = vsel %vm2999, %v2995, inf
    %3001 = vmin.xlane.f32.xlu0 %v3000
    %v3002 = vpop.xlane.xlu0 %3001
    %v3003 = vcvt.f32.s32 %v3002
    %v3004 = vcvt.f32.s32 %v2998
    %v3005 = vshll.u32 %v3004, 16
    %v3006 = vadd.s32 %v3005, %v3003
    %v3007 = vand.u32 %v2835, 65535
    %v3008 = vshra.s32 %v2835, 16
    %v3009 = vcvt.s32.f32 %v3007
    %v3010 = vcvt.s32.f32 %v3008
    %3011 = vmin.xlane.f32.xlu0 %v3010
    %v3012 = vpop.xlane.xlu0 %3011
    %vm3013 = vcmp.eq.f32.partialorder %v3010, %v3012
    %v3014 = vsel %vm3013, %v3009, inf
    %3015 = vmin.xlane.f32.xlu0 %v3014
    %v3016 = vpop.xlane.xlu0 %3015
    %v3017 = vcvt.f32.s32 %v3016
    %v3018 = vcvt.f32.s32 %v3012
    %v3019 = vshll.u32 %v3018, 16
    %v3020 = vadd.s32 %v3019, %v3017
    %v3021 = vand.u32 %v2836, 65535
    %v3022 = vshra.s32 %v2836, 16
    %v3023 = vcvt.s32.f32 %v3021
    %v3024 = vcvt.s32.f32 %v3022
    %3025 = vmin.xlane.f32.xlu0 %v3024
    %v3026 = vpop.xlane.xlu0 %3025
    %vm3027 = vcmp.eq.f32.partialorder %v3024, %v3026
    %v3028 = vsel %vm3027, %v3023, inf
    %3029 = vmin.xlane.f32.xlu0 %v3028
    %v3030 = vpop.xlane.xlu0 %3029
    %v3031 = vcvt.f32.s32 %v3030
    %v3032 = vcvt.f32.s32 %v3026
    %v3033 = vshll.u32 %v3032, 16
    %v3034 = vadd.s32 %v3033, %v3031
    %v3035 = vand.u32 %v2837, 65535
    %v3036 = vshra.s32 %v2837, 16
    %v3037 = vcvt.s32.f32 %v3035
    %v3038 = vcvt.s32.f32 %v3036
    %3039 = vmin.xlane.f32.xlu0 %v3038
    %v3040 = vpop.xlane.xlu0 %3039
    %vm3041 = vcmp.eq.f32.partialorder %v3038, %v3040
    %v3042 = vsel %vm3041, %v3037, inf
    %3043 = vmin.xlane.f32.xlu0 %v3042
    %v3044 = vpop.xlane.xlu0 %3043
    %v3045 = vcvt.f32.s32 %v3044
    %v3046 = vcvt.f32.s32 %v3040
    %v3047 = vshll.u32 %v3046, 16
    %v3048 = vadd.s32 %v3047, %v3045
    %v3049 = vand.u32 %v2838, 65535
    %v3050 = vshra.s32 %v2838, 16
    %v3051 = vcvt.s32.f32 %v3049
    %v3052 = vcvt.s32.f32 %v3050
    %3053 = vmin.xlane.f32.xlu0 %v3052
    %v3054 = vpop.xlane.xlu0 %3053
    %vm3055 = vcmp.eq.f32.partialorder %v3052, %v3054
    %v3056 = vsel %vm3055, %v3051, inf
    %3057 = vmin.xlane.f32.xlu0 %v3056
    %v3058 = vpop.xlane.xlu0 %3057
    %v3059 = vcvt.f32.s32 %v3058
    %v3060 = vcvt.f32.s32 %v3054
    %v3061 = vshll.u32 %v3060, 16
    %v3062 = vadd.s32 %v3061, %v3059
    %v3063 = vlaneseq
    %v3064 = vshrl.u32 %v3063, 7
    %v3065 = vsub.s32 %v487, %v3064
    %v3066 = vrot.slane %v2852, %v3065
    %v3067 = vlaneseq
    %v3068 = vshrl.u32 %v3067, 7
    %v3069 = vsub.s32 %v748, %v3068
    %v3070 = vrot.slane %v2866, %v3069
    %v3071 = vsel %vm753, %v3070, %v3066
    %v3072 = vlaneseq
    %v3073 = vshrl.u32 %v3072, 7
    %v3074 = vsub.s32 %v755, %v3073
    %v3075 = vrot.slane %v2880, %v3074
    %v3076 = vsel %vm760, %v3075, %v3071
    %v3077 = vlaneseq
    %v3078 = vshrl.u32 %v3077, 7
    %v3079 = vsub.s32 %v762, %v3078
    %v3080 = vrot.slane %v2894, %v3079
    %v3081 = vsel %vm767, %v3080, %v3076
    %v3082 = vlaneseq
    %v3083 = vshrl.u32 %v3082, 7
    %v3084 = vsub.s32 %v769, %v3083
    %v3085 = vrot.slane %v2908, %v3084
    %v3086 = vsel %vm774, %v3085, %v3081
    %v3087 = vlaneseq
    %v3088 = vshrl.u32 %v3087, 7
    %v3089 = vsub.s32 %v776, %v3088
    %v3090 = vrot.slane %v2922, %v3089
    %v3091 = vsel %vm781, %v3090, %v3086
    %v3092 = vlaneseq
    %v3093 = vshrl.u32 %v3092, 7
    %v3094 = vsub.s32 %v783, %v3093
    %v3095 = vrot.slane %v2936, %v3094
    %v3096 = vsel %vm788, %v3095, %v3091
    %v3097 = vlaneseq
    %v3098 = vshrl.u32 %v3097, 7
    %v3099 = vsub.s32 %v790, %v3098
    %v3100 = vrot.slane %v2950, %v3099
    %v3101 = vsel %vm795, %v3100, %v3096
    %v3102 = vlaneseq
    %v3103 = vshrl.u32 %v3102, 7
    %v3104 = vsub.s32 %v797, %v3103
    %v3105 = vrot.slane %v2964, %v3104
    %v3106 = vsel %vm802, %v3105, %v3101
    %v3107 = vlaneseq
    %v3108 = vshrl.u32 %v3107, 7
    %v3109 = vsub.s32 %v804, %v3108
    %v3110 = vrot.slane %v2978, %v3109
    %v3111 = vsel %vm809, %v3110, %v3106
    %v3112 = vlaneseq
    %v3113 = vshrl.u32 %v3112, 7
    %v3114 = vsub.s32 %v811, %v3113
    %v3115 = vrot.slane %v2992, %v3114
    %v3116 = vsel %vm816, %v3115, %v3111
    %v3117 = vlaneseq
    %v3118 = vshrl.u32 %v3117, 7
    %v3119 = vsub.s32 %v818, %v3118
    %v3120 = vrot.slane %v3006, %v3119
    %v3121 = vsel %vm823, %v3120, %v3116
    %v3122 = vlaneseq
    %v3123 = vshrl.u32 %v3122, 7
    %v3124 = vsub.s32 %v825, %v3123
    %v3125 = vrot.slane %v3020, %v3124
    %v3126 = vsel %vm830, %v3125, %v3121
    %v3127 = vlaneseq
    %v3128 = vshrl.u32 %v3127, 7
    %v3129 = vsub.s32 %v832, %v3128
    %v3130 = vrot.slane %v3034, %v3129
    %v3131 = vsel %vm837, %v3130, %v3126
    %v3132 = vlaneseq
    %v3133 = vshrl.u32 %v3132, 7
    %v3134 = vsub.s32 %v839, %v3133
    %v3135 = vrot.slane %v3048, %v3134
    %v3136 = vsel %vm844, %v3135, %v3131
    %v3137 = vlaneseq
    %v3138 = vshrl.u32 %v3137, 7
    %v3139 = vsub.s32 %v846, %v3138
    %v3140 = vrot.slane %v3062, %v3139
    %v3141 = vsel %vm851, %v3140, %v3136
    %3142 = vst [vmem:[#allocation5 + $0x3] sm:$0x1] %v3141
    // Predicated region
    $region26: #{tpu_custom_call.1} parent=1 // pred_check
      _
    $region27: #{tpu_custom_call.1} parent=1 // pred_check_branch
      %3144 = sbr.rel (0) target = $region29
    $region28: #{tpu_custom_call.1} parent=1 // pred_region
      %s3146 = ssub.s32 64, 64
      %3147 = vsyncadd [#allocation4], %s3146
      %s3149 = sshll.u32 [#allocation5], 4
      %s3150 = int_to_ptr.vmem [resolvable:$true] %s3149
      %3152 = dma.vmem_to_hbm [thread:$0]  %s3150, 64, %s5, [#allocation4]
    $region29: #{tpu_custom_call.1} parent=1 // pred_fallthru
      _
    // Predicated region
    $region30: #{tpu_custom_call.1} parent=1 // pred_check
      _
    $region31: #{tpu_custom_call.1} parent=1 // pred_check_branch
      %3154 = sbr.rel (0) target = $region33
    $region32: #{tpu_custom_call.1} parent=1 // pred_region
      %3155 = dma.done [#allocation4], 64
    $region33: #{tpu_custom_call.1} parent=1 // pred_fallthru
      _
    %3156 = vsyncpa [#allocation3], 1
    %3157 = vsyncpa [#allocation4], 1

</llo_original>
